<compile_context>
chip_gen: v6e
topology: v6e:2x2x1
jax: 0.10.0
libtpu: 0.0.40
codegen_flags: <defaults>
</compile_context>

<pallas_src>
from math import prod

import jax
import jax.numpy as jnp
from jax.experimental import pallas as pl
from jax.experimental.pallas import tpu as pltpu

MM_DTYPE = jnp.bfloat16            # MXU operand dtype (f32 accumulate).
SKIP_DTYPE = jnp.bfloat16 if MM_DTYPE == jnp.bfloat16 else jnp.float32
LANE = 128
SUBLANE = 8
MAX_ROW_TILE = 512                 # batch-row tile upper bound (review: bigger tiles)


def _round_up(v, m):
    return ((v + m - 1) // m) * m


def _cdiv(a, b):
    return (a + b - 1) // b


# ---------------------------------------------------------------------------
# Parameter construction (mirrors Linear(Kernel).__init__ sizing logic)
# ---------------------------------------------------------------------------
def _linear_kernel_sizes(input_dim, input_len, output_dim, output_len, khl):
    in_size = input_len * input_dim
    out_size = output_len * output_dim
    if input_len >= output_len:   # "is_in_encoder"
        gap = int((in_size - out_size) / (khl + 1))
        hidden = [in_size - i * gap for i in range(1, khl + 1)]
    else:                         # "is_in_decoder"
        gap = int((out_size - in_size) / (khl + 1))
        hidden = [in_size + i * gap for i in range(1, khl + 1)]
    return in_size, hidden, out_size


def _init_linear(key, fan_in, fan_out):
    kw, kb = jax.random.split(key)
    bound = 1.0 / (fan_in ** 0.5)
    w = jax.random.uniform(kw, (fan_in, fan_out), jnp.float32, -bound, bound)
    b = jax.random.uniform(kb, (1, fan_out), jnp.float32, -bound, bound)
    return w, b


def _init_mlp(key, spec, khl):
    in_len, in_dim, out_len, out_dim = spec
    in_size, hidden, out_size = _linear_kernel_sizes(in_dim, in_len, out_dim, out_len, khl)
    assert len(hidden) == 1, "this script assumes kernel_hidden_layer == 1"
    k1, k2 = jax.random.split(key)
    w1, b1 = _init_linear(k1, in_size, hidden[0])
    w2, b2 = _init_linear(k2, hidden[0], out_size)
    return (w1, b1, w2, b2)


def build_kunet(key, input_dim, input_len, n_width, n_height,
                latent_dim, latent_len, output_dim, output_len,
                hidden_dim_list, kernel_hidden_layer_list):
    # --- encoder lag_list (mirrors KUNetEncoder.__init__) ---
    enc_lag = [input_len]
    if not (len(n_height) == 1 and n_height[0] == 1):
        enc_lag += list(reversed(n_height))
    if not (len(n_width) == 1 and n_width[0] == 1):
        enc_lag += list(reversed(n_width))
    if (len(n_width) == 1 or n_width[0] == 1) and (len(n_height) == 1 or n_height[0] == 1):
        enc_lag += list(reversed(n_width))

    enc_specs = [(enc_lag[0], input_dim, 1, hidden_dim_list[0])]
    for i, l in enumerate(enc_lag[1:-1], 1):
        enc_specs.append((l, hidden_dim_list[i - 1], 1, hidden_dim_list[i]))
    enc_specs.append((enc_lag[-1], hidden_dim_list[-1], latent_len, latent_dim))
    enc_khl = ([kernel_hidden_layer_list[0]]
               + [kernel_hidden_layer_list[i] for i, _ in enumerate(enc_lag[1:-1], 1)]
               + [kernel_hidden_layer_list[-1]])

    # --- decoder lag_list (mirrors KUNetDecoder.__init__) ---
    dec_lag = [latent_len]
    if not (len(n_width) == 1 and n_width[0] == 1):
        dec_lag += list(n_width)
    if not (len(n_height) == 1 and n_height[0] == 1):
        dec_lag += list(n_height)
    if (len(n_width) == 1 or n_width[0] == 1) and (len(n_height) == 1 or n_height[0] == 1):
        dec_lag += list(n_height)

    hid_rev = list(reversed(hidden_dim_list))
    khl_rev = list(reversed(kernel_hidden_layer_list))
    dec_specs = [(1, latent_dim, dec_lag[1], hid_rev[0])]
    for i, l in enumerate(dec_lag[2:], 1):
        dec_specs.append((1, hid_rev[i - 1], l, hid_rev[i]))
    dec_specs.append((1, hid_rev[-1], output_len, output_dim))
    dec_khl = ([khl_rev[0]]
               + [khl_rev[i] for i, _ in enumerate(dec_lag[2:], 1)]
               + [khl_rev[-1]])

    keys = jax.random.split(key, len(enc_specs) + len(dec_specs))
    enc_params = [_init_mlp(keys[i], s, enc_khl[i]) for i, s in enumerate(enc_specs)]
    dec_params = [_init_mlp(keys[len(enc_specs) + i], s, dec_khl[i])
                  for i, s in enumerate(dec_specs)]
    return enc_specs, enc_params, dec_specs, dec_params


# ---------------------------------------------------------------------------
# Fusion: row-folded, lane-padded per-layer weights + static layer plan
# ---------------------------------------------------------------------------
def fuse_kunet(enc_specs, enc_params, dec_specs, dec_params, n_width, n_height):
    Ht, Wt = prod(n_height), prod(n_width)
    n_enc = len(enc_specs)
    specs = list(enc_specs) + list(dec_specs)
    params = list(enc_params) + list(dec_params)
    n_layers = len(specs)

    in_sizes, hids, out_sizes = [], [], []
    for (in_len, in_dim, out_len, out_dim), (w1, b1, w2, b2) in zip(specs, params):
        assert w1.shape[0] == in_len * in_dim and w2.shape[1] == out_len * out_dim
        in_sizes.append(int(w1.shape[0]))
        hids.append(int(w1.shape[1]))
        out_sizes.append(int(w2.shape[1]))

    # rows per batch element seen by each layer (the PyTorch fold/unfold is a
    # no-op on the row-major flat per-batch vector, so rows follow from
    # flat-size conservation).
    rows = []
    for l in range(n_layers):
        if l == 0:
            rows.append(Ht * Wt)
        else:
            flat = rows[l - 1] * out_sizes[l - 1]
            if flat % in_sizes[l] != 0:
                raise NotImplementedError("non-divisible layer refold")  # TODO(synk)
            rows.append(flat // in_sizes[l])

    # fold / unfold structure checks (required for the row-folding layout)
    for l in range(1, n_layers):
        if rows[l] < rows[l - 1]:
            fold = rows[l - 1] // rows[l]
            if rows[l - 1] % rows[l] or in_sizes[l] != fold * out_sizes[l - 1]:
                raise NotImplementedError("unsupported fold pattern")     # TODO(synk)
        elif rows[l] > rows[l - 1]:
            unfold = rows[l] // rows[l - 1]
            if rows[l] % rows[l - 1] or out_sizes[l - 1] != unfold * in_sizes[l]:
                raise NotImplementedError("unsupported unfold pattern")   # TODO(synk)
        else:
            assert in_sizes[l] == out_sizes[l - 1]

    # UNet skip plan (mirrors KUNetEncoderDecoder.forward wiring + size gate),
    # with a stricter layout assert so we never skip-add mismatched folds.
    skip_src = [None] * n_layers
    save_skip = [False] * n_layers
    for di in range(1, n_enc):
        l = n_enc + di
        if l >= n_layers:
            break
        e = n_enc - 1 - di
        if rows[e] * out_sizes[e] == rows[l] * in_sizes[l]:
            if not (rows[e] == rows[l] and out_sizes[e] == in_sizes[l]):
                raise NotImplementedError("skip with mismatched fold layout")  # TODO(synk)
            skip_src[l] = e
            save_skip[e] = True

    layers, fused_weights = [], []
    flops_per_row = tanh_per_row = max_flat = 0
    for l in range(n_layers):
        w1, b1, w2, b2 = params[l]
        in_size, hid, out_size = in_sizes[l], hids[l], out_sizes[l]
        rl = rows[l]
        H = _round_up(hid, LANE)

        # ---- input-side (K) layout ----
        if l > 0 and rows[l] < rows[l - 1]:
            fold = rows[l - 1] // rows[l]
            sub = out_sizes[l - 1]
            sub_pad = _round_up(sub, LANE)            # previous layer's per-row Kout
            kin = fold * sub_pad
            w1p = jnp.zeros((kin, H), jnp.float32)
            for j in range(fold):                     # scatter rows per folded sub-row
                w1p = w1p.at[j * sub_pad:j * sub_pad + sub, :hid].set(
                    w1[j * sub:(j + 1) * sub, :])
        else:
            kin = _round_up(in_size, LANE)
            w1p = jnp.zeros((kin, H), jnp.float32).at[:in_size, :hid].set(w1)
        b1p = jnp.zeros((1, H), jnp.float32).at[:, :hid].set(b1)

        # ---- output-side (N) layout ----
        if l + 1 < n_layers and rows[l + 1] > rl:
            unfold = rows[l + 1] // rl
            nxt_in = in_sizes[l + 1]
            nxt_pad = _round_up(nxt_in, LANE)
            kout = unfold * nxt_pad
            w2p = jnp.zeros((H, kout), jnp.float32)
            b2p = jnp.zeros((1, kout), jnp.float32)
            for j in range(unfold):                   # scatter cols per unfolded sub-row
                w2p = w2p.at[:hid, j * nxt_pad:j * nxt_pad + nxt_in].set(
                    w2[:, j * nxt_in:(j + 1) * nxt_in])
                b2p = b2p.at[:, j * nxt_pad:j * nxt_pad + nxt_in].set(
                    b2[:, j * nxt_in:(j + 1) * nxt_in])
        else:
            kout = _round_up(out_size, LANE)
            w2p = jnp.zeros((H, kout), jnp.float32).at[:hid, :out_size].set(w2)
            b2p = jnp.zeros((1, kout), jnp.float32).at[:, :out_size].set(b2)

        fused_weights += [w1p.astype(MM_DTYPE), b1p, w2p.astype(MM_DTYPE), b2p]
        layers.append((kin, H, kout, skip_src[l], save_skip[l]))
        flops_per_row += rl * (kin * H + H * kout)
        tanh_per_row += rl * H
        max_flat = max(max_flat, rl * kin, rl * H, rl * kout)

    plan = dict(
        layers=tuple(layers),
        rl_in=rows[0], rl_out=rows[-1],
        kin0=layers[0][0], kout_final=layers[-1][2],
        in_size0=in_sizes[0], out_size_final=out_sizes[-1],
        flops_per_row=flops_per_row, tanh_per_row=tanh_per_row,
        max_flat=max_flat,
    )
    return plan, fused_weights


# ---------------------------------------------------------------------------
# The fused Pallas kernel: whole encoder->decoder chain, activations in VMEM
# ---------------------------------------------------------------------------
def _make_fused_kernel(layers):
    def kernel(x_ref, *refs):
        out_ref = refs[-1]
        wrefs = refs[:-1]
        h = x_ref[...]                               # (TM*rl0, Kin0) MM_DTYPE row tile
        saved = {}                                   # bf16 encoder outputs needed by skips
        for li, (kin, H, kout, skip, save) in enumerate(layers):
            w1, b1, w2, b2 = wrefs[4 * li: 4 * li + 4]
            nrows = h.size // kin
            if h.shape != (nrows, kin):
                # pure row-major refold; lane width stays a multiple of 128
                h = h.reshape(nrows, kin)
            if skip is not None:
                h = h + saved[skip].astype(jnp.float32)     # UNet skip-add (VPU)
            t = jnp.tanh(
                jnp.dot(h.astype(MM_DTYPE), w1[...],
                        preferred_element_type=jnp.float32) + b1[...])
            # TODO(synk): nn.Dropout(p=0.01) treated as identity (eval forward).
            h = jnp.dot(t.astype(MM_DTYPE), w2[...],
                        preferred_element_type=jnp.float32) + b2[...]
            if save:
                saved[li] = h.astype(SKIP_DTYPE)
        out_ref[...] = h.astype(out_ref.dtype)
    return kernel


def _const_spec(shape, single_buffer):
    idx = lambda *_: (0,) * len(shape)
    if single_buffer:
        try:
            # grid-invariant resident block -> no double buffering needed
            return pl.BlockSpec(shape, idx, pipeline_mode=pl.Buffered(1))
        except Exception:
            pass
    return pl.BlockSpec(shape, idx)


def fused_mlp_chain(a0, fused_weights, plan, buffered_weights=True):
    rl_in, rl_out = plan["rl_in"], plan["rl_out"]
    kin0, kout = plan["kin0"], plan["kout_final"]
    g = a0.shape[0] // rl_in                         # batch rows

    # --- generation-aware budgets -------------------------------------------
    vmem_cap = 128 << 20
    try:
        vmem_cap = int(pltpu.get_tpu_info().vmem_capacity_bytes)
    except Exception:
        pass
    small_vmem = vmem_cap <= (64 << 20)              # v7x-like: 64 MiB/TC, 2 TCs
    hard_cap = (48 << 20) if small_vmem else min(100 << 20, vmem_cap - (28 << 20))
    hard_cap = max(hard_cap, 32 << 20)

    # --- row-tile sizing ------------------------------------------------------
    n_tiles = max(1, _cdiv(g, MAX_ROW_TILE))
    if small_vmem and g >= 2 * SUBLANE:              # keep both TensorCores busy on v7x
        n_tiles = max(n_tiles, 2)
        n_tiles += n_tiles % 2
    tm = _round_up(_cdiv(g, n_tiles), SUBLANE)
    while tm > SUBLANE and tm * plan["max_flat"] * 4 * 8 > hard_cap // 2:
        tm = max(SUBLANE, _round_up(tm // 2, SUBLANE))
    n_tiles = _cdiv(g, tm)
    g_pad = n_tiles * tm
    if g_pad != g:
        a0 = jnp.pad(a0, ((0, (g_pad - g) * rl_in), (0, 0)))

    # --- specs ----------------------------------------------------------------
    in_specs = [pl.BlockSpec((tm * rl_in, kin0), lambda i: (i, 0))]
    in_specs += [_const_spec(w.shape, buffered_weights) for w in fused_weights]
    out_specs = pl.BlockSpec((tm * rl_out, kout), lambda i: (i, 0))

    # --- VMEM budget ----------------------------------------------------------
    weight_bytes = sum(int(w.size) * w.dtype.itemsize for w in fused_weights)
    wmult = 1 if buffered_weights else 2
    act_bytes = tm * plan["max_flat"] * 4 * 8        # live f32 activations (generous)
    io_bytes = 2 * (tm * rl_in * kin0 * a0.dtype.itemsize + tm * rl_out * kout * 4)
    vmem_limit = int(min(max(wmult * weight_bytes + act_bytes + io_bytes + (4 << 20),
                             16 << 20), hard_cap))

    # --- scheduler hint -------------------------------------------------------
    cost = pl.CostEstimate(
        flops=2 * g_pad * plan["flops_per_row"],
        transcendentals=g_pad * plan["tanh_per_row"],
        bytes_accessed=weight_bytes
        + int(a0.size) * a0.dtype.itemsize
        + g_pad * rl_out * kout * 4)

    out = pl.pallas_call(
        _make_fused_kernel(plan["layers"]),
        out_shape=jax.ShapeDtypeStruct((g_pad * rl_out, kout), jnp.float32),
        grid=(n_tiles,),
        in_specs=in_specs,
        out_specs=out_specs,
        compiler_params=pltpu.CompilerParams(
            dimension_semantics=("parallel",),       # independent row tiles
            vmem_limit_bytes=vmem_limit),
        cost_estimate=cost,
    )(a0, *fused_weights)
    return out[: g * rl_out]


# ---------------------------------------------------------------------------
# Forward pass (KUNetEncoderDecoder.forward semantics)
# ---------------------------------------------------------------------------
def kunet_forward(x, plan, fused_weights, *, input_dim, input_len, n_width, n_height,
                  output_dim, output_len, buffered_weights=True):
    B = x.shape[0]
    Ht, Wt = prod(n_height), prod(n_width)
    rl_in, kin0, in_size0 = plan["rl_in"], plan["kin0"], plan["in_size0"]

    # encoder-input reshuffle -> rows ordered (w, h), each row (lag, dim) flat.
    # Pure reshape when Wt == 1 (the module's default n_width=[1]).
    a0 = x.reshape(B, Ht, input_len, Wt, input_dim)
    a0 = jnp.transpose(a0, (0, 3, 1, 2, 4))
    a0 = a0.reshape(B * rl_in, in_size0)
    if kin0 > in_size0:
        a0 = jnp.pad(a0, ((0, 0), (0, kin0 - in_size0)))
    a0 = a0.astype(MM_DTYPE)                          # halve streamed input DMA

    out = fused_mlp_chain(a0, fused_weights, plan, buffered_weights)

    rl_out, kout = plan["rl_out"], plan["kout_final"]
    out_size = plan["out_size_final"]
    y = out.reshape(B, rl_out, kout)[:, :, :out_size]
    y = y.reshape(B, Wt, Ht, output_len, output_dim)
    y = jnp.transpose(y, (0, 2, 3, 1, 4))             # mirrors KUNetDecoder.forward tail
    return y.reshape(B, Ht * output_len, Wt * output_dim)


# ---------------------------------------------------------------------------
# Pure-JAX f32 reference (per-layer, mirrors the PyTorch module structure)
# ---------------------------------------------------------------------------
def _mlp_ref(x2d, params):
    w1, b1, w2, b2 = params
    return jnp.tanh(x2d @ w1 + b1) @ w2 + b2


def kunet_reference(x, enc_specs, enc_params, dec_specs, dec_params,
                    input_dim, input_len, n_width, n_height,
                    latent_dim, latent_len, output_dim, output_len):
    B = x.shape[0]
    Ht, Wt = prod(n_height), prod(n_width)
    h = x.reshape(B, Ht, input_len, Wt, 1, input_dim)
    h = jnp.swapaxes(h, 2, 4)
    h = h.reshape(B, Ht, Wt, input_len, input_dim)
    h = jnp.swapaxes(h, 1, 2)
    h = h.reshape(-1, input_len, input_dim)
    skips = []
    for (in_len, in_dim, out_len, out_dim), params in zip(enc_specs, enc_params):
        h = _mlp_ref(h.reshape(-1, in_len * in_dim), params).reshape(-1, out_len, out_dim)
        skips.append(h)
    z = h.reshape(-1, latent_len, latent_dim)
    zb = z.shape[0]
    h = z
    for i, ((in_len, in_dim, out_len, out_dim), params) in enumerate(
            zip(dec_specs, dec_params)):
        if 0 < i < len(skips):
            s = skips[len(skips) - 1 - i]
            if s.size == h.size:
                h = h + s.reshape(h.shape)
        h = _mlp_ref(h.reshape(-1, in_len * in_dim), params).reshape(-1, out_len, out_dim)
    y = h.reshape(-1, Wt, 1, Ht, output_len, output_dim)
    y = jnp.swapaxes(y, 1, 3)
    y = jnp.swapaxes(y, 2, 4)
    return y.reshape(zb, Ht * output_len, Wt * output_dim)


# ---------------------------------------------------------------------------
if __name__ == "__main__":
    # small, module-consistent configuration
    B = 2
    input_dim, input_len = 32, 4
    n_width, n_height = [1], [2, 2]
    latent_dim, latent_len = 32, 1
    output_dim, output_len = 32, 4
    hidden_dim_list = [32, 32, 32]
    kernel_hidden_layer_list = [1, 1, 1]

    key = jax.random.PRNGKey(0)
    kp, kx = jax.random.split(key)
    enc_specs, enc_params, dec_specs, dec_params = build_kunet(
        kp, input_dim, input_len, n_width, n_height,
        latent_dim, latent_len, output_dim, output_len,
        hidden_dim_list, kernel_hidden_layer_list)
    plan, fused_weights = fuse_kunet(enc_specs, enc_params, dec_specs, dec_params,
                                     n_width, n_height)

    Ht, Wt = prod(n_height), prod(n_width)
    x = jax.random.normal(kx, (B, Ht * input_len, Wt * input_dim), jnp.float32)

    cfg = dict(input_dim=input_dim, input_len=input_len, n_width=n_width,
               n_height=n_height, output_dim=output_dim, output_len=output_len)

    def make_runner(buffered):
        @jax.jit
        def run(x, weights):
            return kunet_forward(x, plan, weights, buffered_weights=buffered, **cfg)
        return run

    try:
        y = make_runner(True)(x, fused_weights)
        jax.block_until_ready(y)
    except Exception:
        # fall back to default double-buffered weight specs if Buffered(1)
        # is not supported by the installed Pallas version.
        y = make_runner(False)(x, fused_weights)
        jax.block_until_ready(y)

    assert y.shape == (B, Ht * output_len, Wt * output_dim), y.shape
    assert y.dtype == jnp.float32

    # correctness vs the f32 per-layer reference (loose tol: bf16 MXU operands)
    y_ref = kunet_reference(x, enc_specs, enc_params, dec_specs, dec_params,
                            input_dim, input_len, n_width, n_height,
                            latent_dim, latent_len, output_dim, output_len)
    err = float(jnp.max(jnp.abs(y - y_ref)))
    assert jnp.allclose(y, y_ref, atol=7.5e-2, rtol=7.5e-2), err

    print("KERNEL_OK")
</pallas_src>

<mosaic_0001>
module attributes {stable_mosaic.version = 11 : i64} {
  func.func @kernel(%arg0: i32, %arg1: memref<32x128xbf16, #tpu.memory_space<vmem>>, %arg2: memref<128x128xbf16, #tpu.memory_space<vmem>>, %arg3: memref<1x128xf32, #tpu.memory_space<vmem>>, %arg4: memref<128x128xbf16, #tpu.memory_space<vmem>>, %arg5: memref<1x128xf32, #tpu.memory_space<vmem>>, %arg6: memref<256x128xbf16, #tpu.memory_space<vmem>>, %arg7: memref<1x128xf32, #tpu.memory_space<vmem>>, %arg8: memref<128x128xbf16, #tpu.memory_space<vmem>>, %arg9: memref<1x128xf32, #tpu.memory_space<vmem>>, %arg10: memref<256x128xbf16, #tpu.memory_space<vmem>>, %arg11: memref<1x128xf32, #tpu.memory_space<vmem>>, %arg12: memref<128x128xbf16, #tpu.memory_space<vmem>>, %arg13: memref<1x128xf32, #tpu.memory_space<vmem>>, %arg14: memref<128x128xbf16, #tpu.memory_space<vmem>>, %arg15: memref<1x128xf32, #tpu.memory_space<vmem>>, %arg16: memref<128x256xbf16, #tpu.memory_space<vmem>>, %arg17: memref<1x256xf32, #tpu.memory_space<vmem>>, %arg18: memref<128x128xbf16, #tpu.memory_space<vmem>>, %arg19: memref<1x128xf32, #tpu.memory_space<vmem>>, %arg20: memref<128x256xbf16, #tpu.memory_space<vmem>>, %arg21: memref<1x256xf32, #tpu.memory_space<vmem>>, %arg22: memref<128x128xbf16, #tpu.memory_space<vmem>>, %arg23: memref<1x128xf32, #tpu.memory_space<vmem>>, %arg24: memref<128x128xbf16, #tpu.memory_space<vmem>>, %arg25: memref<1x128xf32, #tpu.memory_space<vmem>>, %arg26: memref<32x128xf32, #tpu.memory_space<vmem>>) attributes {dimension_semantics = [#tpu.dimension_semantics<parallel>], iteration_bounds = array<i64: 1>, scalar_prefetch = 0 : i64, scratch_operands = 0 : i64, tpu.core_type = #tpu.core_type<tc>, window_params = [{transform_indices = @transform_0, window_bounds = array<i64: 32, 128>}, {pipeline_mode = #tpu.pipeline_mode<synchronous>, transform_indices = @transform_1, window_bounds = array<i64: 128, 128>}, {pipeline_mode = #tpu.pipeline_mode<synchronous>, transform_indices = @transform_2, window_bounds = array<i64: 1, 128>}, {pipeline_mode = #tpu.pipeline_mode<synchronous>, transform_indices = @transform_3, window_bounds = array<i64: 128, 128>}, {pipeline_mode = #tpu.pipeline_mode<synchronous>, transform_indices = @transform_4, window_bounds = array<i64: 1, 128>}, {pipeline_mode = #tpu.pipeline_mode<synchronous>, transform_indices = @transform_5, window_bounds = array<i64: 256, 128>}, {pipeline_mode = #tpu.pipeline_mode<synchronous>, transform_indices = @transform_6, window_bounds = array<i64: 1, 128>}, {pipeline_mode = #tpu.pipeline_mode<synchronous>, transform_indices = @transform_7, window_bounds = array<i64: 128, 128>}, {pipeline_mode = #tpu.pipeline_mode<synchronous>, transform_indices = @transform_8, window_bounds = array<i64: 1, 128>}, {pipeline_mode = #tpu.pipeline_mode<synchronous>, transform_indices = @transform_9, window_bounds = array<i64: 256, 128>}, {pipeline_mode = #tpu.pipeline_mode<synchronous>, transform_indices = @transform_10, window_bounds = array<i64: 1, 128>}, {pipeline_mode = #tpu.pipeline_mode<synchronous>, transform_indices = @transform_11, window_bounds = array<i64: 128, 128>}, {pipeline_mode = #tpu.pipeline_mode<synchronous>, transform_indices = @transform_12, window_bounds = array<i64: 1, 128>}, {pipeline_mode = #tpu.pipeline_mode<synchronous>, transform_indices = @transform_13, window_bounds = array<i64: 128, 128>}, {pipeline_mode = #tpu.pipeline_mode<synchronous>, transform_indices = @transform_14, window_bounds = array<i64: 1, 128>}, {pipeline_mode = #tpu.pipeline_mode<synchronous>, transform_indices = @transform_15, window_bounds = array<i64: 128, 256>}, {pipeline_mode = #tpu.pipeline_mode<synchronous>, transform_indices = @transform_16, window_bounds = array<i64: 1, 256>}, {pipeline_mode = #tpu.pipeline_mode<synchronous>, transform_indices = @transform_17, window_bounds = array<i64: 128, 128>}, {pipeline_mode = #tpu.pipeline_mode<synchronous>, transform_indices = @transform_18, window_bounds = array<i64: 1, 128>}, {pipeline_mode = #tpu.pipeline_mode<synchronous>, transform_indices = @transform_19, window_bounds = array<i64: 128, 256>}, {pipeline_mode = #tpu.pipeline_mode<synchronous>, transform_indices = @transform_20, window_bounds = array<i64: 1, 256>}, {pipeline_mode = #tpu.pipeline_mode<synchronous>, transform_indices = @transform_21, window_bounds = array<i64: 128, 128>}, {pipeline_mode = #tpu.pipeline_mode<synchronous>, transform_indices = @transform_22, window_bounds = array<i64: 1, 128>}, {pipeline_mode = #tpu.pipeline_mode<synchronous>, transform_indices = @transform_23, window_bounds = array<i64: 128, 128>}, {pipeline_mode = #tpu.pipeline_mode<synchronous>, transform_indices = @transform_24, window_bounds = array<i64: 1, 128>}, {transform_indices = @transform_25, window_bounds = array<i64: 32, 128>}]} {
    %c0 = arith.constant 0 : index
    %c0_0 = arith.constant 0 : index
    %0 = vector.load %arg1[%c0, %c0_0] : memref<32x128xbf16, #tpu.memory_space<vmem>>, vector<32x128xbf16>
    %c0_1 = arith.constant 0 : index
    %c0_2 = arith.constant 0 : index
    %1 = vector.load %arg2[%c0_1, %c0_2] : memref<128x128xbf16, #tpu.memory_space<vmem>>, vector<128x128xbf16>
    %cst = arith.constant dense<0.000000e+00> : vector<32x128xf32>
    %2 = tpu.matmul %0, %1, %cst {dimension_numbers = #tpu.dot_dimension_numbers<[1], [0], [0], [1], [0, 0, 1, 1], [], []>} : vector<32x128xbf16>, vector<128x128xbf16>, vector<32x128xf32> -> vector<32x128xf32>
    %c0_3 = arith.constant 0 : index
    %c0_4 = arith.constant 0 : index
    %3 = vector.load %arg3[%c0_3, %c0_4] : memref<1x128xf32, #tpu.memory_space<vmem>>, vector<1x128xf32>
    %4 = vector.broadcast %3 : vector<1x128xf32> to vector<32x128xf32>
    %5 = arith.addf %2, %4 : vector<32x128xf32>
    %6 = math.tanh %5 : vector<32x128xf32>
    %7 = arith.truncf %6 : vector<32x128xf32> to vector<32x128xbf16>
    %c0_5 = arith.constant 0 : index
    %c0_6 = arith.constant 0 : index
    %8 = vector.load %arg4[%c0_5, %c0_6] : memref<128x128xbf16, #tpu.memory_space<vmem>>, vector<128x128xbf16>
    %cst_7 = arith.constant dense<0.000000e+00> : vector<32x128xf32>
    %9 = tpu.matmul %7, %8, %cst_7 {dimension_numbers = #tpu.dot_dimension_numbers<[1], [0], [0], [1], [0, 0, 1, 1], [], []>} : vector<32x128xbf16>, vector<128x128xbf16>, vector<32x128xf32> -> vector<32x128xf32>
    %c0_8 = arith.constant 0 : index
    %c0_9 = arith.constant 0 : index
    %10 = vector.load %arg5[%c0_8, %c0_9] : memref<1x128xf32, #tpu.memory_space<vmem>>, vector<1x128xf32>
    %11 = vector.broadcast %10 : vector<1x128xf32> to vector<32x128xf32>
    %12 = arith.addf %9, %11 : vector<32x128xf32>
    %13 = arith.truncf %12 : vector<32x128xf32> to vector<32x128xbf16>
    %14 = vector.shape_cast %12 : vector<32x128xf32> to vector<16x256xf32>
    %15 = arith.truncf %14 : vector<16x256xf32> to vector<16x256xbf16>
    %c0_10 = arith.constant 0 : index
    %c0_11 = arith.constant 0 : index
    %16 = vector.load %arg6[%c0_10, %c0_11] : memref<256x128xbf16, #tpu.memory_space<vmem>>, vector<256x128xbf16>
    %cst_12 = arith.constant dense<0.000000e+00> : vector<16x128xf32>
    %17 = tpu.matmul %15, %16, %cst_12 {dimension_numbers = #tpu.dot_dimension_numbers<[1], [0], [0], [1], [0, 0, 1, 1], [], []>} : vector<16x256xbf16>, vector<256x128xbf16>, vector<16x128xf32> -> vector<16x128xf32>
    %c0_13 = arith.constant 0 : index
    %c0_14 = arith.constant 0 : index
    %18 = vector.load %arg7[%c0_13, %c0_14] : memref<1x128xf32, #tpu.memory_space<vmem>>, vector<1x128xf32>
    %19 = vector.broadcast %18 : vector<1x128xf32> to vector<16x128xf32>
    %20 = arith.addf %17, %19 : vector<16x128xf32>
    %21 = math.tanh %20 : vector<16x128xf32>
    %22 = arith.truncf %21 : vector<16x128xf32> to vector<16x128xbf16>
    %c0_15 = arith.constant 0 : index
    %c0_16 = arith.constant 0 : index
    %23 = vector.load %arg8[%c0_15, %c0_16] : memref<128x128xbf16, #tpu.memory_space<vmem>>, vector<128x128xbf16>
    %cst_17 = arith.constant dense<0.000000e+00> : vector<16x128xf32>
    %24 = tpu.matmul %22, %23, %cst_17 {dimension_numbers = #tpu.dot_dimension_numbers<[1], [0], [0], [1], [0, 0, 1, 1], [], []>} : vector<16x128xbf16>, vector<128x128xbf16>, vector<16x128xf32> -> vector<16x128xf32>
    %c0_18 = arith.constant 0 : index
    %c0_19 = arith.constant 0 : index
    %25 = vector.load %arg9[%c0_18, %c0_19] : memref<1x128xf32, #tpu.memory_space<vmem>>, vector<1x128xf32>
    %26 = vector.broadcast %25 : vector<1x128xf32> to vector<16x128xf32>
    %27 = arith.addf %24, %26 : vector<16x128xf32>
    %28 = arith.truncf %27 : vector<16x128xf32> to vector<16x128xbf16>
    %29 = vector.shape_cast %27 : vector<16x128xf32> to vector<8x256xf32>
    %30 = arith.truncf %29 : vector<8x256xf32> to vector<8x256xbf16>
    %c0_20 = arith.constant 0 : index
    %c0_21 = arith.constant 0 : index
    %31 = vector.load %arg10[%c0_20, %c0_21] : memref<256x128xbf16, #tpu.memory_space<vmem>>, vector<256x128xbf16>
    %cst_22 = arith.constant dense<0.000000e+00> : vector<8x128xf32>
    %32 = tpu.matmul %30, %31, %cst_22 {dimension_numbers = #tpu.dot_dimension_numbers<[1], [0], [0], [1], [0, 0, 1, 1], [], []>} : vector<8x256xbf16>, vector<256x128xbf16>, vector<8x128xf32> -> vector<8x128xf32>
    %c0_23 = arith.constant 0 : index
    %c0_24 = arith.constant 0 : index
    %33 = vector.load %arg11[%c0_23, %c0_24] : memref<1x128xf32, #tpu.memory_space<vmem>>, vector<1x128xf32>
    %34 = vector.broadcast %33 : vector<1x128xf32> to vector<8x128xf32>
    %35 = arith.addf %32, %34 : vector<8x128xf32>
    %36 = math.tanh %35 : vector<8x128xf32>
    %37 = arith.truncf %36 : vector<8x128xf32> to vector<8x128xbf16>
    %c0_25 = arith.constant 0 : index
    %c0_26 = arith.constant 0 : index
    %38 = vector.load %arg12[%c0_25, %c0_26] : memref<128x128xbf16, #tpu.memory_space<vmem>>, vector<128x128xbf16>
    %cst_27 = arith.constant dense<0.000000e+00> : vector<8x128xf32>
    %39 = tpu.matmul %37, %38, %cst_27 {dimension_numbers = #tpu.dot_dimension_numbers<[1], [0], [0], [1], [0, 0, 1, 1], [], []>} : vector<8x128xbf16>, vector<128x128xbf16>, vector<8x128xf32> -> vector<8x128xf32>
    %c0_28 = arith.constant 0 : index
    %c0_29 = arith.constant 0 : index
    %40 = vector.load %arg13[%c0_28, %c0_29] : memref<1x128xf32, #tpu.memory_space<vmem>>, vector<1x128xf32>
    %41 = vector.broadcast %40 : vector<1x128xf32> to vector<8x128xf32>
    %42 = arith.addf %39, %41 : vector<8x128xf32>
    %43 = arith.truncf %42 : vector<8x128xf32> to vector<8x128xbf16>
    %c0_30 = arith.constant 0 : index
    %c0_31 = arith.constant 0 : index
    %44 = vector.load %arg14[%c0_30, %c0_31] : memref<128x128xbf16, #tpu.memory_space<vmem>>, vector<128x128xbf16>
    %cst_32 = arith.constant dense<0.000000e+00> : vector<8x128xf32>
    %45 = tpu.matmul %43, %44, %cst_32 {dimension_numbers = #tpu.dot_dimension_numbers<[1], [0], [0], [1], [0, 0, 1, 1], [], []>} : vector<8x128xbf16>, vector<128x128xbf16>, vector<8x128xf32> -> vector<8x128xf32>
    %c0_33 = arith.constant 0 : index
    %c0_34 = arith.constant 0 : index
    %46 = vector.load %arg15[%c0_33, %c0_34] : memref<1x128xf32, #tpu.memory_space<vmem>>, vector<1x128xf32>
    %47 = vector.broadcast %46 : vector<1x128xf32> to vector<8x128xf32>
    %48 = arith.addf %45, %47 : vector<8x128xf32>
    %49 = math.tanh %48 : vector<8x128xf32>
    %50 = arith.truncf %49 : vector<8x128xf32> to vector<8x128xbf16>
    %c0_35 = arith.constant 0 : index
    %c0_36 = arith.constant 0 : index
    %51 = vector.load %arg16[%c0_35, %c0_36] : memref<128x256xbf16, #tpu.memory_space<vmem>>, vector<128x256xbf16>
    %cst_37 = arith.constant dense<0.000000e+00> : vector<8x256xf32>
    %52 = tpu.matmul %50, %51, %cst_37 {dimension_numbers = #tpu.dot_dimension_numbers<[1], [0], [0], [1], [0, 0, 1, 1], [], []>} : vector<8x128xbf16>, vector<128x256xbf16>, vector<8x256xf32> -> vector<8x256xf32>
    %c0_38 = arith.constant 0 : index
    %c0_39 = arith.constant 0 : index
    %53 = vector.load %arg17[%c0_38, %c0_39] : memref<1x256xf32, #tpu.memory_space<vmem>>, vector<1x256xf32>
    %54 = vector.broadcast %53 : vector<1x256xf32> to vector<8x256xf32>
    %55 = arith.addf %52, %54 : vector<8x256xf32>
    %56 = vector.shape_cast %55 : vector<8x256xf32> to vector<16x128xf32>
    %57 = arith.extf %28 : vector<16x128xbf16> to vector<16x128xf32>
    %58 = arith.addf %56, %57 : vector<16x128xf32>
    %59 = arith.truncf %58 : vector<16x128xf32> to vector<16x128xbf16>
    %c0_40 = arith.constant 0 : index
    %c0_41 = arith.constant 0 : index
    %60 = vector.load %arg18[%c0_40, %c0_41] : memref<128x128xbf16, #tpu.memory_space<vmem>>, vector<128x128xbf16>
    %cst_42 = arith.constant dense<0.000000e+00> : vector<16x128xf32>
    %61 = tpu.matmul %59, %60, %cst_42 {dimension_numbers = #tpu.dot_dimension_numbers<[1], [0], [0], [1], [0, 0, 1, 1], [], []>} : vector<16x128xbf16>, vector<128x128xbf16>, vector<16x128xf32> -> vector<16x128xf32>
    %c0_43 = arith.constant 0 : index
    %c0_44 = arith.constant 0 : index
    %62 = vector.load %arg19[%c0_43, %c0_44] : memref<1x128xf32, #tpu.memory_space<vmem>>, vector<1x128xf32>
    %63 = vector.broadcast %62 : vector<1x128xf32> to vector<16x128xf32>
    %64 = arith.addf %61, %63 : vector<16x128xf32>
    %65 = math.tanh %64 : vector<16x128xf32>
    %66 = arith.truncf %65 : vector<16x128xf32> to vector<16x128xbf16>
    %c0_45 = arith.constant 0 : index
    %c0_46 = arith.constant 0 : index
    %67 = vector.load %arg20[%c0_45, %c0_46] : memref<128x256xbf16, #tpu.memory_space<vmem>>, vector<128x256xbf16>
    %cst_47 = arith.constant dense<0.000000e+00> : vector<16x256xf32>
    %68 = tpu.matmul %66, %67, %cst_47 {dimension_numbers = #tpu.dot_dimension_numbers<[1], [0], [0], [1], [0, 0, 1, 1], [], []>} : vector<16x128xbf16>, vector<128x256xbf16>, vector<16x256xf32> -> vector<16x256xf32>
    %c0_48 = arith.constant 0 : index
    %c0_49 = arith.constant 0 : index
    %69 = vector.load %arg21[%c0_48, %c0_49] : memref<1x256xf32, #tpu.memory_space<vmem>>, vector<1x256xf32>
    %70 = vector.broadcast %69 : vector<1x256xf32> to vector<16x256xf32>
    %71 = arith.addf %68, %70 : vector<16x256xf32>
    %72 = vector.shape_cast %71 : vector<16x256xf32> to vector<32x128xf32>
    %73 = arith.extf %13 : vector<32x128xbf16> to vector<32x128xf32>
    %74 = arith.addf %72, %73 : vector<32x128xf32>
    %75 = arith.truncf %74 : vector<32x128xf32> to vector<32x128xbf16>
    %c0_50 = arith.constant 0 : index
    %c0_51 = arith.constant 0 : index
    %76 = vector.load %arg22[%c0_50, %c0_51] : memref<128x128xbf16, #tpu.memory_space<vmem>>, vector<128x128xbf16>
    %cst_52 = arith.constant dense<0.000000e+00> : vector<32x128xf32>
    %77 = tpu.matmul %75, %76, %cst_52 {dimension_numbers = #tpu.dot_dimension_numbers<[1], [0], [0], [1], [0, 0, 1, 1], [], []>} : vector<32x128xbf16>, vector<128x128xbf16>, vector<32x128xf32> -> vector<32x128xf32>
    %c0_53 = arith.constant 0 : index
    %c0_54 = arith.constant 0 : index
    %78 = vector.load %arg23[%c0_53, %c0_54] : memref<1x128xf32, #tpu.memory_space<vmem>>, vector<1x128xf32>
    %79 = vector.broadcast %78 : vector<1x128xf32> to vector<32x128xf32>
    %80 = arith.addf %77, %79 : vector<32x128xf32>
    %81 = math.tanh %80 : vector<32x128xf32>
    %82 = arith.truncf %81 : vector<32x128xf32> to vector<32x128xbf16>
    %c0_55 = arith.constant 0 : index
    %c0_56 = arith.constant 0 : index
    %83 = vector.load %arg24[%c0_55, %c0_56] : memref<128x128xbf16, #tpu.memory_space<vmem>>, vector<128x128xbf16>
    %cst_57 = arith.constant dense<0.000000e+00> : vector<32x128xf32>
    %84 = tpu.matmul %82, %83, %cst_57 {dimension_numbers = #tpu.dot_dimension_numbers<[1], [0], [0], [1], [0, 0, 1, 1], [], []>} : vector<32x128xbf16>, vector<128x128xbf16>, vector<32x128xf32> -> vector<32x128xf32>
    %c0_58 = arith.constant 0 : index
    %c0_59 = arith.constant 0 : index
    %85 = vector.load %arg25[%c0_58, %c0_59] : memref<1x128xf32, #tpu.memory_space<vmem>>, vector<1x128xf32>
    %86 = vector.broadcast %85 : vector<1x128xf32> to vector<32x128xf32>
    %87 = arith.addf %84, %86 : vector<32x128xf32>
    %c0_60 = arith.constant 0 : index
    %c0_61 = arith.constant 0 : index
    %88 = vector.load %arg26[%c0_60, %c0_61] : memref<32x128xf32, #tpu.memory_space<vmem>>, vector<32x128xf32>
    tpu.vector_store %arg26[%c0_60, %c0_61], %87 {strides = array<i32>} : memref<32x128xf32, #tpu.memory_space<vmem>>, vector<32x128xf32>,
    return
  }
  func.func @transform_0(%arg0: i32) -> (i32, i32) {
    %c0_i32 = arith.constant 0 : i32
    %c0_i32_0 = arith.constant 0 : i32
    return %arg0, %c0_i32 : i32, i32
  }
  func.func @transform_1(%arg0: i32) -> (i32, i32) {
    %c0_i32 = arith.constant 0 : i32
    %c0_i32_0 = arith.constant 0 : i32
    %c0_i32_1 = arith.constant 0 : i32
    return %c0_i32, %c0_i32_0 : i32, i32
  }
  func.func @transform_2(%arg0: i32) -> (i32, i32) {
    %c0_i32 = arith.constant 0 : i32
    %c0_i32_0 = arith.constant 0 : i32
    %c0_i32_1 = arith.constant 0 : i32
    return %c0_i32, %c0_i32_0 : i32, i32
  }
  func.func @transform_3(%arg0: i32) -> (i32, i32) {
    %c0_i32 = arith.constant 0 : i32
    %c0_i32_0 = arith.constant 0 : i32
    %c0_i32_1 = arith.constant 0 : i32
    return %c0_i32, %c0_i32_0 : i32, i32
  }
  func.func @transform_4(%arg0: i32) -> (i32, i32) {
    %c0_i32 = arith.constant 0 : i32
    %c0_i32_0 = arith.constant 0 : i32
    %c0_i32_1 = arith.constant 0 : i32
    return %c0_i32, %c0_i32_0 : i32, i32
  }
  func.func @transform_5(%arg0: i32) -> (i32, i32) {
    %c0_i32 = arith.constant 0 : i32
    %c0_i32_0 = arith.constant 0 : i32
    %c0_i32_1 = arith.constant 0 : i32
    return %c0_i32, %c0_i32_0 : i32, i32
  }
  func.func @transform_6(%arg0: i32) -> (i32, i32) {
    %c0_i32 = arith.constant 0 : i32
    %c0_i32_0 = arith.constant 0 : i32
    %c0_i32_1 = arith.constant 0 : i32
    return %c0_i32, %c0_i32_0 : i32, i32
  }
  func.func @transform_7(%arg0: i32) -> (i32, i32) {
    %c0_i32 = arith.constant 0 : i32
    %c0_i32_0 = arith.constant 0 : i32
    %c0_i32_1 = arith.constant 0 : i32
    return %c0_i32, %c0_i32_0 : i32, i32
  }
  func.func @transform_8(%arg0: i32) -> (i32, i32) {
    %c0_i32 = arith.constant 0 : i32
    %c0_i32_0 = arith.constant 0 : i32
    %c0_i32_1 = arith.constant 0 : i32
    return %c0_i32, %c0_i32_0 : i32, i32
  }
  func.func @transform_9(%arg0: i32) -> (i32, i32) {
    %c0_i32 = arith.constant 0 : i32
    %c0_i32_0 = arith.constant 0 : i32
    %c0_i32_1 = arith.constant 0 : i32
    return %c0_i32, %c0_i32_0 : i32, i32
  }
  func.func @transform_10(%arg0: i32) -> (i32, i32) {
    %c0_i32 = arith.constant 0 : i32
    %c0_i32_0 = arith.constant 0 : i32
    %c0_i32_1 = arith.constant 0 : i32
    return %c0_i32, %c0_i32_0 : i32, i32
  }
  func.func @transform_11(%arg0: i32) -> (i32, i32) {
    %c0_i32 = arith.constant 0 : i32
    %c0_i32_0 = arith.constant 0 : i32
    %c0_i32_1 = arith.constant 0 : i32
    return %c0_i32, %c0_i32_0 : i32, i32
  }
  func.func @transform_12(%arg0: i32) -> (i32, i32) {
    %c0_i32 = arith.constant 0 : i32
    %c0_i32_0 = arith.constant 0 : i32
    %c0_i32_1 = arith.constant 0 : i32
    return %c0_i32, %c0_i32_0 : i32, i32
  }
  func.func @transform_13(%arg0: i32) -> (i32, i32) {
    %c0_i32 = arith.constant 0 : i32
    %c0_i32_0 = arith.constant 0 : i32
    %c0_i32_1 = arith.constant 0 : i32
    return %c0_i32, %c0_i32_0 : i32, i32
  }
  func.func @transform_14(%arg0: i32) -> (i32, i32) {
    %c0_i32 = arith.constant 0 : i32
    %c0_i32_0 = arith.constant 0 : i32
    %c0_i32_1 = arith.constant 0 : i32
    return %c0_i32, %c0_i32_0 : i32, i32
  }
  func.func @transform_15(%arg0: i32) -> (i32, i32) {
    %c0_i32 = arith.constant 0 : i32
    %c0_i32_0 = arith.constant 0 : i32
    %c0_i32_1 = arith.constant 0 : i32
    return %c0_i32, %c0_i32_0 : i32, i32
  }
  func.func @transform_16(%arg0: i32) -> (i32, i32) {
    %c0_i32 = arith.constant 0 : i32
    %c0_i32_0 = arith.constant 0 : i32
    %c0_i32_1 = arith.constant 0 : i32
    return %c0_i32, %c0_i32_0 : i32, i32
  }
  func.func @transform_17(%arg0: i32) -> (i32, i32) {
    %c0_i32 = arith.constant 0 : i32
    %c0_i32_0 = arith.constant 0 : i32
    %c0_i32_1 = arith.constant 0 : i32
    return %c0_i32, %c0_i32_0 : i32, i32
  }
  func.func @transform_18(%arg0: i32) -> (i32, i32) {
    %c0_i32 = arith.constant 0 : i32
    %c0_i32_0 = arith.constant 0 : i32
    %c0_i32_1 = arith.constant 0 : i32
    return %c0_i32, %c0_i32_0 : i32, i32
  }
  func.func @transform_19(%arg0: i32) -> (i32, i32) {
    %c0_i32 = arith.constant 0 : i32
    %c0_i32_0 = arith.constant 0 : i32
    %c0_i32_1 = arith.constant 0 : i32
    return %c0_i32, %c0_i32_0 : i32, i32
  }
  func.func @transform_20(%arg0: i32) -> (i32, i32) {
    %c0_i32 = arith.constant 0 : i32
    %c0_i32_0 = arith.constant 0 : i32
    %c0_i32_1 = arith.constant 0 : i32
    return %c0_i32, %c0_i32_0 : i32, i32
  }
  func.func @transform_21(%arg0: i32) -> (i32, i32) {
    %c0_i32 = arith.constant 0 : i32
    %c0_i32_0 = arith.constant 0 : i32
    %c0_i32_1 = arith.constant 0 : i32
    return %c0_i32, %c0_i32_0 : i32, i32
  }
  func.func @transform_22(%arg0: i32) -> (i32, i32) {
    %c0_i32 = arith.constant 0 : i32
    %c0_i32_0 = arith.constant 0 : i32
    %c0_i32_1 = arith.constant 0 : i32
    return %c0_i32, %c0_i32_0 : i32, i32
  }
  func.func @transform_23(%arg0: i32) -> (i32, i32) {
    %c0_i32 = arith.constant 0 : i32
    %c0_i32_0 = arith.constant 0 : i32
    %c0_i32_1 = arith.constant 0 : i32
    return %c0_i32, %c0_i32_0 : i32, i32
  }
  func.func @transform_24(%arg0: i32) -> (i32, i32) {
    %c0_i32 = arith.constant 0 : i32
    %c0_i32_0 = arith.constant 0 : i32
    %c0_i32_1 = arith.constant 0 : i32
    return %c0_i32, %c0_i32_0 : i32, i32
  }
  func.func @transform_25(%arg0: i32) -> (i32, i32) {
    %c0_i32 = arith.constant 0 : i32
    %c0_i32_0 = arith.constant 0 : i32
    return %arg0, %c0_i32 : i32, i32
  }
}

module attributes {stable_mosaic.version = 11 : i64} {
  func.func @kernel(%arg0: i32, %arg1: memref<32x128xbf16, #tpu.memory_space<vmem>>, %arg2: memref<128x128xbf16, #tpu.memory_space<vmem>>, %arg3: memref<1x128xf32, #tpu.memory_space<vmem>>, %arg4: memref<128x128xbf16, #tpu.memory_space<vmem>>, %arg5: memref<1x128xf32, #tpu.memory_space<vmem>>, %arg6: memref<256x128xbf16, #tpu.memory_space<vmem>>, %arg7: memref<1x128xf32, #tpu.memory_space<vmem>>, %arg8: memref<128x128xbf16, #tpu.memory_space<vmem>>, %arg9: memref<1x128xf32, #tpu.memory_space<vmem>>, %arg10: memref<256x128xbf16, #tpu.memory_space<vmem>>, %arg11: memref<1x128xf32, #tpu.memory_space<vmem>>, %arg12: memref<128x128xbf16, #tpu.memory_space<vmem>>, %arg13: memref<1x128xf32, #tpu.memory_space<vmem>>, %arg14: memref<128x128xbf16, #tpu.memory_space<vmem>>, %arg15: memref<1x128xf32, #tpu.memory_space<vmem>>, %arg16: memref<128x256xbf16, #tpu.memory_space<vmem>>, %arg17: memref<1x256xf32, #tpu.memory_space<vmem>>, %arg18: memref<128x128xbf16, #tpu.memory_space<vmem>>, %arg19: memref<1x128xf32, #tpu.memory_space<vmem>>, %arg20: memref<128x256xbf16, #tpu.memory_space<vmem>>, %arg21: memref<1x256xf32, #tpu.memory_space<vmem>>, %arg22: memref<128x128xbf16, #tpu.memory_space<vmem>>, %arg23: memref<1x128xf32, #tpu.memory_space<vmem>>, %arg24: memref<128x128xbf16, #tpu.memory_space<vmem>>, %arg25: memref<1x128xf32, #tpu.memory_space<vmem>>, %arg26: memref<32x128xf32, #tpu.memory_space<vmem>>) attributes {dimension_semantics = [#tpu.dimension_semantics<parallel>], iteration_bounds = array<i64: 1>, scalar_prefetch = 0 : i64, scratch_operands = 0 : i64, tpu.core_type = #tpu.core_type<tc>, window_params = [{transform_indices = @transform_0, window_bounds = array<i64: 32, 128>}, {pipeline_mode = #tpu.pipeline_mode<synchronous>, transform_indices = @transform_1, window_bounds = array<i64: 128, 128>}, {pipeline_mode = #tpu.pipeline_mode<synchronous>, transform_indices = @transform_2, window_bounds = array<i64: 1, 128>}, {pipeline_mode = #tpu.pipeline_mode<synchronous>, transform_indices = @transform_3, window_bounds = array<i64: 128, 128>}, {pipeline_mode = #tpu.pipeline_mode<synchronous>, transform_indices = @transform_4, window_bounds = array<i64: 1, 128>}, {pipeline_mode = #tpu.pipeline_mode<synchronous>, transform_indices = @transform_5, window_bounds = array<i64: 256, 128>}, {pipeline_mode = #tpu.pipeline_mode<synchronous>, transform_indices = @transform_6, window_bounds = array<i64: 1, 128>}, {pipeline_mode = #tpu.pipeline_mode<synchronous>, transform_indices = @transform_7, window_bounds = array<i64: 128, 128>}, {pipeline_mode = #tpu.pipeline_mode<synchronous>, transform_indices = @transform_8, window_bounds = array<i64: 1, 128>}, {pipeline_mode = #tpu.pipeline_mode<synchronous>, transform_indices = @transform_9, window_bounds = array<i64: 256, 128>}, {pipeline_mode = #tpu.pipeline_mode<synchronous>, transform_indices = @transform_10, window_bounds = array<i64: 1, 128>}, {pipeline_mode = #tpu.pipeline_mode<synchronous>, transform_indices = @transform_11, window_bounds = array<i64: 128, 128>}, {pipeline_mode = #tpu.pipeline_mode<synchronous>, transform_indices = @transform_12, window_bounds = array<i64: 1, 128>}, {pipeline_mode = #tpu.pipeline_mode<synchronous>, transform_indices = @transform_13, window_bounds = array<i64: 128, 128>}, {pipeline_mode = #tpu.pipeline_mode<synchronous>, transform_indices = @transform_14, window_bounds = array<i64: 1, 128>}, {pipeline_mode = #tpu.pipeline_mode<synchronous>, transform_indices = @transform_15, window_bounds = array<i64: 128, 256>}, {pipeline_mode = #tpu.pipeline_mode<synchronous>, transform_indices = @transform_16, window_bounds = array<i64: 1, 256>}, {pipeline_mode = #tpu.pipeline_mode<synchronous>, transform_indices = @transform_17, window_bounds = array<i64: 128, 128>}, {pipeline_mode = #tpu.pipeline_mode<synchronous>, transform_indices = @transform_18, window_bounds = array<i64: 1, 128>}, {pipeline_mode = #tpu.pipeline_mode<synchronous>, transform_indices = @transform_19, window_bounds = array<i64: 128, 256>}, {pipeline_mode = #tpu.pipeline_mode<synchronous>, transform_indices = @transform_20, window_bounds = array<i64: 1, 256>}, {pipeline_mode = #tpu.pipeline_mode<synchronous>, transform_indices = @transform_21, window_bounds = array<i64: 128, 128>}, {pipeline_mode = #tpu.pipeline_mode<synchronous>, transform_indices = @transform_22, window_bounds = array<i64: 1, 128>}, {pipeline_mode = #tpu.pipeline_mode<synchronous>, transform_indices = @transform_23, window_bounds = array<i64: 128, 128>}, {pipeline_mode = #tpu.pipeline_mode<synchronous>, transform_indices = @transform_24, window_bounds = array<i64: 1, 128>}, {transform_indices = @transform_25, window_bounds = array<i64: 32, 128>}]} {
    %c0 = arith.constant 0 : index
    %c0_0 = arith.constant 0 : index
    %0 = vector.load %arg1[%c0, %c0_0] : memref<32x128xbf16, #tpu.memory_space<vmem>>, vector<32x128xbf16>
    %c0_1 = arith.constant 0 : index
    %c0_2 = arith.constant 0 : index
    %1 = vector.load %arg2[%c0_1, %c0_2] : memref<128x128xbf16, #tpu.memory_space<vmem>>, vector<128x128xbf16>
    %cst = arith.constant dense<0.000000e+00> : vector<32x128xf32>
    %2 = tpu.matmul %0, %1, %cst {dimension_numbers = #tpu.dot_dimension_numbers<[1], [0], [0], [1], [0, 0, 1, 1], [], []>} : vector<32x128xbf16>, vector<128x128xbf16>, vector<32x128xf32> -> vector<32x128xf32>
    %c0_3 = arith.constant 0 : index
    %c0_4 = arith.constant 0 : index
    %3 = vector.load %arg3[%c0_3, %c0_4] : memref<1x128xf32, #tpu.memory_space<vmem>>, vector<1x128xf32>
    %4 = vector.broadcast %3 : vector<1x128xf32> to vector<32x128xf32>
    %5 = arith.addf %2, %4 : vector<32x128xf32>
    %6 = math.tanh %5 : vector<32x128xf32>
    %7 = arith.truncf %6 : vector<32x128xf32> to vector<32x128xbf16>
    %c0_5 = arith.constant 0 : index
    %c0_6 = arith.constant 0 : index
    %8 = vector.load %arg4[%c0_5, %c0_6] : memref<128x128xbf16, #tpu.memory_space<vmem>>, vector<128x128xbf16>
    %cst_7 = arith.constant dense<0.000000e+00> : vector<32x128xf32>
    %9 = tpu.matmul %7, %8, %cst_7 {dimension_numbers = #tpu.dot_dimension_numbers<[1], [0], [0], [1], [0, 0, 1, 1], [], []>} : vector<32x128xbf16>, vector<128x128xbf16>, vector<32x128xf32> -> vector<32x128xf32>
    %c0_8 = arith.constant 0 : index
    %c0_9 = arith.constant 0 : index
    %10 = vector.load %arg5[%c0_8, %c0_9] : memref<1x128xf32, #tpu.memory_space<vmem>>, vector<1x128xf32>
    %11 = vector.broadcast %10 : vector<1x128xf32> to vector<32x128xf32>
    %12 = arith.addf %9, %11 : vector<32x128xf32>
    %13 = arith.truncf %12 : vector<32x128xf32> to vector<32x128xbf16>
    %14 = vector.shape_cast %12 : vector<32x128xf32> to vector<16x256xf32>
    %15 = arith.truncf %14 : vector<16x256xf32> to vector<16x256xbf16>
    %c0_10 = arith.constant 0 : index
    %c0_11 = arith.constant 0 : index
    %16 = vector.load %arg6[%c0_10, %c0_11] : memref<256x128xbf16, #tpu.memory_space<vmem>>, vector<256x128xbf16>
    %cst_12 = arith.constant dense<0.000000e+00> : vector<16x128xf32>
    %17 = tpu.matmul %15, %16, %cst_12 {dimension_numbers = #tpu.dot_dimension_numbers<[1], [0], [0], [1], [0, 0, 1, 1], [], []>} : vector<16x256xbf16>, vector<256x128xbf16>, vector<16x128xf32> -> vector<16x128xf32>
    %c0_13 = arith.constant 0 : index
    %c0_14 = arith.constant 0 : index
    %18 = vector.load %arg7[%c0_13, %c0_14] : memref<1x128xf32, #tpu.memory_space<vmem>>, vector<1x128xf32>
    %19 = vector.broadcast %18 : vector<1x128xf32> to vector<16x128xf32>
    %20 = arith.addf %17, %19 : vector<16x128xf32>
    %21 = math.tanh %20 : vector<16x128xf32>
    %22 = arith.truncf %21 : vector<16x128xf32> to vector<16x128xbf16>
    %c0_15 = arith.constant 0 : index
    %c0_16 = arith.constant 0 : index
    %23 = vector.load %arg8[%c0_15, %c0_16] : memref<128x128xbf16, #tpu.memory_space<vmem>>, vector<128x128xbf16>
    %cst_17 = arith.constant dense<0.000000e+00> : vector<16x128xf32>
    %24 = tpu.matmul %22, %23, %cst_17 {dimension_numbers = #tpu.dot_dimension_numbers<[1], [0], [0], [1], [0, 0, 1, 1], [], []>} : vector<16x128xbf16>, vector<128x128xbf16>, vector<16x128xf32> -> vector<16x128xf32>
    %c0_18 = arith.constant 0 : index
    %c0_19 = arith.constant 0 : index
    %25 = vector.load %arg9[%c0_18, %c0_19] : memref<1x128xf32, #tpu.memory_space<vmem>>, vector<1x128xf32>
    %26 = vector.broadcast %25 : vector<1x128xf32> to vector<16x128xf32>
    %27 = arith.addf %24, %26 : vector<16x128xf32>
    %28 = arith.truncf %27 : vector<16x128xf32> to vector<16x128xbf16>
    %29 = vector.shape_cast %27 : vector<16x128xf32> to vector<8x256xf32>
    %30 = arith.truncf %29 : vector<8x256xf32> to vector<8x256xbf16>
    %c0_20 = arith.constant 0 : index
    %c0_21 = arith.constant 0 : index
    %31 = vector.load %arg10[%c0_20, %c0_21] : memref<256x128xbf16, #tpu.memory_space<vmem>>, vector<256x128xbf16>
    %cst_22 = arith.constant dense<0.000000e+00> : vector<8x128xf32>
    %32 = tpu.matmul %30, %31, %cst_22 {dimension_numbers = #tpu.dot_dimension_numbers<[1], [0], [0], [1], [0, 0, 1, 1], [], []>} : vector<8x256xbf16>, vector<256x128xbf16>, vector<8x128xf32> -> vector<8x128xf32>
    %c0_23 = arith.constant 0 : index
    %c0_24 = arith.constant 0 : index
    %33 = vector.load %arg11[%c0_23, %c0_24] : memref<1x128xf32, #tpu.memory_space<vmem>>, vector<1x128xf32>
    %34 = vector.broadcast %33 : vector<1x128xf32> to vector<8x128xf32>
    %35 = arith.addf %32, %34 : vector<8x128xf32>
    %36 = math.tanh %35 : vector<8x128xf32>
    %37 = arith.truncf %36 : vector<8x128xf32> to vector<8x128xbf16>
    %c0_25 = arith.constant 0 : index
    %c0_26 = arith.constant 0 : index
    %38 = vector.load %arg12[%c0_25, %c0_26] : memref<128x128xbf16, #tpu.memory_space<vmem>>, vector<128x128xbf16>
    %cst_27 = arith.constant dense<0.000000e+00> : vector<8x128xf32>
    %39 = tpu.matmul %37, %38, %cst_27 {dimension_numbers = #tpu.dot_dimension_numbers<[1], [0], [0], [1], [0, 0, 1, 1], [], []>} : vector<8x128xbf16>, vector<128x128xbf16>, vector<8x128xf32> -> vector<8x128xf32>
    %c0_28 = arith.constant 0 : index
    %c0_29 = arith.constant 0 : index
    %40 = vector.load %arg13[%c0_28, %c0_29] : memref<1x128xf32, #tpu.memory_space<vmem>>, vector<1x128xf32>
    %41 = vector.broadcast %40 : vector<1x128xf32> to vector<8x128xf32>
    %42 = arith.addf %39, %41 : vector<8x128xf32>
    %43 = arith.truncf %42 : vector<8x128xf32> to vector<8x128xbf16>
    %c0_30 = arith.constant 0 : index
    %c0_31 = arith.constant 0 : index
    %44 = vector.load %arg14[%c0_30, %c0_31] : memref<128x128xbf16, #tpu.memory_space<vmem>>, vector<128x128xbf16>
    %cst_32 = arith.constant dense<0.000000e+00> : vector<8x128xf32>
    %45 = tpu.matmul %43, %44, %cst_32 {dimension_numbers = #tpu.dot_dimension_numbers<[1], [0], [0], [1], [0, 0, 1, 1], [], []>} : vector<8x128xbf16>, vector<128x128xbf16>, vector<8x128xf32> -> vector<8x128xf32>
    %c0_33 = arith.constant 0 : index
    %c0_34 = arith.constant 0 : index
    %46 = vector.load %arg15[%c0_33, %c0_34] : memref<1x128xf32, #tpu.memory_space<vmem>>, vector<1x128xf32>
    %47 = vector.broadcast %46 : vector<1x128xf32> to vector<8x128xf32>
    %48 = arith.addf %45, %47 : vector<8x128xf32>
    %49 = math.tanh %48 : vector<8x128xf32>
    %50 = arith.truncf %49 : vector<8x128xf32> to vector<8x128xbf16>
    %c0_35 = arith.constant 0 : index
    %c0_36 = arith.constant 0 : index
    %51 = vector.load %arg16[%c0_35, %c0_36] : memref<128x256xbf16, #tpu.memory_space<vmem>>, vector<128x256xbf16>
    %cst_37 = arith.constant dense<0.000000e+00> : vector<8x256xf32>
    %52 = tpu.matmul %50, %51, %cst_37 {dimension_numbers = #tpu.dot_dimension_numbers<[1], [0], [0], [1], [0, 0, 1, 1], [], []>} : vector<8x128xbf16>, vector<128x256xbf16>, vector<8x256xf32> -> vector<8x256xf32>
    %c0_38 = arith.constant 0 : index
    %c0_39 = arith.constant 0 : index
    %53 = vector.load %arg17[%c0_38, %c0_39] : memref<1x256xf32, #tpu.memory_space<vmem>>, vector<1x256xf32>
    %54 = vector.broadcast %53 : vector<1x256xf32> to vector<8x256xf32>
    %55 = arith.addf %52, %54 : vector<8x256xf32>
    %56 = vector.shape_cast %55 : vector<8x256xf32> to vector<16x128xf32>
    %57 = arith.extf %28 : vector<16x128xbf16> to vector<16x128xf32>
    %58 = arith.addf %56, %57 : vector<16x128xf32>
    %59 = arith.truncf %58 : vector<16x128xf32> to vector<16x128xbf16>
    %c0_40 = arith.constant 0 : index
    %c0_41 = arith.constant 0 : index
    %60 = vector.load %arg18[%c0_40, %c0_41] : memref<128x128xbf16, #tpu.memory_space<vmem>>, vector<128x128xbf16>
    %cst_42 = arith.constant dense<0.000000e+00> : vector<16x128xf32>
    %61 = tpu.matmul %59, %60, %cst_42 {dimension_numbers = #tpu.dot_dimension_numbers<[1], [0], [0], [1], [0, 0, 1, 1], [], []>} : vector<16x128xbf16>, vector<128x128xbf16>, vector<16x128xf32> -> vector<16x128xf32>
    %c0_43 = arith.constant 0 : index
    %c0_44 = arith.constant 0 : index
    %62 = vector.load %arg19[%c0_43, %c0_44] : memref<1x128xf32, #tpu.memory_space<vmem>>, vector<1x128xf32>
    %63 = vector.broadcast %62 : vector<1x128xf32> to vector<16x128xf32>
    %64 = arith.addf %61, %63 : vector<16x128xf32>
    %65 = math.tanh %64 : vector<16x128xf32>
    %66 = arith.truncf %65 : vector<16x128xf32> to vector<16x128xbf16>
    %c0_45 = arith.constant 0 : index
    %c0_46 = arith.constant 0 : index
    %67 = vector.load %arg20[%c0_45, %c0_46] : memref<128x256xbf16, #tpu.memory_space<vmem>>, vector<128x256xbf16>
    %cst_47 = arith.constant dense<0.000000e+00> : vector<16x256xf32>
    %68 = tpu.matmul %66, %67, %cst_47 {dimension_numbers = #tpu.dot_dimension_numbers<[1], [0], [0], [1], [0, 0, 1, 1], [], []>} : vector<16x128xbf16>, vector<128x256xbf16>, vector<16x256xf32> -> vector<16x256xf32>
    %c0_48 = arith.constant 0 : index
    %c0_49 = arith.constant 0 : index
    %69 = vector.load %arg21[%c0_48, %c0_49] : memref<1x256xf32, #tpu.memory_space<vmem>>, vector<1x256xf32>
    %70 = vector.broadcast %69 : vector<1x256xf32> to vector<16x256xf32>
    %71 = arith.addf %68, %70 : vector<16x256xf32>
    %72 = vector.shape_cast %71 : vector<16x256xf32> to vector<32x128xf32>
    %73 = arith.extf %13 : vector<32x128xbf16> to vector<32x128xf32>
    %74 = arith.addf %72, %73 : vector<32x128xf32>
    %75 = arith.truncf %74 : vector<32x128xf32> to vector<32x128xbf16>
    %c0_50 = arith.constant 0 : index
    %c0_51 = arith.constant 0 : index
    %76 = vector.load %arg22[%c0_50, %c0_51] : memref<128x128xbf16, #tpu.memory_space<vmem>>, vector<128x128xbf16>
    %cst_52 = arith.constant dense<0.000000e+00> : vector<32x128xf32>
    %77 = tpu.matmul %75, %76, %cst_52 {dimension_numbers = #tpu.dot_dimension_numbers<[1], [0], [0], [1], [0, 0, 1, 1], [], []>} : vector<32x128xbf16>, vector<128x128xbf16>, vector<32x128xf32> -> vector<32x128xf32>
    %c0_53 = arith.constant 0 : index
    %c0_54 = arith.constant 0 : index
    %78 = vector.load %arg23[%c0_53, %c0_54] : memref<1x128xf32, #tpu.memory_space<vmem>>, vector<1x128xf32>
    %79 = vector.broadcast %78 : vector<1x128xf32> to vector<32x128xf32>
    %80 = arith.addf %77, %79 : vector<32x128xf32>
    %81 = math.tanh %80 : vector<32x128xf32>
    %82 = arith.truncf %81 : vector<32x128xf32> to vector<32x128xbf16>
    %c0_55 = arith.constant 0 : index
    %c0_56 = arith.constant 0 : index
    %83 = vector.load %arg24[%c0_55, %c0_56] : memref<128x128xbf16, #tpu.memory_space<vmem>>, vector<128x128xbf16>
    %cst_57 = arith.constant dense<0.000000e+00> : vector<32x128xf32>
    %84 = tpu.matmul %82, %83, %cst_57 {dimension_numbers = #tpu.dot_dimension_numbers<[1], [0], [0], [1], [0, 0, 1, 1], [], []>} : vector<32x128xbf16>, vector<128x128xbf16>, vector<32x128xf32> -> vector<32x128xf32>
    %c0_58 = arith.constant 0 : index
    %c0_59 = arith.constant 0 : index
    %85 = vector.load %arg25[%c0_58, %c0_59] : memref<1x128xf32, #tpu.memory_space<vmem>>, vector<1x128xf32>
    %86 = vector.broadcast %85 : vector<1x128xf32> to vector<32x128xf32>
    %87 = arith.addf %84, %86 : vector<32x128xf32>
    %c0_60 = arith.constant 0 : index
    %c0_61 = arith.constant 0 : index
    %88 = vector.load %arg26[%c0_60, %c0_61] : memref<32x128xf32, #tpu.memory_space<vmem>>, vector<32x128xf32>
    tpu.vector_store %arg26[%c0_60, %c0_61], %87 {strides = array<i32>} : memref<32x128xf32, #tpu.memory_space<vmem>>, vector<32x128xf32>,
    return
  }
  func.func @transform_0(%arg0: i32) -> (i32, i32) {
    %c0_i32 = arith.constant 0 : i32
    %c0_i32_0 = arith.constant 0 : i32
    return %arg0, %c0_i32 : i32, i32
  }
  func.func @transform_1(%arg0: i32) -> (i32, i32) {
    %c0_i32 = arith.constant 0 : i32
    %c0_i32_0 = arith.constant 0 : i32
    %c0_i32_1 = arith.constant 0 : i32
    return %c0_i32, %c0_i32_0 : i32, i32
  }
  func.func @transform_2(%arg0: i32) -> (i32, i32) {
    %c0_i32 = arith.constant 0 : i32
    %c0_i32_0 = arith.constant 0 : i32
    %c0_i32_1 = arith.constant 0 : i32
    return %c0_i32, %c0_i32_0 : i32, i32
  }
  func.func @transform_3(%arg0: i32) -> (i32, i32) {
    %c0_i32 = arith.constant 0 : i32
    %c0_i32_0 = arith.constant 0 : i32
    %c0_i32_1 = arith.constant 0 : i32
    return %c0_i32, %c0_i32_0 : i32, i32
  }
  func.func @transform_4(%arg0: i32) -> (i32, i32) {
    %c0_i32 = arith.constant 0 : i32
    %c0_i32_0 = arith.constant 0 : i32
    %c0_i32_1 = arith.constant 0 : i32
    return %c0_i32, %c0_i32_0 : i32, i32
  }
  func.func @transform_5(%arg0: i32) -> (i32, i32) {
    %c0_i32 = arith.constant 0 : i32
    %c0_i32_0 = arith.constant 0 : i32
    %c0_i32_1 = arith.constant 0 : i32
    return %c0_i32, %c0_i32_0 : i32, i32
  }
  func.func @transform_6(%arg0: i32) -> (i32, i32) {
    %c0_i32 = arith.constant 0 : i32
    %c0_i32_0 = arith.constant 0 : i32
    %c0_i32_1 = arith.constant 0 : i32
    return %c0_i32, %c0_i32_0 : i32, i32
  }
  func.func @transform_7(%arg0: i32) -> (i32, i32) {
    %c0_i32 = arith.constant 0 : i32
    %c0_i32_0 = arith.constant 0 : i32
    %c0_i32_1 = arith.constant 0 : i32
    return %c0_i32, %c0_i32_0 : i32, i32
  }
  func.func @transform_8(%arg0: i32) -> (i32, i32) {
    %c0_i32 = arith.constant 0 : i32
    %c0_i32_0 = arith.constant 0 : i32
    %c0_i32_1 = arith.constant 0 : i32
    return %c0_i32, %c0_i32_0 : i32, i32
  }
  func.func @transform_9(%arg0: i32) -> (i32, i32) {
    %c0_i32 = arith.constant 0 : i32
    %c0_i32_0 = arith.constant 0 : i32
    %c0_i32_1 = arith.constant 0 : i32
    return %c0_i32, %c0_i32_0 : i32, i32
  }
  func.func @transform_10(%arg0: i32) -> (i32, i32) {
    %c0_i32 = arith.constant 0 : i32
    %c0_i32_0 = arith.constant 0 : i32
    %c0_i32_1 = arith.constant 0 : i32
    return %c0_i32, %c0_i32_0 : i32, i32
  }
  func.func @transform_11(%arg0: i32) -> (i32, i32) {
    %c0_i32 = arith.constant 0 : i32
    %c0_i32_0 = arith.constant 0 : i32
    %c0_i32_1 = arith.constant 0 : i32
    return %c0_i32, %c0_i32_0 : i32, i32
  }
  func.func @transform_12(%arg0: i32) -> (i32, i32) {
    %c0_i32 = arith.constant 0 : i32
    %c0_i32_0 = arith.constant 0 : i32
    %c0_i32_1 = arith.constant 0 : i32
    return %c0_i32, %c0_i32_0 : i32, i32
  }
  func.func @transform_13(%arg0: i32) -> (i32, i32) {
    %c0_i32 = arith.constant 0 : i32
    %c0_i32_0 = arith.constant 0 : i32
    %c0_i32_1 = arith.constant 0 : i32
    return %c0_i32, %c0_i32_0 : i32, i32
  }
  func.func @transform_14(%arg0: i32) -> (i32, i32) {
    %c0_i32 = arith.constant 0 : i32
    %c0_i32_0 = arith.constant 0 : i32
    %c0_i32_1 = arith.constant 0 : i32
    return %c0_i32, %c0_i32_0 : i32, i32
  }
  func.func @transform_15(%arg0: i32) -> (i32, i32) {
    %c0_i32 = arith.constant 0 : i32
    %c0_i32_0 = arith.constant 0 : i32
    %c0_i32_1 = arith.constant 0 : i32
    return %c0_i32, %c0_i32_0 : i32, i32
  }
  func.func @transform_16(%arg0: i32) -> (i32, i32) {
    %c0_i32 = arith.constant 0 : i32
    %c0_i32_0 = arith.constant 0 : i32
    %c0_i32_1 = arith.constant 0 : i32
    return %c0_i32, %c0_i32_0 : i32, i32
  }
  func.func @transform_17(%arg0: i32) -> (i32, i32) {
    %c0_i32 = arith.constant 0 : i32
    %c0_i32_0 = arith.constant 0 : i32
    %c0_i32_1 = arith.constant 0 : i32
    return %c0_i32, %c0_i32_0 : i32, i32
  }
  func.func @transform_18(%arg0: i32) -> (i32, i32) {
    %c0_i32 = arith.constant 0 : i32
    %c0_i32_0 = arith.constant 0 : i32
    %c0_i32_1 = arith.constant 0 : i32
    return %c0_i32, %c0_i32_0 : i32, i32
  }
  func.func @transform_19(%arg0: i32) -> (i32, i32) {
    %c0_i32 = arith.constant 0 : i32
    %c0_i32_0 = arith.constant 0 : i32
    %c0_i32_1 = arith.constant 0 : i32
    return %c0_i32, %c0_i32_0 : i32, i32
  }
  func.func @transform_20(%arg0: i32) -> (i32, i32) {
    %c0_i32 = arith.constant 0 : i32
    %c0_i32_0 = arith.constant 0 : i32
    %c0_i32_1 = arith.constant 0 : i32
    return %c0_i32, %c0_i32_0 : i32, i32
  }
  func.func @transform_21(%arg0: i32) -> (i32, i32) {
    %c0_i32 = arith.constant 0 : i32
    %c0_i32_0 = arith.constant 0 : i32
    %c0_i32_1 = arith.constant 0 : i32
    return %c0_i32, %c0_i32_0 : i32, i32
  }
  func.func @transform_22(%arg0: i32) -> (i32, i32) {
    %c0_i32 = arith.constant 0 : i32
    %c0_i32_0 = arith.constant 0 : i32
    %c0_i32_1 = arith.constant 0 : i32
    return %c0_i32, %c0_i32_0 : i32, i32
  }
  func.func @transform_23(%arg0: i32) -> (i32, i32) {
    %c0_i32 = arith.constant 0 : i32
    %c0_i32_0 = arith.constant 0 : i32
    %c0_i32_1 = arith.constant 0 : i32
    return %c0_i32, %c0_i32_0 : i32, i32
  }
  func.func @transform_24(%arg0: i32) -> (i32, i32) {
    %c0_i32 = arith.constant 0 : i32
    %c0_i32_0 = arith.constant 0 : i32
    %c0_i32_1 = arith.constant 0 : i32
    return %c0_i32, %c0_i32_0 : i32, i32
  }
  func.func @transform_25(%arg0: i32) -> (i32, i32) {
    %c0_i32 = arith.constant 0 : i32
    %c0_i32_0 = arith.constant 0 : i32
    return %arg0, %c0_i32 : i32, i32
  }
}

</mosaic_0001>

<llo_original>
// kernel: run.1
$region0: #{run.1}
  #allocation0 [shape = 'u32[]', space=smem, size = 0x4, offset = 0x4, fixed_abs, tag = 'smem constant byte address 0x4 - core index']
  #allocation1 [shape = 'u32[144,128]{1,0:T(1,128)}', space=vmem, size = 0x12000, scoped, tag = 'internal scratch']
  %s0 = inlined_call_operand.vmem [shape: bf16[32,128], index: 0, kind: input, shape index: {}]
  %s1 = inlined_call_operand.vmem [shape: bf16[128,128], index: 1, kind: input, shape index: {}]
  %s2 = inlined_call_operand.vmem [shape: f32[1,128], index: 2, kind: input, shape index: {}]
  %s3 = inlined_call_operand.hbm [shape: bf16[128,128], index: 3, kind: input, shape index: {}]
  %s4 = inlined_call_operand.hbm [shape: f32[1,128], index: 4, kind: input, shape index: {}]
  %s5 = inlined_call_operand.hbm [shape: bf16[256,128], index: 5, kind: input, shape index: {}]
  %s6 = inlined_call_operand.hbm [shape: f32[1,128], index: 6, kind: input, shape index: {}]
  %s7 = inlined_call_operand.hbm [shape: bf16[128,128], index: 7, kind: input, shape index: {}]
  %s8 = inlined_call_operand.hbm [shape: f32[1,128], index: 8, kind: input, shape index: {}]
  %s9 = inlined_call_operand.hbm [shape: bf16[256,128], index: 9, kind: input, shape index: {}]
  %s10 = inlined_call_operand.hbm [shape: f32[1,128], index: 10, kind: input, shape index: {}]
  %s11 = inlined_call_operand.hbm [shape: bf16[128,128], index: 11, kind: input, shape index: {}]
  %s12 = inlined_call_operand.hbm [shape: f32[1,128], index: 12, kind: input, shape index: {}]
  %s13 = inlined_call_operand.hbm [shape: bf16[128,128], index: 13, kind: input, shape index: {}]
  %s14 = inlined_call_operand.hbm [shape: f32[1,128], index: 14, kind: input, shape index: {}]
  %s15 = inlined_call_operand.hbm [shape: bf16[128,256], index: 15, kind: input, shape index: {}]
  %s16 = inlined_call_operand.hbm [shape: f32[1,256], index: 16, kind: input, shape index: {}]
  %s17 = inlined_call_operand.hbm [shape: bf16[128,128], index: 17, kind: input, shape index: {}]
  %s18 = inlined_call_operand.hbm [shape: f32[1,128], index: 18, kind: input, shape index: {}]
  %s19 = inlined_call_operand.hbm [shape: bf16[128,256], index: 19, kind: input, shape index: {}]
  %s20 = inlined_call_operand.hbm [shape: f32[1,256], index: 20, kind: input, shape index: {}]
  %s21 = inlined_call_operand.hbm [shape: bf16[128,128], index: 21, kind: input, shape index: {}]
  %s22 = inlined_call_operand.hbm [shape: f32[1,128], index: 22, kind: input, shape index: {}]
  %s23 = inlined_call_operand.vmem [shape: bf16[128,128], index: 23, kind: input, shape index: {}]
  %s24 = inlined_call_operand.vmem [shape: f32[1,128], index: 24, kind: input, shape index: {}]
  %s25 = inlined_call_operand.vmem [shape: f32[32,128], index: 25, kind: output, shape index: {}]
  %s26 = sld [smem:[#allocation0]]
  $region190: #{run.1} parent=0
    _
  %s28 = ssub.s32 1, %s26
  %s29 = scalar_select 0, %s28, %s26
  $region1: #{run.1} parent=0
    #allocation2 [shape = 'u8[32768]{0}', space=vmem, size = 0x8000, scoped, tag = 'input window, operand 3, single buffered']
    #allocation3 [shape = 's32[1]{0}', space=sflag, size = 0x4, scoped, tag = 'scoped memory for run.1']
    #allocation4 [shape = 'u8[512]{0}', space=vmem, size = 0x400, scoped, tag = 'input window, operand 4, single buffered']
    #allocation5 [shape = 's32[1]{0}', space=sflag, size = 0x4, scoped, tag = 'scoped memory for run.1']
    #allocation6 [shape = 'u8[65536]{0}', space=vmem, size = 0x10000, scoped, tag = 'input window, operand 5, single buffered']
    #allocation7 [shape = 'u8[512]{0}', space=vmem, size = 0x400, scoped, tag = 'input window, operand 6, single buffered']
    #allocation8 [shape = 's32[1]{0}', space=sflag, size = 0x4, scoped, tag = 'scoped memory for run.1']
    #allocation9 [shape = 'u8[32768]{0}', space=vmem, size = 0x8000, scoped, tag = 'input window, operand 7, single buffered']
    #allocation10 [shape = 'u8[512]{0}', space=vmem, size = 0x400, scoped, tag = 'input window, operand 8, single buffered']
    #allocation11 [shape = 's32[1]{0}', space=sflag, size = 0x4, scoped, tag = 'scoped memory for run.1']
    #allocation12 [shape = 'u8[65536]{0}', space=vmem, size = 0x10000, scoped, tag = 'input window, operand 9, single buffered']
    #allocation13 [shape = 'u8[512]{0}', space=vmem, size = 0x400, scoped, tag = 'input window, operand 10, single buffered']
    #allocation14 [shape = 's32[1]{0}', space=sflag, size = 0x4, scoped, tag = 'scoped memory for run.1']
    #allocation15 [shape = 'u8[32768]{0}', space=vmem, size = 0x8000, scoped, tag = 'input window, operand 11, single buffered']
    #allocation16 [shape = 'u8[512]{0}', space=vmem, size = 0x400, scoped, tag = 'input window, operand 12, single buffered']
    #allocation17 [shape = 's32[1]{0}', space=sflag, size = 0x4, scoped, tag = 'scoped memory for run.1']
    #allocation18 [shape = 'u8[32768]{0}', space=vmem, size = 0x8000, scoped, tag = 'input window, operand 13, single buffered']
    #allocation19 [shape = 'u8[512]{0}', space=vmem, size = 0x400, scoped, tag = 'input window, operand 14, single buffered']
    #allocation20 [shape = 's32[1]{0}', space=sflag, size = 0x4, scoped, tag = 'scoped memory for run.1']
    #allocation21 [shape = 'u8[65536]{0}', space=vmem, size = 0x10000, scoped, tag = 'input window, operand 15, single buffered']
    #allocation22 [shape = 'u8[1024]{0}', space=vmem, size = 0x400, scoped, tag = 'input window, operand 16, single buffered']
    #allocation23 [shape = 's32[1]{0}', space=sflag, size = 0x4, scoped, tag = 'scoped memory for run.1']
    #allocation24 [shape = 'u8[32768]{0}', space=vmem, size = 0x8000, scoped, tag = 'input window, operand 17, single buffered']
    #allocation25 [shape = 'u8[512]{0}', space=vmem, size = 0x400, scoped, tag = 'input window, operand 18, single buffered']
    #allocation26 [shape = 's32[1]{0}', space=sflag, size = 0x4, scoped, tag = 'scoped memory for run.1']
    #allocation27 [shape = 'u8[65536]{0}', space=vmem, size = 0x10000, scoped, tag = 'input window, operand 19, single buffered']
    #allocation28 [shape = 'u8[1024]{0}', space=vmem, size = 0x400, scoped, tag = 'input window, operand 20, single buffered']
    #allocation29 [shape = 's32[1]{0}', space=sflag, size = 0x4, scoped, tag = 'scoped memory for run.1']
    #allocation30 [shape = 'u8[32768]{0}', space=vmem, size = 0x8000, scoped, tag = 'input window, operand 21, single buffered']
    #allocation31 [shape = 'u8[512]{0}', space=vmem, size = 0x400, scoped, tag = 'input window, operand 22, single buffered']
    #allocation32 [shape = 's32[1]{0}', space=sflag, size = 0x4, scoped, tag = 'scoped memory for run.1']
    %30 = vsyncpa [#allocation3], 0
    %31 = vsyncpa [#allocation5], 0
    %32 = vsyncpa [#allocation8], 0
    %33 = vsyncpa [#allocation11], 0
    %34 = vsyncpa [#allocation14], 0
    %35 = vsyncpa [#allocation17], 0
    %36 = vsyncpa [#allocation20], 0
    %37 = vsyncpa [#allocation23], 0
    %38 = vsyncpa [#allocation26], 0
    %39 = vsyncpa [#allocation29], 0
    %40 = vsyncpa [#allocation32], 0
    // Predicated region
    $region2: #{run.1} parent=1 // pred_check
      _
    $region3: #{run.1} parent=1 // pred_check_branch
      %42 = sbr.rel (0) target = $region5
    $region4: #{run.1} parent=1 // pred_region
      _
    $region5: #{run.1} parent=1 // pred_fallthru
      _
    // Predicated region
    $region6: #{run.1} parent=1 // pred_check
      _
    $region7: #{run.1} parent=1 // pred_check_branch
      %44 = sbr.rel (0) target = $region9
    $region8: #{run.1} parent=1 // pred_region
      _
    $region9: #{run.1} parent=1 // pred_fallthru
      _
    // Predicated region
    $region10: #{run.1} parent=1 // pred_check
      _
    $region11: #{run.1} parent=1 // pred_check_branch
      %46 = sbr.rel (0) target = $region13
    $region12: #{run.1} parent=1 // pred_region
      _
    $region13: #{run.1} parent=1 // pred_fallthru
      _
    // Predicated region
    $region14: #{run.1} parent=1 // pred_check
      _
    $region15: #{run.1} parent=1 // pred_check_branch
      %48 = sbr.rel (0) target = $region17
    $region16: #{run.1} parent=1 // pred_region
      %s50 = ssub.s32 1024, 1024
      %51 = vsyncadd [#allocation3], %s50
      %s52 = sshll.u32 [#allocation2], 4
      %s53 = int_to_ptr.vmem [resolvable:$true] %s52
      %58 = dma.hbm_to_vmem [thread:$0]  %s3, 1024, %s53, [#allocation3], 64, 64, 4
    $region17: #{run.1} parent=1 // pred_fallthru
      _
    // Predicated region
    $region18: #{run.1} parent=1 // pred_check
      _
    $region19: #{run.1} parent=1 // pred_check_branch
      %60 = sbr.rel (0) target = $region21
    $region20: #{run.1} parent=1 // pred_region
      %s62 = ssub.s32 16, 16
      %63 = vsyncadd [#allocation5], %s62
      %s65 = sshll.u32 [#allocation4], 4
      %s66 = int_to_ptr.vmem [resolvable:$true] %s65
      %68 = dma.hbm_to_vmem [thread:$0]  %s4, 16, %s66, [#allocation5]
    $region21: #{run.1} parent=1 // pred_fallthru
      _
    // Predicated region
    $region22: #{run.1} parent=1 // pred_check
      _
    $region23: #{run.1} parent=1 // pred_check_branch
      %70 = sbr.rel (0) target = $region25
    $region24: #{run.1} parent=1 // pred_region
      %s72 = ssub.s32 2048, 2048
      %73 = vsyncadd [#allocation5], %s72
      %s74 = sshll.u32 [#allocation6], 4
      %s75 = int_to_ptr.vmem [resolvable:$true] %s74
      %80 = dma.hbm_to_vmem [thread:$0]  %s5, 2048, %s75, [#allocation5], 64, 64, 4
    $region25: #{run.1} parent=1 // pred_fallthru
      _
    // Predicated region
    $region26: #{run.1} parent=1 // pred_check
      _
    $region27: #{run.1} parent=1 // pred_check_branch
      %82 = sbr.rel (0) target = $region29
    $region28: #{run.1} parent=1 // pred_region
      %s84 = ssub.s32 16, 16
      %85 = vsyncadd [#allocation8], %s84
      %s87 = sshll.u32 [#allocation7], 4
      %s88 = int_to_ptr.vmem [resolvable:$true] %s87
      %90 = dma.hbm_to_vmem [thread:$0]  %s6, 16, %s88, [#allocation8]
    $region29: #{run.1} parent=1 // pred_fallthru
      _
    // Predicated region
    $region30: #{run.1} parent=1 // pred_check
      _
    $region31: #{run.1} parent=1 // pred_check_branch
      %92 = sbr.rel (0) target = $region33
    $region32: #{run.1} parent=1 // pred_region
      %s94 = ssub.s32 1024, 1024
      %95 = vsyncadd [#allocation8], %s94
      %s96 = sshll.u32 [#allocation9], 4
      %s97 = int_to_ptr.vmem [resolvable:$true] %s96
      %102 = dma.hbm_to_vmem [thread:$0]  %s7, 1024, %s97, [#allocation8], 64, 64, 4
    $region33: #{run.1} parent=1 // pred_fallthru
      _
    // Predicated region
    $region34: #{run.1} parent=1 // pred_check
      _
    $region35: #{run.1} parent=1 // pred_check_branch
      %104 = sbr.rel (0) target = $region37
    $region36: #{run.1} parent=1 // pred_region
      %s106 = ssub.s32 16, 16
      %107 = vsyncadd [#allocation11], %s106
      %s109 = sshll.u32 [#allocation10], 4
      %s110 = int_to_ptr.vmem [resolvable:$true] %s109
      %112 = dma.hbm_to_vmem [thread:$0]  %s8, 16, %s110, [#allocation11]
    $region37: #{run.1} parent=1 // pred_fallthru
      _
    // Predicated region
    $region38: #{run.1} parent=1 // pred_check
      _
    $region39: #{run.1} parent=1 // pred_check_branch
      %114 = sbr.rel (0) target = $region41
    $region40: #{run.1} parent=1 // pred_region
      %s116 = ssub.s32 2048, 2048
      %117 = vsyncadd [#allocation11], %s116
      %s118 = sshll.u32 [#allocation12], 4
      %s119 = int_to_ptr.vmem [resolvable:$true] %s118
      %124 = dma.hbm_to_vmem [thread:$0]  %s9, 2048, %s119, [#allocation11], 64, 64, 4
    $region41: #{run.1} parent=1 // pred_fallthru
      _
    // Predicated region
    $region42: #{run.1} parent=1 // pred_check
      _
    $region43: #{run.1} parent=1 // pred_check_branch
      %126 = sbr.rel (0) target = $region45
    $region44: #{run.1} parent=1 // pred_region
      %s128 = ssub.s32 16, 16
      %129 = vsyncadd [#allocation14], %s128
      %s131 = sshll.u32 [#allocation13], 4
      %s132 = int_to_ptr.vmem [resolvable:$true] %s131
      %134 = dma.hbm_to_vmem [thread:$0]  %s10, 16, %s132, [#allocation14]
    $region45: #{run.1} parent=1 // pred_fallthru
      _
    // Predicated region
    $region46: #{run.1} parent=1 // pred_check
      _
    $region47: #{run.1} parent=1 // pred_check_branch
      %136 = sbr.rel (0) target = $region49
    $region48: #{run.1} parent=1 // pred_region
      %s138 = ssub.s32 1024, 1024
      %139 = vsyncadd [#allocation14], %s138
      %s140 = sshll.u32 [#allocation15], 4
      %s141 = int_to_ptr.vmem [resolvable:$true] %s140
      %146 = dma.hbm_to_vmem [thread:$0]  %s11, 1024, %s141, [#allocation14], 64, 64, 4
    $region49: #{run.1} parent=1 // pred_fallthru
      _
    // Predicated region
    $region50: #{run.1} parent=1 // pred_check
      _
    $region51: #{run.1} parent=1 // pred_check_branch
      %148 = sbr.rel (0) target = $region53
    $region52: #{run.1} parent=1 // pred_region
      %s150 = ssub.s32 16, 16
      %151 = vsyncadd [#allocation17], %s150
      %s153 = sshll.u32 [#allocation16], 4
      %s154 = int_to_ptr.vmem [resolvable:$true] %s153
      %156 = dma.hbm_to_vmem [thread:$0]  %s12, 16, %s154, [#allocation17]
    $region53: #{run.1} parent=1 // pred_fallthru
      _
    // Predicated region
    $region54: #{run.1} parent=1 // pred_check
      _
    $region55: #{run.1} parent=1 // pred_check_branch
      %158 = sbr.rel (0) target = $region57
    $region56: #{run.1} parent=1 // pred_region
      %s160 = ssub.s32 1024, 1024
      %161 = vsyncadd [#allocation17], %s160
      %s162 = sshll.u32 [#allocation18], 4
      %s163 = int_to_ptr.vmem [resolvable:$true] %s162
      %168 = dma.hbm_to_vmem [thread:$0]  %s13, 1024, %s163, [#allocation17], 64, 64, 4
    $region57: #{run.1} parent=1 // pred_fallthru
      _
    // Predicated region
    $region58: #{run.1} parent=1 // pred_check
      _
    $region59: #{run.1} parent=1 // pred_check_branch
      %170 = sbr.rel (0) target = $region61
    $region60: #{run.1} parent=1 // pred_region
      %s172 = ssub.s32 16, 16
      %173 = vsyncadd [#allocation20], %s172
      %s175 = sshll.u32 [#allocation19], 4
      %s176 = int_to_ptr.vmem [resolvable:$true] %s175
      %178 = dma.hbm_to_vmem [thread:$0]  %s14, 16, %s176, [#allocation20]
    $region61: #{run.1} parent=1 // pred_fallthru
      _
    // Predicated region
    $region62: #{run.1} parent=1 // pred_check
      _
    $region63: #{run.1} parent=1 // pred_check_branch
      %180 = sbr.rel (0) target = $region65
    $region64: #{run.1} parent=1 // pred_region
      %s182 = ssub.s32 2048, 2048
      %183 = vsyncadd [#allocation20], %s182
      %s184 = sshll.u32 [#allocation21], 4
      %s185 = int_to_ptr.vmem [resolvable:$true] %s184
      %190 = dma.hbm_to_vmem [thread:$0]  %s15, 2048, %s185, [#allocation20], 128, 128, 8
    $region65: #{run.1} parent=1 // pred_fallthru
      _
    // Predicated region
    $region66: #{run.1} parent=1 // pred_check
      _
    $region67: #{run.1} parent=1 // pred_check_branch
      %192 = sbr.rel (0) target = $region69
    $region68: #{run.1} parent=1 // pred_region
      %s194 = ssub.s32 32, 32
      %195 = vsyncadd [#allocation23], %s194
      %s197 = sshll.u32 [#allocation22], 4
      %s198 = int_to_ptr.vmem [resolvable:$true] %s197
      %200 = dma.hbm_to_vmem [thread:$0]  %s16, 32, %s198, [#allocation23]
    $region69: #{run.1} parent=1 // pred_fallthru
      _
    // Predicated region
    $region70: #{run.1} parent=1 // pred_check
      _
    $region71: #{run.1} parent=1 // pred_check_branch
      %202 = sbr.rel (0) target = $region73
    $region72: #{run.1} parent=1 // pred_region
      %s204 = ssub.s32 1024, 1024
      %205 = vsyncadd [#allocation23], %s204
      %s206 = sshll.u32 [#allocation24], 4
      %s207 = int_to_ptr.vmem [resolvable:$true] %s206
      %212 = dma.hbm_to_vmem [thread:$0]  %s17, 1024, %s207, [#allocation23], 64, 64, 4
    $region73: #{run.1} parent=1 // pred_fallthru
      _
    // Predicated region
    $region74: #{run.1} parent=1 // pred_check
      _
    $region75: #{run.1} parent=1 // pred_check_branch
      %214 = sbr.rel (0) target = $region77
    $region76: #{run.1} parent=1 // pred_region
      %s216 = ssub.s32 16, 16
      %217 = vsyncadd [#allocation26], %s216
      %s219 = sshll.u32 [#allocation25], 4
      %s220 = int_to_ptr.vmem [resolvable:$true] %s219
      %222 = dma.hbm_to_vmem [thread:$0]  %s18, 16, %s220, [#allocation26]
    $region77: #{run.1} parent=1 // pred_fallthru
      _
    // Predicated region
    $region78: #{run.1} parent=1 // pred_check
      _
    $region79: #{run.1} parent=1 // pred_check_branch
      %224 = sbr.rel (0) target = $region81
    $region80: #{run.1} parent=1 // pred_region
      %s226 = ssub.s32 2048, 2048
      %227 = vsyncadd [#allocation26], %s226
      %s228 = sshll.u32 [#allocation27], 4
      %s229 = int_to_ptr.vmem [resolvable:$true] %s228
      %234 = dma.hbm_to_vmem [thread:$0]  %s19, 2048, %s229, [#allocation26], 128, 128, 8
    $region81: #{run.1} parent=1 // pred_fallthru
      _
    // Predicated region
    $region82: #{run.1} parent=1 // pred_check
      _
    $region83: #{run.1} parent=1 // pred_check_branch
      %236 = sbr.rel (0) target = $region85
    $region84: #{run.1} parent=1 // pred_region
      %s238 = ssub.s32 32, 32
      %239 = vsyncadd [#allocation29], %s238
      %s241 = sshll.u32 [#allocation28], 4
      %s242 = int_to_ptr.vmem [resolvable:$true] %s241
      %244 = dma.hbm_to_vmem [thread:$0]  %s20, 32, %s242, [#allocation29]
    $region85: #{run.1} parent=1 // pred_fallthru
      _
    // Predicated region
    $region86: #{run.1} parent=1 // pred_check
      _
    $region87: #{run.1} parent=1 // pred_check_branch
      %246 = sbr.rel (0) target = $region89
    $region88: #{run.1} parent=1 // pred_region
      %s248 = ssub.s32 1024, 1024
      %249 = vsyncadd [#allocation29], %s248
      %s250 = sshll.u32 [#allocation30], 4
      %s251 = int_to_ptr.vmem [resolvable:$true] %s250
      %256 = dma.hbm_to_vmem [thread:$0]  %s21, 1024, %s251, [#allocation29], 64, 64, 4
    $region89: #{run.1} parent=1 // pred_fallthru
      _
    // Predicated region
    $region90: #{run.1} parent=1 // pred_check
      _
    $region91: #{run.1} parent=1 // pred_check_branch
      %258 = sbr.rel (0) target = $region93
    $region92: #{run.1} parent=1 // pred_region
      %s260 = ssub.s32 16, 16
      %261 = vsyncadd [#allocation32], %s260
      %s263 = sshll.u32 [#allocation31], 4
      %s264 = int_to_ptr.vmem [resolvable:$true] %s263
      %266 = dma.hbm_to_vmem [thread:$0]  %s22, 16, %s264, [#allocation32]
    $region93: #{run.1} parent=1 // pred_fallthru
      _
    // Predicated region
    $region94: #{run.1} parent=1 // pred_check
      _
    $region95: #{run.1} parent=1 // pred_check_branch
      %268 = sbr.rel (0) target = $region97
    $region96: #{run.1} parent=1 // pred_region
      _
    $region97: #{run.1} parent=1 // pred_fallthru
      _
    // Predicated region
    $region98: #{run.1} parent=1 // pred_check
      _
    $region99: #{run.1} parent=1 // pred_check_branch
      %270 = sbr.rel (0) target = $region101
    $region100: #{run.1} parent=1 // pred_region
      _
    $region101: #{run.1} parent=1 // pred_fallthru
      _
    // Predicated region
    $region102: #{run.1} parent=1 // pred_check
      _
    $region103: #{run.1} parent=1 // pred_check_branch
      %272 = sbr.rel (0) target = $region105
    $region104: #{run.1} parent=1 // pred_region
      %273 = dma.done [#allocation3], 1024
    $region105: #{run.1} parent=1 // pred_fallthru
      _
    // Predicated region
    $region106: #{run.1} parent=1 // pred_check
      _
    $region107: #{run.1} parent=1 // pred_check_branch
      %275 = sbr.rel (0) target = $region109
    $region108: #{run.1} parent=1 // pred_region
      %276 = dma.done [#allocation5], 16
    $region109: #{run.1} parent=1 // pred_fallthru
      _
    // Predicated region
    $region110: #{run.1} parent=1 // pred_check
      _
    $region111: #{run.1} parent=1 // pred_check_branch
      %278 = sbr.rel (0) target = $region113
    $region112: #{run.1} parent=1 // pred_region
      %279 = dma.done [#allocation5], 2048
    $region113: #{run.1} parent=1 // pred_fallthru
      _
    // Predicated region
    $region114: #{run.1} parent=1 // pred_check
      _
    $region115: #{run.1} parent=1 // pred_check_branch
      %281 = sbr.rel (0) target = $region117
    $region116: #{run.1} parent=1 // pred_region
      %282 = dma.done [#allocation8], 16
    $region117: #{run.1} parent=1 // pred_fallthru
      _
    // Predicated region
    $region118: #{run.1} parent=1 // pred_check
      _
    $region119: #{run.1} parent=1 // pred_check_branch
      %284 = sbr.rel (0) target = $region121
    $region120: #{run.1} parent=1 // pred_region
      %285 = dma.done [#allocation8], 1024
    $region121: #{run.1} parent=1 // pred_fallthru
      _
    // Predicated region
    $region122: #{run.1} parent=1 // pred_check
      _
    $region123: #{run.1} parent=1 // pred_check_branch
      %287 = sbr.rel (0) target = $region125
    $region124: #{run.1} parent=1 // pred_region
      %288 = dma.done [#allocation11], 16
    $region125: #{run.1} parent=1 // pred_fallthru
      _
    // Predicated region
    $region126: #{run.1} parent=1 // pred_check
      _
    $region127: #{run.1} parent=1 // pred_check_branch
      %290 = sbr.rel (0) target = $region129
    $region128: #{run.1} parent=1 // pred_region
      %291 = dma.done [#allocation11], 2048
    $region129: #{run.1} parent=1 // pred_fallthru
      _
    // Predicated region
    $region130: #{run.1} parent=1 // pred_check
      _
    $region131: #{run.1} parent=1 // pred_check_branch
      %293 = sbr.rel (0) target = $region133
    $region132: #{run.1} parent=1 // pred_region
      %294 = dma.done [#allocation14], 16
    $region133: #{run.1} parent=1 // pred_fallthru
      _
    // Predicated region
    $region134: #{run.1} parent=1 // pred_check
      _
    $region135: #{run.1} parent=1 // pred_check_branch
      %296 = sbr.rel (0) target = $region137
    $region136: #{run.1} parent=1 // pred_region
      %297 = dma.done [#allocation14], 1024
    $region137: #{run.1} parent=1 // pred_fallthru
      _
    // Predicated region
    $region138: #{run.1} parent=1 // pred_check
      _
    $region139: #{run.1} parent=1 // pred_check_branch
      %299 = sbr.rel (0) target = $region141
    $region140: #{run.1} parent=1 // pred_region
      %300 = dma.done [#allocation17], 16
    $region141: #{run.1} parent=1 // pred_fallthru
      _
    // Predicated region
    $region142: #{run.1} parent=1 // pred_check
      _
    $region143: #{run.1} parent=1 // pred_check_branch
      %302 = sbr.rel (0) target = $region145
    $region144: #{run.1} parent=1 // pred_region
      %303 = dma.done [#allocation17], 1024
    $region145: #{run.1} parent=1 // pred_fallthru
      _
    // Predicated region
    $region146: #{run.1} parent=1 // pred_check
      _
    $region147: #{run.1} parent=1 // pred_check_branch
      %305 = sbr.rel (0) target = $region149
    $region148: #{run.1} parent=1 // pred_region
      %306 = dma.done [#allocation20], 16
    $region149: #{run.1} parent=1 // pred_fallthru
      _
    // Predicated region
    $region150: #{run.1} parent=1 // pred_check
      _
    $region151: #{run.1} parent=1 // pred_check_branch
      %308 = sbr.rel (0) target = $region153
    $region152: #{run.1} parent=1 // pred_region
      %309 = dma.done [#allocation20], 2048
    $region153: #{run.1} parent=1 // pred_fallthru
      _
    // Predicated region
    $region154: #{run.1} parent=1 // pred_check
      _
    $region155: #{run.1} parent=1 // pred_check_branch
      %311 = sbr.rel (0) target = $region157
    $region156: #{run.1} parent=1 // pred_region
      %312 = dma.done [#allocation23], 32
    $region157: #{run.1} parent=1 // pred_fallthru
      _
    // Predicated region
    $region158: #{run.1} parent=1 // pred_check
      _
    $region159: #{run.1} parent=1 // pred_check_branch
      %314 = sbr.rel (0) target = $region161
    $region160: #{run.1} parent=1 // pred_region
      %315 = dma.done [#allocation23], 1024
    $region161: #{run.1} parent=1 // pred_fallthru
      _
    // Predicated region
    $region162: #{run.1} parent=1 // pred_check
      _
    $region163: #{run.1} parent=1 // pred_check_branch
      %317 = sbr.rel (0) target = $region165
    $region164: #{run.1} parent=1 // pred_region
      %318 = dma.done [#allocation26], 16
    $region165: #{run.1} parent=1 // pred_fallthru
      _
    // Predicated region
    $region166: #{run.1} parent=1 // pred_check
      _
    $region167: #{run.1} parent=1 // pred_check_branch
      %320 = sbr.rel (0) target = $region169
    $region168: #{run.1} parent=1 // pred_region
      %321 = dma.done [#allocation26], 2048
    $region169: #{run.1} parent=1 // pred_fallthru
      _
    // Predicated region
    $region170: #{run.1} parent=1 // pred_check
      _
    $region171: #{run.1} parent=1 // pred_check_branch
      %323 = sbr.rel (0) target = $region173
    $region172: #{run.1} parent=1 // pred_region
      %324 = dma.done [#allocation29], 32
    $region173: #{run.1} parent=1 // pred_fallthru
      _
    // Predicated region
    $region174: #{run.1} parent=1 // pred_check
      _
    $region175: #{run.1} parent=1 // pred_check_branch
      %326 = sbr.rel (0) target = $region177
    $region176: #{run.1} parent=1 // pred_region
      %327 = dma.done [#allocation29], 1024
    $region177: #{run.1} parent=1 // pred_fallthru
      _
    // Predicated region
    $region178: #{run.1} parent=1 // pred_check
      _
    $region179: #{run.1} parent=1 // pred_check_branch
      %329 = sbr.rel (0) target = $region181
    $region180: #{run.1} parent=1 // pred_region
      %330 = dma.done [#allocation32], 16
    $region181: #{run.1} parent=1 // pred_fallthru
      _
    %v332 = vld [vmem:[%s0] sm:$0xf]
    %v333 = vld [vmem:[%s0 + $0x4] sm:$0xf]
    %v334 = vld [vmem:[%s0 + $0x8] sm:$0xf]
    %v335 = vld [vmem:[%s0 + $0xc] sm:$0xf]
    %v336 = vld [vmem:[%s1] sm:$0xf]
    %v337 = vld [vmem:[%s1 + $0x4] sm:$0xf]
    %v338 = vld [vmem:[%s1 + $0x8] sm:$0xf]
    %v339 = vld [vmem:[%s1 + $0xc] sm:$0xf]
    %v340 = vld [vmem:[%s1 + $0x10] sm:$0xf]
    %v341 = vld [vmem:[%s1 + $0x14] sm:$0xf]
    %v342 = vld [vmem:[%s1 + $0x18] sm:$0xf]
    %v343 = vld [vmem:[%s1 + $0x1c] sm:$0xf]
    %v344 = vld [vmem:[%s1 + $0x20] sm:$0xf]
    %v345 = vld [vmem:[%s1 + $0x24] sm:$0xf]
    %v346 = vld [vmem:[%s1 + $0x28] sm:$0xf]
    %v347 = vld [vmem:[%s1 + $0x2c] sm:$0xf]
    %v348 = vld [vmem:[%s1 + $0x30] sm:$0xf]
    %v349 = vld [vmem:[%s1 + $0x34] sm:$0xf]
    %v350 = vld [vmem:[%s1 + $0x38] sm:$0xf]
    %v351 = vld [vmem:[%s1 + $0x3c] sm:$0xf]
    %v352 = vld [vmem:[%s2] sm:$0x1]
    %v354 = vlaneseq
    %v355 = vshrl.u32 %v354, 7
    %v356 = vsub.s32 0, %v355
    %v357 = vrot.slane %v352, %v356
    %v363 = vunpack.c.l.b16 %v332
    %v364 = vunpack.c.l.b16 %v333
    %v365 = vunpack.c.l.b16 %v334
    %v366 = vunpack.c.l.b16 %v335
    %v367 = vpack.c.b16 %v364, %v363
    %v368 = vpack.c.b16 %v366, %v365
    %v387 = vunpack.c.l.b16 %v336
    %v388 = vunpack.c.l.b16 %v337
    %v389 = vunpack.c.l.b16 %v338
    %v390 = vunpack.c.l.b16 %v339
    %v391 = vunpack.c.l.b16 %v340
    %v392 = vunpack.c.l.b16 %v341
    %v393 = vunpack.c.l.b16 %v342
    %v394 = vunpack.c.l.b16 %v343
    %v395 = vunpack.c.l.b16 %v344
    %v396 = vunpack.c.l.b16 %v345
    %v397 = vunpack.c.l.b16 %v346
    %v398 = vunpack.c.l.b16 %v347
    %v399 = vunpack.c.l.b16 %v348
    %v400 = vunpack.c.l.b16 %v349
    %v401 = vunpack.c.l.b16 %v350
    %v402 = vunpack.c.l.b16 %v351
    %v403 = vpack.c.b16 %v388, %v387
    %v404 = vpack.c.b16 %v390, %v389
    %v405 = vpack.c.b16 %v392, %v391
    %v406 = vpack.c.b16 %v394, %v393
    %v407 = vpack.c.b16 %v396, %v395
    %v408 = vpack.c.b16 %v398, %v397
    %v409 = vpack.c.b16 %v400, %v399
    %v410 = vpack.c.b16 %v402, %v401
    %419 = vmatprep.subr.bf16.mxu0 0
    %420 = vmatpush1.bf16.msra.mxu0 %v410
    %421 = vmatprep.subr.bf16.mxu0 0
    %422 = vmatpush1.bf16.msra.mxu0 %v409
    %423 = vmatprep.subr.bf16.mxu0 0
    %424 = vmatpush1.bf16.msra.mxu0 %v408
    %425 = vmatprep.subr.bf16.mxu0 0
    %426 = vmatpush1.bf16.msra.mxu0 %v407
    %427 = vmatprep.subr.bf16.mxu0 0
    %428 = vmatpush1.bf16.msra.mxu0 %v406
    %429 = vmatprep.subr.bf16.mxu0 0
    %430 = vmatpush1.bf16.msra.mxu0 %v405
    %431 = vmatprep.subr.bf16.mxu0 0
    %432 = vmatpush1.bf16.msra.mxu0 %v404
    %433 = vmatprep.subr.bf16.mxu0 0
    %434 = vmatpush1.bf16.msra.mxu0 %v403
    %435 = vmatprep.subr.bf16.mxu0 0
    %436 = vmatpush2.bf16.msra.mxu0 0
    %437 = vmatprep.subr.bf16.mxu0 0
    %438 = vmatpush2.bf16.msra.mxu0 0
    %439 = vmatprep.subr.bf16.mxu0 0
    %440 = vmatpush2.bf16.msra.mxu0 0
    %441 = vmatprep.subr.bf16.mxu0 0
    %442 = vmatpush2.bf16.msra.mxu0 0
    %443 = vmatprep.subr.bf16.mxu0 0
    %444 = vmatpush2.bf16.msra.mxu0 0
    %445 = vmatprep.subr.bf16.mxu0 0
    %446 = vmatpush2.bf16.msra.mxu0 0
    %447 = vmatprep.subr.bf16.mxu0 0
    %448 = vmatpush2.bf16.msra.mxu0 0
    %449 = vmatprep.subr.bf16.mxu0 0
    %450 = vmatpush2.bf16.msra.mxu0 0
    %451 = vmatprep.mubr.bf16.mxu0 0
    %452 = vmatmul.mubr.bf16.gmra.mxu0 %v367
    %v453 = vpop.f32.mrf.mxu0
    %v454 = vadd.f32 %v357, %v453
    %v455 = vpop.f32.mrf.mxu0
    %v456 = vpop.f32.mrf.mxu0
    %v457 = vadd.f32 %v357, %v456
    %v458 = vpop.f32.mrf.mxu0
    %459 = vmatprep.mubr.bf16.mxu0 0
    %460 = vmatmul.mubr.bf16.gmra.mxu0 %v368
    %v461 = vpop.f32.mrf.mxu0
    %v462 = vadd.f32 %v357, %v461
    %v463 = vpop.f32.mrf.mxu0
    %v464 = vpop.f32.mrf.mxu0
    %v465 = vadd.f32 %v357, %v464
    %v466 = vpop.f32.mrf.mxu0
    %467 = vdwg.mxu0
    %v468 = vtanh.pop %v454
    %v469 = vtanh.pop %v457
    %v470 = vtanh.pop %v462
    %v471 = vtanh.pop %v465
    %v472 = vpack.c.bf16 %v469, %v468
    %v473 = vpack.c.bf16 %v471, %v470
    %v474 = vld [vmem:[#allocation2] sm:$0xf]
    %v475 = vld [vmem:[#allocation2 + $0x4] sm:$0xf]
    %v476 = vld [vmem:[#allocation2 + $0x8] sm:$0xf]
    %v477 = vld [vmem:[#allocation2 + $0xc] sm:$0xf]
    %v478 = vld [vmem:[#allocation2 + $0x10] sm:$0xf]
    %v479 = vld [vmem:[#allocation2 + $0x14] sm:$0xf]
    %v480 = vld [vmem:[#allocation2 + $0x18] sm:$0xf]
    %v481 = vld [vmem:[#allocation2 + $0x1c] sm:$0xf]
    %v482 = vld [vmem:[#allocation2 + $0x20] sm:$0xf]
    %v483 = vld [vmem:[#allocation2 + $0x24] sm:$0xf]
    %v484 = vld [vmem:[#allocation2 + $0x28] sm:$0xf]
    %v485 = vld [vmem:[#allocation2 + $0x2c] sm:$0xf]
    %v486 = vld [vmem:[#allocation2 + $0x30] sm:$0xf]
    %v487 = vld [vmem:[#allocation2 + $0x34] sm:$0xf]
    %v488 = vld [vmem:[#allocation2 + $0x38] sm:$0xf]
    %v489 = vld [vmem:[#allocation2 + $0x3c] sm:$0xf]
    %v490 = vld [vmem:[#allocation4] sm:$0x1]
    %v492 = vlaneseq
    %v493 = vshrl.u32 %v492, 7
    %v494 = vsub.s32 0, %v493
    %v495 = vrot.slane %v490, %v494
    %v513 = vunpack.c.l.b16 %v474
    %v514 = vunpack.c.l.b16 %v475
    %v515 = vunpack.c.l.b16 %v476
    %v516 = vunpack.c.l.b16 %v477
    %v517 = vunpack.c.l.b16 %v478
    %v518 = vunpack.c.l.b16 %v479
    %v519 = vunpack.c.l.b16 %v480
    %v520 = vunpack.c.l.b16 %v481
    %v521 = vunpack.c.l.b16 %v482
    %v522 = vunpack.c.l.b16 %v483
    %v523 = vunpack.c.l.b16 %v484
    %v524 = vunpack.c.l.b16 %v485
    %v525 = vunpack.c.l.b16 %v486
    %v526 = vunpack.c.l.b16 %v487
    %v527 = vunpack.c.l.b16 %v488
    %v528 = vunpack.c.l.b16 %v489
    %v529 = vpack.c.b16 %v514, %v513
    %v530 = vpack.c.b16 %v516, %v515
    %v531 = vpack.c.b16 %v518, %v517
    %v532 = vpack.c.b16 %v520, %v519
    %v533 = vpack.c.b16 %v522, %v521
    %v534 = vpack.c.b16 %v524, %v523
    %v535 = vpack.c.b16 %v526, %v525
    %v536 = vpack.c.b16 %v528, %v527
    %545 = vmatprep.subr.bf16.mxu0 0
    %546 = vmatpush1.bf16.msra.mxu0 %v536
    %547 = vmatprep.subr.bf16.mxu0 0
    %548 = vmatpush1.bf16.msra.mxu0 %v535
    %549 = vmatprep.subr.bf16.mxu0 0
    %550 = vmatpush1.bf16.msra.mxu0 %v534
    %551 = vmatprep.subr.bf16.mxu0 0
    %552 = vmatpush1.bf16.msra.mxu0 %v533
    %553 = vmatprep.subr.bf16.mxu0 0
    %554 = vmatpush1.bf16.msra.mxu0 %v532
    %555 = vmatprep.subr.bf16.mxu0 0
    %556 = vmatpush1.bf16.msra.mxu0 %v531
    %557 = vmatprep.subr.bf16.mxu0 0
    %558 = vmatpush1.bf16.msra.mxu0 %v530
    %559 = vmatprep.subr.bf16.mxu0 0
    %560 = vmatpush1.bf16.msra.mxu0 %v529
    %561 = vmatprep.subr.bf16.mxu0 0
    %562 = vmatpush2.bf16.msra.mxu0 0
    %563 = vmatprep.subr.bf16.mxu0 0
    %564 = vmatpush2.bf16.msra.mxu0 0
    %565 = vmatprep.subr.bf16.mxu0 0
    %566 = vmatpush2.bf16.msra.mxu0 0
    %567 = vmatprep.subr.bf16.mxu0 0
    %568 = vmatpush2.bf16.msra.mxu0 0
    %569 = vmatprep.subr.bf16.mxu0 0
    %570 = vmatpush2.bf16.msra.mxu0 0
    %571 = vmatprep.subr.bf16.mxu0 0
    %572 = vmatpush2.bf16.msra.mxu0 0
    %573 = vmatprep.subr.bf16.mxu0 0
    %574 = vmatpush2.bf16.msra.mxu0 0
    %575 = vmatprep.subr.bf16.mxu0 0
    %576 = vmatpush2.bf16.msra.mxu0 0
    %577 = vmatprep.mubr.bf16.mxu0 0
    %578 = vmatmul.mubr.bf16.gmra.mxu0 %v472
    %v579 = vpop.f32.mrf.mxu0
    %v580 = vadd.f32 %v495, %v579
    %v581 = vpop.f32.mrf.mxu0
    %v582 = vpop.f32.mrf.mxu0
    %v583 = vadd.f32 %v495, %v582
    %v584 = vpop.f32.mrf.mxu0
    %585 = vmatprep.mubr.bf16.mxu0 0
    %586 = vmatmul.mubr.bf16.gmra.mxu0 %v473
    %v587 = vpop.f32.mrf.mxu0
    %v588 = vadd.f32 %v495, %v587
    %v589 = vpop.f32.mrf.mxu0
    %v590 = vpop.f32.mrf.mxu0
    %v591 = vadd.f32 %v495, %v590
    %v592 = vpop.f32.mrf.mxu0
    %593 = vdwg.mxu0
    %v594 = vpack.c.bf16 %v583, %v580
    %v595 = vpack.c.bf16 %v591, %v588
    %v597 = vunpack.c.l.s4 1966171168
    %v598 = vunpack.c.0.s8 %v597
    %v599 = vlaneseq
    %v600 = vshrl.u32 %v599, 7
    %v601 = vsub.s32 %v598, %v600
    %v602 = vrot.slane %v580, %v601
    %v604 = vunpack.c.l.s4 1966171168
    %v605 = vunpack.c.0.s8 %v604
    %v606 = vlaneseq
    %v607 = vshrl.u32 %v606, 7
    %v608 = vsub.s32 %v605, %v607
    %v609 = vrot.slane %v583, %v608
    %v611 = vunpack.c.l.s4 1966171168
    %v612 = vunpack.c.0.s8 %v611
    %v613 = vlaneseq
    %v614 = vshrl.u32 %v613, 7
    %v615 = vsub.s32 %v612, %v614
    %v616 = vrot.slane %v588, %v615
    %v618 = vunpack.c.l.s4 1966171168
    %v619 = vunpack.c.0.s8 %v618
    %v620 = vlaneseq
    %v621 = vshrl.u32 %v620, 7
    %v622 = vsub.s32 %v619, %v621
    %v623 = vrot.slane %v591, %v622
    %v628 = vcombine.low %v602, %v609
    %v629 = vcombine.high %v602, %v609
    %v630 = vcombine.low %v616, %v623
    %v631 = vcombine.high %v616, %v623
    %v636 = vpack.c.bf16 %v630, %v628
    %v637 = vpack.c.bf16 %v631, %v629
    %v638 = vld [vmem:[#allocation6] sm:$0xf]
    %v639 = vld [vmem:[#allocation6 + $0x4] sm:$0xf]
    %v640 = vld [vmem:[#allocation6 + $0x8] sm:$0xf]
    %v641 = vld [vmem:[#allocation6 + $0xc] sm:$0xf]
    %v642 = vld [vmem:[#allocation6 + $0x10] sm:$0xf]
    %v643 = vld [vmem:[#allocation6 + $0x14] sm:$0xf]
    %v644 = vld [vmem:[#allocation6 + $0x18] sm:$0xf]
    %v645 = vld [vmem:[#allocation6 + $0x1c] sm:$0xf]
    %v646 = vld [vmem:[#allocation6 + $0x20] sm:$0xf]
    %v647 = vld [vmem:[#allocation6 + $0x24] sm:$0xf]
    %v648 = vld [vmem:[#allocation6 + $0x28] sm:$0xf]
    %v649 = vld [vmem:[#allocation6 + $0x2c] sm:$0xf]
    %v650 = vld [vmem:[#allocation6 + $0x30] sm:$0xf]
    %v651 = vld [vmem:[#allocation6 + $0x34] sm:$0xf]
    %v652 = vld [vmem:[#allocation6 + $0x38] sm:$0xf]
    %v653 = vld [vmem:[#allocation6 + $0x3c] sm:$0xf]
    %v654 = vld [vmem:[#allocation6 + $0x40] sm:$0xf]
    %v655 = vld [vmem:[#allocation6 + $0x44] sm:$0xf]
    %v656 = vld [vmem:[#allocation6 + $0x48] sm:$0xf]
    %v657 = vld [vmem:[#allocation6 + $0x4c] sm:$0xf]
    %v658 = vld [vmem:[#allocation6 + $0x50] sm:$0xf]
    %v659 = vld [vmem:[#allocation6 + $0x54] sm:$0xf]
    %v660 = vld [vmem:[#allocation6 + $0x58] sm:$0xf]
    %v661 = vld [vmem:[#allocation6 + $0x5c] sm:$0xf]
    %v662 = vld [vmem:[#allocation6 + $0x60] sm:$0xf]
    %v663 = vld [vmem:[#allocation6 + $0x64] sm:$0xf]
    %v664 = vld [vmem:[#allocation6 + $0x68] sm:$0xf]
    %v665 = vld [vmem:[#allocation6 + $0x6c] sm:$0xf]
    %v666 = vld [vmem:[#allocation6 + $0x70] sm:$0xf]
    %v667 = vld [vmem:[#allocation6 + $0x74] sm:$0xf]
    %v668 = vld [vmem:[#allocation6 + $0x78] sm:$0xf]
    %v669 = vld [vmem:[#allocation6 + $0x7c] sm:$0xf]
    %v670 = vld [vmem:[#allocation7] sm:$0x1]
    %v672 = vlaneseq
    %v673 = vshrl.u32 %v672, 7
    %v674 = vsub.s32 0, %v673
    %v675 = vrot.slane %v670, %v674
    %v709 = vunpack.c.l.b16 %v638
    %v710 = vunpack.c.l.b16 %v639
    %v711 = vunpack.c.l.b16 %v640
    %v712 = vunpack.c.l.b16 %v641
    %v713 = vunpack.c.l.b16 %v642
    %v714 = vunpack.c.l.b16 %v643
    %v715 = vunpack.c.l.b16 %v644
    %v716 = vunpack.c.l.b16 %v645
    %v717 = vunpack.c.l.b16 %v646
    %v718 = vunpack.c.l.b16 %v647
    %v719 = vunpack.c.l.b16 %v648
    %v720 = vunpack.c.l.b16 %v649
    %v721 = vunpack.c.l.b16 %v650
    %v722 = vunpack.c.l.b16 %v651
    %v723 = vunpack.c.l.b16 %v652
    %v724 = vunpack.c.l.b16 %v653
    %v725 = vunpack.c.l.b16 %v654
    %v726 = vunpack.c.l.b16 %v655
    %v727 = vunpack.c.l.b16 %v656
    %v728 = vunpack.c.l.b16 %v657
    %v729 = vunpack.c.l.b16 %v658
    %v730 = vunpack.c.l.b16 %v659
    %v731 = vunpack.c.l.b16 %v660
    %v732 = vunpack.c.l.b16 %v661
    %v733 = vunpack.c.l.b16 %v662
    %v734 = vunpack.c.l.b16 %v663
    %v735 = vunpack.c.l.b16 %v664
    %v736 = vunpack.c.l.b16 %v665
    %v737 = vunpack.c.l.b16 %v666
    %v738 = vunpack.c.l.b16 %v667
    %v739 = vunpack.c.l.b16 %v668
    %v740 = vunpack.c.l.b16 %v669
    %v741 = vpack.c.b16 %v710, %v709
    %v742 = vpack.c.b16 %v712, %v711
    %v743 = vpack.c.b16 %v714, %v713
    %v744 = vpack.c.b16 %v716, %v715
    %v745 = vpack.c.b16 %v718, %v717
    %v746 = vpack.c.b16 %v720, %v719
    %v747 = vpack.c.b16 %v722, %v721
    %v748 = vpack.c.b16 %v724, %v723
    %v749 = vpack.c.b16 %v726, %v725
    %v750 = vpack.c.b16 %v728, %v727
    %v751 = vpack.c.b16 %v730, %v729
    %v752 = vpack.c.b16 %v732, %v731
    %v753 = vpack.c.b16 %v734, %v733
    %v754 = vpack.c.b16 %v736, %v735
    %v755 = vpack.c.b16 %v738, %v737
    %v756 = vpack.c.b16 %v740, %v739
    %773 = vmatprep.subr.bf16.mxu0 0
    %774 = vmatpush1.bf16.msra.mxu0 %v748
    %775 = vmatprep.subr.bf16.mxu0 0
    %776 = vmatpush1.bf16.msra.mxu0 %v747
    %777 = vmatprep.subr.bf16.mxu0 0
    %778 = vmatpush1.bf16.msra.mxu0 %v746
    %779 = vmatprep.subr.bf16.mxu0 0
    %780 = vmatpush1.bf16.msra.mxu0 %v745
    %781 = vmatprep.subr.bf16.mxu0 0
    %782 = vmatpush1.bf16.msra.mxu0 %v744
    %783 = vmatprep.subr.bf16.mxu0 0
    %784 = vmatpush1.bf16.msra.mxu0 %v743
    %785 = vmatprep.subr.bf16.mxu0 0
    %786 = vmatpush1.bf16.msra.mxu0 %v742
    %787 = vmatprep.subr.bf16.mxu0 0
    %788 = vmatpush1.bf16.msra.mxu0 %v741
    %789 = vmatprep.subr.bf16.mxu0 0
    %790 = vmatpush2.bf16.msra.mxu0 %v756
    %791 = vmatprep.subr.bf16.mxu0 0
    %792 = vmatpush2.bf16.msra.mxu0 %v755
    %793 = vmatprep.subr.bf16.mxu0 0
    %794 = vmatpush2.bf16.msra.mxu0 %v754
    %795 = vmatprep.subr.bf16.mxu0 0
    %796 = vmatpush2.bf16.msra.mxu0 %v753
    %797 = vmatprep.subr.bf16.mxu0 0
    %798 = vmatpush2.bf16.msra.mxu0 %v752
    %799 = vmatprep.subr.bf16.mxu0 0
    %800 = vmatpush2.bf16.msra.mxu0 %v751
    %801 = vmatprep.subr.bf16.mxu0 0
    %802 = vmatpush2.bf16.msra.mxu0 %v750
    %803 = vmatprep.subr.bf16.mxu0 0
    %804 = vmatpush2.bf16.msra.mxu0 %v749
    %805 = vmatprep.mubr.bf16.mxu0 %v637
    %806 = vmatmul.mubr.bf16.gmra.mxu0 %v636
    %v807 = vpop.f32.mrf.mxu0
    %v808 = vadd.f32 %v675, %v807
    %v809 = vpop.f32.mrf.mxu0
    %v810 = vpop.f32.mrf.mxu0
    %v811 = vadd.f32 %v675, %v810
    %v812 = vpop.f32.mrf.mxu0
    %813 = vdwg.mxu0
    %v814 = vtanh.pop %v808
    %v815 = vtanh.pop %v811
    %v816 = vpack.c.bf16 %v815, %v814
    %v817 = vld [vmem:[#allocation9] sm:$0xf]
    %v818 = vld [vmem:[#allocation9 + $0x4] sm:$0xf]
    %v819 = vld [vmem:[#allocation9 + $0x8] sm:$0xf]
    %v820 = vld [vmem:[#allocation9 + $0xc] sm:$0xf]
    %v821 = vld [vmem:[#allocation9 + $0x10] sm:$0xf]
    %v822 = vld [vmem:[#allocation9 + $0x14] sm:$0xf]
    %v823 = vld [vmem:[#allocation9 + $0x18] sm:$0xf]
    %v824 = vld [vmem:[#allocation9 + $0x1c] sm:$0xf]
    %v825 = vld [vmem:[#allocation9 + $0x20] sm:$0xf]
    %v826 = vld [vmem:[#allocation9 + $0x24] sm:$0xf]
    %v827 = vld [vmem:[#allocation9 + $0x28] sm:$0xf]
    %v828 = vld [vmem:[#allocation9 + $0x2c] sm:$0xf]
    %v829 = vld [vmem:[#allocation9 + $0x30] sm:$0xf]
    %v830 = vld [vmem:[#allocation9 + $0x34] sm:$0xf]
    %v831 = vld [vmem:[#allocation9 + $0x38] sm:$0xf]
    %v832 = vld [vmem:[#allocation9 + $0x3c] sm:$0xf]
    %v833 = vld [vmem:[#allocation10] sm:$0x1]
    %v835 = vlaneseq
    %v836 = vshrl.u32 %v835, 7
    %v837 = vsub.s32 0, %v836
    %v838 = vrot.slane %v833, %v837
    %v856 = vunpack.c.l.b16 %v817
    %v857 = vunpack.c.l.b16 %v818
    %v858 = vunpack.c.l.b16 %v819
    %v859 = vunpack.c.l.b16 %v820
    %v860 = vunpack.c.l.b16 %v821
    %v861 = vunpack.c.l.b16 %v822
    %v862 = vunpack.c.l.b16 %v823
    %v863 = vunpack.c.l.b16 %v824
    %v864 = vunpack.c.l.b16 %v825
    %v865 = vunpack.c.l.b16 %v826
    %v866 = vunpack.c.l.b16 %v827
    %v867 = vunpack.c.l.b16 %v828
    %v868 = vunpack.c.l.b16 %v829
    %v869 = vunpack.c.l.b16 %v830
    %v870 = vunpack.c.l.b16 %v831
    %v871 = vunpack.c.l.b16 %v832
    %v872 = vpack.c.b16 %v857, %v856
    %v873 = vpack.c.b16 %v859, %v858
    %v874 = vpack.c.b16 %v861, %v860
    %v875 = vpack.c.b16 %v863, %v862
    %v876 = vpack.c.b16 %v865, %v864
    %v877 = vpack.c.b16 %v867, %v866
    %v878 = vpack.c.b16 %v869, %v868
    %v879 = vpack.c.b16 %v871, %v870
    %888 = vmatprep.subr.bf16.mxu0 0
    %889 = vmatpush1.bf16.msra.mxu0 %v879
    %890 = vmatprep.subr.bf16.mxu0 0
    %891 = vmatpush1.bf16.msra.mxu0 %v878
    %892 = vmatprep.subr.bf16.mxu0 0
    %893 = vmatpush1.bf16.msra.mxu0 %v877
    %894 = vmatprep.subr.bf16.mxu0 0
    %895 = vmatpush1.bf16.msra.mxu0 %v876
    %896 = vmatprep.subr.bf16.mxu0 0
    %897 = vmatpush1.bf16.msra.mxu0 %v875
    %898 = vmatprep.subr.bf16.mxu0 0
    %899 = vmatpush1.bf16.msra.mxu0 %v874
    %900 = vmatprep.subr.bf16.mxu0 0
    %901 = vmatpush1.bf16.msra.mxu0 %v873
    %902 = vmatprep.subr.bf16.mxu0 0
    %903 = vmatpush1.bf16.msra.mxu0 %v872
    %904 = vmatprep.subr.bf16.mxu0 0
    %905 = vmatpush2.bf16.msra.mxu0 0
    %906 = vmatprep.subr.bf16.mxu0 0
    %907 = vmatpush2.bf16.msra.mxu0 0
    %908 = vmatprep.subr.bf16.mxu0 0
    %909 = vmatpush2.bf16.msra.mxu0 0
    %910 = vmatprep.subr.bf16.mxu0 0
    %911 = vmatpush2.bf16.msra.mxu0 0
    %912 = vmatprep.subr.bf16.mxu0 0
    %913 = vmatpush2.bf16.msra.mxu0 0
    %914 = vmatprep.subr.bf16.mxu0 0
    %915 = vmatpush2.bf16.msra.mxu0 0
    %916 = vmatprep.subr.bf16.mxu0 0
    %917 = vmatpush2.bf16.msra.mxu0 0
    %918 = vmatprep.subr.bf16.mxu0 0
    %919 = vmatpush2.bf16.msra.mxu0 0
    %920 = vmatprep.mubr.bf16.mxu0 0
    %921 = vmatmul.mubr.bf16.gmra.mxu0 %v816
    %v922 = vpop.f32.mrf.mxu0
    %v923 = vadd.f32 %v838, %v922
    %v924 = vpop.f32.mrf.mxu0
    %v925 = vpop.f32.mrf.mxu0
    %v926 = vadd.f32 %v838, %v925
    %v927 = vpop.f32.mrf.mxu0
    %928 = vdwg.mxu0
    %v929 = vpack.c.bf16 %v926, %v923
    %v931 = vunpack.c.l.s4 1966171168
    %v932 = vunpack.c.0.s8 %v931
    %v933 = vlaneseq
    %v934 = vshrl.u32 %v933, 7
    %v935 = vsub.s32 %v932, %v934
    %v936 = vrot.slane %v923, %v935
    %v938 = vunpack.c.l.s4 1966171168
    %v939 = vunpack.c.0.s8 %v938
    %v940 = vlaneseq
    %v941 = vshrl.u32 %v940, 7
    %v942 = vsub.s32 %v939, %v941
    %v943 = vrot.slane %v926, %v942
    %v946 = vcombine.low %v936, %v943
    %v947 = vcombine.high %v936, %v943
    %v950 = vpack.c.bf16 %v946, %v946
    %v951 = vpack.c.bf16 %v947, %v947
    %v952 = vld [vmem:[#allocation12] sm:$0xf]
    %v953 = vld [vmem:[#allocation12 + $0x4] sm:$0xf]
    %v954 = vld [vmem:[#allocation12 + $0x8] sm:$0xf]
    %v955 = vld [vmem:[#allocation12 + $0xc] sm:$0xf]
    %v956 = vld [vmem:[#allocation12 + $0x10] sm:$0xf]
    %v957 = vld [vmem:[#allocation12 + $0x14] sm:$0xf]
    %v958 = vld [vmem:[#allocation12 + $0x18] sm:$0xf]
    %v959 = vld [vmem:[#allocation12 + $0x1c] sm:$0xf]
    %v960 = vld [vmem:[#allocation12 + $0x20] sm:$0xf]
    %v961 = vld [vmem:[#allocation12 + $0x24] sm:$0xf]
    %v962 = vld [vmem:[#allocation12 + $0x28] sm:$0xf]
    %v963 = vld [vmem:[#allocation12 + $0x2c] sm:$0xf]
    %v964 = vld [vmem:[#allocation12 + $0x30] sm:$0xf]
    %v965 = vld [vmem:[#allocation12 + $0x34] sm:$0xf]
    %v966 = vld [vmem:[#allocation12 + $0x38] sm:$0xf]
    %v967 = vld [vmem:[#allocation12 + $0x3c] sm:$0xf]
    %v968 = vld [vmem:[#allocation12 + $0x40] sm:$0xf]
    %v969 = vld [vmem:[#allocation12 + $0x44] sm:$0xf]
    %v970 = vld [vmem:[#allocation12 + $0x48] sm:$0xf]
    %v971 = vld [vmem:[#allocation12 + $0x4c] sm:$0xf]
    %v972 = vld [vmem:[#allocation12 + $0x50] sm:$0xf]
    %v973 = vld [vmem:[#allocation12 + $0x54] sm:$0xf]
    %v974 = vld [vmem:[#allocation12 + $0x58] sm:$0xf]
    %v975 = vld [vmem:[#allocation12 + $0x5c] sm:$0xf]
    %v976 = vld [vmem:[#allocation12 + $0x60] sm:$0xf]
    %v977 = vld [vmem:[#allocation12 + $0x64] sm:$0xf]
    %v978 = vld [vmem:[#allocation12 + $0x68] sm:$0xf]
    %v979 = vld [vmem:[#allocation12 + $0x6c] sm:$0xf]
    %v980 = vld [vmem:[#allocation12 + $0x70] sm:$0xf]
    %v981 = vld [vmem:[#allocation12 + $0x74] sm:$0xf]
    %v982 = vld [vmem:[#allocation12 + $0x78] sm:$0xf]
    %v983 = vld [vmem:[#allocation12 + $0x7c] sm:$0xf]
    %v984 = vld [vmem:[#allocation13] sm:$0x1]
    %v986 = vlaneseq
    %v987 = vshrl.u32 %v986, 7
    %v988 = vsub.s32 0, %v987
    %v989 = vrot.slane %v984, %v988
    %v1023 = vunpack.c.l.b16 %v952
    %v1024 = vunpack.c.l.b16 %v953
    %v1025 = vunpack.c.l.b16 %v954
    %v1026 = vunpack.c.l.b16 %v955
    %v1027 = vunpack.c.l.b16 %v956
    %v1028 = vunpack.c.l.b16 %v957
    %v1029 = vunpack.c.l.b16 %v958
    %v1030 = vunpack.c.l.b16 %v959
    %v1031 = vunpack.c.l.b16 %v960
    %v1032 = vunpack.c.l.b16 %v961
    %v1033 = vunpack.c.l.b16 %v962
    %v1034 = vunpack.c.l.b16 %v963
    %v1035 = vunpack.c.l.b16 %v964
    %v1036 = vunpack.c.l.b16 %v965
    %v1037 = vunpack.c.l.b16 %v966
    %v1038 = vunpack.c.l.b16 %v967
    %v1039 = vunpack.c.l.b16 %v968
    %v1040 = vunpack.c.l.b16 %v969
    %v1041 = vunpack.c.l.b16 %v970
    %v1042 = vunpack.c.l.b16 %v971
    %v1043 = vunpack.c.l.b16 %v972
    %v1044 = vunpack.c.l.b16 %v973
    %v1045 = vunpack.c.l.b16 %v974
    %v1046 = vunpack.c.l.b16 %v975
    %v1047 = vunpack.c.l.b16 %v976
    %v1048 = vunpack.c.l.b16 %v977
    %v1049 = vunpack.c.l.b16 %v978
    %v1050 = vunpack.c.l.b16 %v979
    %v1051 = vunpack.c.l.b16 %v980
    %v1052 = vunpack.c.l.b16 %v981
    %v1053 = vunpack.c.l.b16 %v982
    %v1054 = vunpack.c.l.b16 %v983
    %v1055 = vpack.c.b16 %v1024, %v1023
    %v1056 = vpack.c.b16 %v1026, %v1025
    %v1057 = vpack.c.b16 %v1028, %v1027
    %v1058 = vpack.c.b16 %v1030, %v1029
    %v1059 = vpack.c.b16 %v1032, %v1031
    %v1060 = vpack.c.b16 %v1034, %v1033
    %v1061 = vpack.c.b16 %v1036, %v1035
    %v1062 = vpack.c.b16 %v1038, %v1037
    %v1063 = vpack.c.b16 %v1040, %v1039
    %v1064 = vpack.c.b16 %v1042, %v1041
    %v1065 = vpack.c.b16 %v1044, %v1043
    %v1066 = vpack.c.b16 %v1046, %v1045
    %v1067 = vpack.c.b16 %v1048, %v1047
    %v1068 = vpack.c.b16 %v1050, %v1049
    %v1069 = vpack.c.b16 %v1052, %v1051
    %v1070 = vpack.c.b16 %v1054, %v1053
    %1087 = vmatprep.subr.bf16.mxu0 0
    %1088 = vmatpush1.bf16.msra.mxu0 %v1062
    %1089 = vmatprep.subr.bf16.mxu0 0
    %1090 = vmatpush1.bf16.msra.mxu0 %v1061
    %1091 = vmatprep.subr.bf16.mxu0 0
    %1092 = vmatpush1.bf16.msra.mxu0 %v1060
    %1093 = vmatprep.subr.bf16.mxu0 0
    %1094 = vmatpush1.bf16.msra.mxu0 %v1059
    %1095 = vmatprep.subr.bf16.mxu0 0
    %1096 = vmatpush1.bf16.msra.mxu0 %v1058
    %1097 = vmatprep.subr.bf16.mxu0 0
    %1098 = vmatpush1.bf16.msra.mxu0 %v1057
    %1099 = vmatprep.subr.bf16.mxu0 0
    %1100 = vmatpush1.bf16.msra.mxu0 %v1056
    %1101 = vmatprep.subr.bf16.mxu0 0
    %1102 = vmatpush1.bf16.msra.mxu0 %v1055
    %1103 = vmatprep.subr.bf16.mxu0 0
    %1104 = vmatpush2.bf16.msra.mxu0 %v1070
    %1105 = vmatprep.subr.bf16.mxu0 0
    %1106 = vmatpush2.bf16.msra.mxu0 %v1069
    %1107 = vmatprep.subr.bf16.mxu0 0
    %1108 = vmatpush2.bf16.msra.mxu0 %v1068
    %1109 = vmatprep.subr.bf16.mxu0 0
    %1110 = vmatpush2.bf16.msra.mxu0 %v1067
    %1111 = vmatprep.subr.bf16.mxu0 0
    %1112 = vmatpush2.bf16.msra.mxu0 %v1066
    %1113 = vmatprep.subr.bf16.mxu0 0
    %1114 = vmatpush2.bf16.msra.mxu0 %v1065
    %1115 = vmatprep.subr.bf16.mxu0 0
    %1116 = vmatpush2.bf16.msra.mxu0 %v1064
    %1117 = vmatprep.subr.bf16.mxu0 0
    %1118 = vmatpush2.bf16.msra.mxu0 %v1063
    %1119 = vmatprep.mubr.bf16.mxu0 %v951
    %1120 = vmatmul.mubr.bf16.gmra.mxu0 %v950
    %v1121 = vpop.f32.mrf.mxu0
    %v1122 = vadd.f32 %v989, %v1121
    %v1123 = vpop.f32.mrf.mxu0
    %v1124 = vpop.f32.mrf.mxu0
    %v1125 = vpop.f32.mrf.mxu0
    %1126 = vdwg.mxu0
    %v1127 = vtanh.pop %v1122
    %v1128 = vpack.c.bf16 %v1127, %v1127
    %v1129 = vld [vmem:[#allocation15] sm:$0xf]
    %v1130 = vld [vmem:[#allocation15 + $0x4] sm:$0xf]
    %v1131 = vld [vmem:[#allocation15 + $0x8] sm:$0xf]
    %v1132 = vld [vmem:[#allocation15 + $0xc] sm:$0xf]
    %v1133 = vld [vmem:[#allocation15 + $0x10] sm:$0xf]
    %v1134 = vld [vmem:[#allocation15 + $0x14] sm:$0xf]
    %v1135 = vld [vmem:[#allocation15 + $0x18] sm:$0xf]
    %v1136 = vld [vmem:[#allocation15 + $0x1c] sm:$0xf]
    %v1137 = vld [vmem:[#allocation15 + $0x20] sm:$0xf]
    %v1138 = vld [vmem:[#allocation15 + $0x24] sm:$0xf]
    %v1139 = vld [vmem:[#allocation15 + $0x28] sm:$0xf]
    %v1140 = vld [vmem:[#allocation15 + $0x2c] sm:$0xf]
    %v1141 = vld [vmem:[#allocation15 + $0x30] sm:$0xf]
    %v1142 = vld [vmem:[#allocation15 + $0x34] sm:$0xf]
    %v1143 = vld [vmem:[#allocation15 + $0x38] sm:$0xf]
    %v1144 = vld [vmem:[#allocation15 + $0x3c] sm:$0xf]
    %v1145 = vld [vmem:[#allocation16] sm:$0x1]
    %v1147 = vlaneseq
    %v1148 = vshrl.u32 %v1147, 7
    %v1149 = vsub.s32 0, %v1148
    %v1150 = vrot.slane %v1145, %v1149
    %v1168 = vunpack.c.l.b16 %v1129
    %v1169 = vunpack.c.l.b16 %v1130
    %v1170 = vunpack.c.l.b16 %v1131
    %v1171 = vunpack.c.l.b16 %v1132
    %v1172 = vunpack.c.l.b16 %v1133
    %v1173 = vunpack.c.l.b16 %v1134
    %v1174 = vunpack.c.l.b16 %v1135
    %v1175 = vunpack.c.l.b16 %v1136
    %v1176 = vunpack.c.l.b16 %v1137
    %v1177 = vunpack.c.l.b16 %v1138
    %v1178 = vunpack.c.l.b16 %v1139
    %v1179 = vunpack.c.l.b16 %v1140
    %v1180 = vunpack.c.l.b16 %v1141
    %v1181 = vunpack.c.l.b16 %v1142
    %v1182 = vunpack.c.l.b16 %v1143
    %v1183 = vunpack.c.l.b16 %v1144
    %v1184 = vpack.c.b16 %v1169, %v1168
    %v1185 = vpack.c.b16 %v1171, %v1170
    %v1186 = vpack.c.b16 %v1173, %v1172
    %v1187 = vpack.c.b16 %v1175, %v1174
    %v1188 = vpack.c.b16 %v1177, %v1176
    %v1189 = vpack.c.b16 %v1179, %v1178
    %v1190 = vpack.c.b16 %v1181, %v1180
    %v1191 = vpack.c.b16 %v1183, %v1182
    %1200 = vmatprep.subr.bf16.mxu0 0
    %1201 = vmatpush1.bf16.msra.mxu0 %v1191
    %1202 = vmatprep.subr.bf16.mxu0 0
    %1203 = vmatpush1.bf16.msra.mxu0 %v1190
    %1204 = vmatprep.subr.bf16.mxu0 0
    %1205 = vmatpush1.bf16.msra.mxu0 %v1189
    %1206 = vmatprep.subr.bf16.mxu0 0
    %1207 = vmatpush1.bf16.msra.mxu0 %v1188
    %1208 = vmatprep.subr.bf16.mxu0 0
    %1209 = vmatpush1.bf16.msra.mxu0 %v1187
    %1210 = vmatprep.subr.bf16.mxu0 0
    %1211 = vmatpush1.bf16.msra.mxu0 %v1186
    %1212 = vmatprep.subr.bf16.mxu0 0
    %1213 = vmatpush1.bf16.msra.mxu0 %v1185
    %1214 = vmatprep.subr.bf16.mxu0 0
    %1215 = vmatpush1.bf16.msra.mxu0 %v1184
    %1216 = vmatprep.subr.bf16.mxu0 0
    %1217 = vmatpush2.bf16.msra.mxu0 0
    %1218 = vmatprep.subr.bf16.mxu0 0
    %1219 = vmatpush2.bf16.msra.mxu0 0
    %1220 = vmatprep.subr.bf16.mxu0 0
    %1221 = vmatpush2.bf16.msra.mxu0 0
    %1222 = vmatprep.subr.bf16.mxu0 0
    %1223 = vmatpush2.bf16.msra.mxu0 0
    %1224 = vmatprep.subr.bf16.mxu0 0
    %1225 = vmatpush2.bf16.msra.mxu0 0
    %1226 = vmatprep.subr.bf16.mxu0 0
    %1227 = vmatpush2.bf16.msra.mxu0 0
    %1228 = vmatprep.subr.bf16.mxu0 0
    %1229 = vmatpush2.bf16.msra.mxu0 0
    %1230 = vmatprep.subr.bf16.mxu0 0
    %1231 = vmatpush2.bf16.msra.mxu0 0
    %1232 = vmatprep.mubr.bf16.mxu0 0
    %1233 = vmatmul.mubr.bf16.gmra.mxu0 %v1128
    %v1234 = vpop.f32.mrf.mxu0
    %v1235 = vadd.f32 %v1150, %v1234
    %v1236 = vpop.f32.mrf.mxu0
    %v1237 = vpop.f32.mrf.mxu0
    %v1238 = vpop.f32.mrf.mxu0
    %1239 = vdwg.mxu0
    %v1240 = vpack.c.bf16 %v1235, %v1235
    %v1241 = vld [vmem:[#allocation18] sm:$0xf]
    %v1242 = vld [vmem:[#allocation18 + $0x4] sm:$0xf]
    %v1243 = vld [vmem:[#allocation18 + $0x8] sm:$0xf]
    %v1244 = vld [vmem:[#allocation18 + $0xc] sm:$0xf]
    %v1245 = vld [vmem:[#allocation18 + $0x10] sm:$0xf]
    %v1246 = vld [vmem:[#allocation18 + $0x14] sm:$0xf]
    %v1247 = vld [vmem:[#allocation18 + $0x18] sm:$0xf]
    %v1248 = vld [vmem:[#allocation18 + $0x1c] sm:$0xf]
    %v1249 = vld [vmem:[#allocation18 + $0x20] sm:$0xf]
    %v1250 = vld [vmem:[#allocation18 + $0x24] sm:$0xf]
    %v1251 = vld [vmem:[#allocation18 + $0x28] sm:$0xf]
    %v1252 = vld [vmem:[#allocation18 + $0x2c] sm:$0xf]
    %v1253 = vld [vmem:[#allocation18 + $0x30] sm:$0xf]
    %v1254 = vld [vmem:[#allocation18 + $0x34] sm:$0xf]
    %v1255 = vld [vmem:[#allocation18 + $0x38] sm:$0xf]
    %v1256 = vld [vmem:[#allocation18 + $0x3c] sm:$0xf]
    %v1257 = vld [vmem:[#allocation19] sm:$0x1]
    %v1259 = vlaneseq
    %v1260 = vshrl.u32 %v1259, 7
    %v1261 = vsub.s32 0, %v1260
    %v1262 = vrot.slane %v1257, %v1261
    %v1280 = vunpack.c.l.b16 %v1241
    %v1281 = vunpack.c.l.b16 %v1242
    %v1282 = vunpack.c.l.b16 %v1243
    %v1283 = vunpack.c.l.b16 %v1244
    %v1284 = vunpack.c.l.b16 %v1245
    %v1285 = vunpack.c.l.b16 %v1246
    %v1286 = vunpack.c.l.b16 %v1247
    %v1287 = vunpack.c.l.b16 %v1248
    %v1288 = vunpack.c.l.b16 %v1249
    %v1289 = vunpack.c.l.b16 %v1250
    %v1290 = vunpack.c.l.b16 %v1251
    %v1291 = vunpack.c.l.b16 %v1252
    %v1292 = vunpack.c.l.b16 %v1253
    %v1293 = vunpack.c.l.b16 %v1254
    %v1294 = vunpack.c.l.b16 %v1255
    %v1295 = vunpack.c.l.b16 %v1256
    %v1296 = vpack.c.b16 %v1281, %v1280
    %v1297 = vpack.c.b16 %v1283, %v1282
    %v1298 = vpack.c.b16 %v1285, %v1284
    %v1299 = vpack.c.b16 %v1287, %v1286
    %v1300 = vpack.c.b16 %v1289, %v1288
    %v1301 = vpack.c.b16 %v1291, %v1290
    %v1302 = vpack.c.b16 %v1293, %v1292
    %v1303 = vpack.c.b16 %v1295, %v1294
    %1312 = vmatprep.subr.bf16.mxu0 0
    %1313 = vmatpush1.bf16.msra.mxu0 %v1303
    %1314 = vmatprep.subr.bf16.mxu0 0
    %1315 = vmatpush1.bf16.msra.mxu0 %v1302
    %1316 = vmatprep.subr.bf16.mxu0 0
    %1317 = vmatpush1.bf16.msra.mxu0 %v1301
    %1318 = vmatprep.subr.bf16.mxu0 0
    %1319 = vmatpush1.bf16.msra.mxu0 %v1300
    %1320 = vmatprep.subr.bf16.mxu0 0
    %1321 = vmatpush1.bf16.msra.mxu0 %v1299
    %1322 = vmatprep.subr.bf16.mxu0 0
    %1323 = vmatpush1.bf16.msra.mxu0 %v1298
    %1324 = vmatprep.subr.bf16.mxu0 0
    %1325 = vmatpush1.bf16.msra.mxu0 %v1297
    %1326 = vmatprep.subr.bf16.mxu0 0
    %1327 = vmatpush1.bf16.msra.mxu0 %v1296
    %1328 = vmatprep.subr.bf16.mxu0 0
    %1329 = vmatpush2.bf16.msra.mxu0 0
    %1330 = vmatprep.subr.bf16.mxu0 0
    %1331 = vmatpush2.bf16.msra.mxu0 0
    %1332 = vmatprep.subr.bf16.mxu0 0
    %1333 = vmatpush2.bf16.msra.mxu0 0
    %1334 = vmatprep.subr.bf16.mxu0 0
    %1335 = vmatpush2.bf16.msra.mxu0 0
    %1336 = vmatprep.subr.bf16.mxu0 0
    %1337 = vmatpush2.bf16.msra.mxu0 0
    %1338 = vmatprep.subr.bf16.mxu0 0
    %1339 = vmatpush2.bf16.msra.mxu0 0
    %1340 = vmatprep.subr.bf16.mxu0 0
    %1341 = vmatpush2.bf16.msra.mxu0 0
    %1342 = vmatprep.subr.bf16.mxu0 0
    %1343 = vmatpush2.bf16.msra.mxu0 0
    %1344 = vmatprep.mubr.bf16.mxu0 0
    %1345 = vmatmul.mubr.bf16.gmra.mxu0 %v1240
    %v1346 = vpop.f32.mrf.mxu0
    %v1347 = vadd.f32 %v1262, %v1346
    %v1348 = vpop.f32.mrf.mxu0
    %v1349 = vpop.f32.mrf.mxu0
    %v1350 = vpop.f32.mrf.mxu0
    %1351 = vdwg.mxu0
    %v1352 = vtanh.pop %v1347
    %v1353 = vpack.c.bf16 %v1352, %v1352
    %v1354 = vld [vmem:[#allocation21] sm:$0xff]
    %v1355 = vld [vmem:[#allocation21 + $0x8] sm:$0xff]
    %v1356 = vld [vmem:[#allocation21 + $0x10] sm:$0xff]
    %v1357 = vld [vmem:[#allocation21 + $0x18] sm:$0xff]
    %v1358 = vld [vmem:[#allocation21 + $0x20] sm:$0xff]
    %v1359 = vld [vmem:[#allocation21 + $0x28] sm:$0xff]
    %v1360 = vld [vmem:[#allocation21 + $0x30] sm:$0xff]
    %v1361 = vld [vmem:[#allocation21 + $0x38] sm:$0xff]
    %v1362 = vld [vmem:[#allocation21 + $0x40] sm:$0xff]
    %v1363 = vld [vmem:[#allocation21 + $0x48] sm:$0xff]
    %v1364 = vld [vmem:[#allocation21 + $0x50] sm:$0xff]
    %v1365 = vld [vmem:[#allocation21 + $0x58] sm:$0xff]
    %v1366 = vld [vmem:[#allocation21 + $0x60] sm:$0xff]
    %v1367 = vld [vmem:[#allocation21 + $0x68] sm:$0xff]
    %v1368 = vld [vmem:[#allocation21 + $0x70] sm:$0xff]
    %v1369 = vld [vmem:[#allocation21 + $0x78] sm:$0xff]
    %v1370 = vld [vmem:[#allocation22] sm:$0x3]
    %v1372 = vlaneseq
    %v1373 = vshrl.u32 %v1372, 7
    %v1374 = vsub.s32 0, %v1373
    %v1375 = vrot.slane %v1370, %v1374
    %v1376 = vlaneseq
    %v1377 = vshrl.u32 %v1376, 7
    %v1378 = vsub.s32 1, %v1377
    %v1379 = vrot.slane %v1370, %v1378
    %v1398 = vunpack.c.l.b16 %v1354
    %v1399 = vunpack.c.h.b16 %v1354
    %v1400 = vunpack.c.l.b16 %v1355
    %v1401 = vunpack.c.h.b16 %v1355
    %v1402 = vunpack.c.l.b16 %v1356
    %v1403 = vunpack.c.h.b16 %v1356
    %v1404 = vunpack.c.l.b16 %v1357
    %v1405 = vunpack.c.h.b16 %v1357
    %v1406 = vunpack.c.l.b16 %v1358
    %v1407 = vunpack.c.h.b16 %v1358
    %v1408 = vunpack.c.l.b16 %v1359
    %v1409 = vunpack.c.h.b16 %v1359
    %v1410 = vunpack.c.l.b16 %v1360
    %v1411 = vunpack.c.h.b16 %v1360
    %v1412 = vunpack.c.l.b16 %v1361
    %v1413 = vunpack.c.h.b16 %v1361
    %v1414 = vunpack.c.l.b16 %v1362
    %v1415 = vunpack.c.h.b16 %v1362
    %v1416 = vunpack.c.l.b16 %v1363
    %v1417 = vunpack.c.h.b16 %v1363
    %v1418 = vunpack.c.l.b16 %v1364
    %v1419 = vunpack.c.h.b16 %v1364
    %v1420 = vunpack.c.l.b16 %v1365
    %v1421 = vunpack.c.h.b16 %v1365
    %v1422 = vunpack.c.l.b16 %v1366
    %v1423 = vunpack.c.h.b16 %v1366
    %v1424 = vunpack.c.l.b16 %v1367
    %v1425 = vunpack.c.h.b16 %v1367
    %v1426 = vunpack.c.l.b16 %v1368
    %v1427 = vunpack.c.h.b16 %v1368
    %v1428 = vunpack.c.l.b16 %v1369
    %v1429 = vunpack.c.h.b16 %v1369
    %v1430 = vpack.c.b16 %v1400, %v1398
    %v1431 = vpack.c.b16 %v1401, %v1399
    %v1432 = vpack.c.b16 %v1404, %v1402
    %v1433 = vpack.c.b16 %v1405, %v1403
    %v1434 = vpack.c.b16 %v1408, %v1406
    %v1435 = vpack.c.b16 %v1409, %v1407
    %v1436 = vpack.c.b16 %v1412, %v1410
    %v1437 = vpack.c.b16 %v1413, %v1411
    %v1438 = vpack.c.b16 %v1416, %v1414
    %v1439 = vpack.c.b16 %v1417, %v1415
    %v1440 = vpack.c.b16 %v1420, %v1418
    %v1441 = vpack.c.b16 %v1421, %v1419
    %v1442 = vpack.c.b16 %v1424, %v1422
    %v1443 = vpack.c.b16 %v1425, %v1423
    %v1444 = vpack.c.b16 %v1428, %v1426
    %v1445 = vpack.c.b16 %v1429, %v1427
    %1462 = vmatprep.subr.bf16.mxu0 %v1445
    %1463 = vmatpush1.bf16.msra.mxu0 %v1444
    %1464 = vmatprep.subr.bf16.mxu0 %v1443
    %1465 = vmatpush1.bf16.msra.mxu0 %v1442
    %1466 = vmatprep.subr.bf16.mxu0 %v1441
    %1467 = vmatpush1.bf16.msra.mxu0 %v1440
    %1468 = vmatprep.subr.bf16.mxu0 %v1439
    %1469 = vmatpush1.bf16.msra.mxu0 %v1438
    %1470 = vmatprep.subr.bf16.mxu0 %v1437
    %1471 = vmatpush1.bf16.msra.mxu0 %v1436
    %1472 = vmatprep.subr.bf16.mxu0 %v1435
    %1473 = vmatpush1.bf16.msra.mxu0 %v1434
    %1474 = vmatprep.subr.bf16.mxu0 %v1433
    %1475 = vmatpush1.bf16.msra.mxu0 %v1432
    %1476 = vmatprep.subr.bf16.mxu0 %v1431
    %1477 = vmatpush1.bf16.msra.mxu0 %v1430
    %1478 = vmatprep.subr.bf16.mxu0 0
    %1479 = vmatpush2.bf16.msra.mxu0 0
    %1480 = vmatprep.subr.bf16.mxu0 0
    %1481 = vmatpush2.bf16.msra.mxu0 0
    %1482 = vmatprep.subr.bf16.mxu0 0
    %1483 = vmatpush2.bf16.msra.mxu0 0
    %1484 = vmatprep.subr.bf16.mxu0 0
    %1485 = vmatpush2.bf16.msra.mxu0 0
    %1486 = vmatprep.subr.bf16.mxu0 0
    %1487 = vmatpush2.bf16.msra.mxu0 0
    %1488 = vmatprep.subr.bf16.mxu0 0
    %1489 = vmatpush2.bf16.msra.mxu0 0
    %1490 = vmatprep.subr.bf16.mxu0 0
    %1491 = vmatpush2.bf16.msra.mxu0 0
    %1492 = vmatprep.subr.bf16.mxu0 0
    %1493 = vmatpush2.bf16.msra.mxu0 0
    %1494 = vmatprep.mubr.bf16.mxu0 0
    %1495 = vmatmul.mubr.bf16.gmra.mxu0 %v1353
    %v1496 = vpop.f32.mrf.mxu0
    %v1497 = vadd.f32 %v1375, %v1496
    %v1498 = vpop.f32.mrf.mxu0
    %v1499 = vadd.f32 %v1379, %v1498
    %v1500 = vpop.f32.mrf.mxu0
    %v1501 = vpop.f32.mrf.mxu0
    %1502 = vdwg.mxu0
    %v1505 = vcombine.low %v1497, %v1499
    %v1506 = vcombine.high %v1497, %v1499
    %v1510 = vunpack.c.l.s4 1935823168
    %v1511 = vunpack.c.0.s8 %v1510
    %v1512 = vlaneseq
    %v1513 = vshrl.u32 %v1512, 7
    %v1514 = vsub.s32 %v1511, %v1513
    %v1515 = vrot.slane %v1505, %v1514
    %v1517 = vunpack.c.l.s4 1935823168
    %v1518 = vunpack.c.0.s8 %v1517
    %v1519 = vlaneseq
    %v1520 = vshrl.u32 %v1519, 7
    %v1521 = vsub.s32 %v1518, %v1520
    %v1522 = vrot.slane %v1506, %v1521
    %v1523 = vunpack.c.l.bf16 %v929
    %v1524 = vunpack.c.h.bf16 %v929
    %v1525 = vadd.f32 %v1515, %v1523
    %v1526 = vadd.f32 %v1522, %v1524
    %v1527 = vpack.c.bf16 %v1526, %v1525
    %v1528 = vld [vmem:[#allocation24] sm:$0xf]
    %v1529 = vld [vmem:[#allocation24 + $0x4] sm:$0xf]
    %v1530 = vld [vmem:[#allocation24 + $0x8] sm:$0xf]
    %v1531 = vld [vmem:[#allocation24 + $0xc] sm:$0xf]
    %v1532 = vld [vmem:[#allocation24 + $0x10] sm:$0xf]
    %v1533 = vld [vmem:[#allocation24 + $0x14] sm:$0xf]
    %v1534 = vld [vmem:[#allocation24 + $0x18] sm:$0xf]
    %v1535 = vld [vmem:[#allocation24 + $0x1c] sm:$0xf]
    %v1536 = vld [vmem:[#allocation24 + $0x20] sm:$0xf]
    %v1537 = vld [vmem:[#allocation24 + $0x24] sm:$0xf]
    %v1538 = vld [vmem:[#allocation24 + $0x28] sm:$0xf]
    %v1539 = vld [vmem:[#allocation24 + $0x2c] sm:$0xf]
    %v1540 = vld [vmem:[#allocation24 + $0x30] sm:$0xf]
    %v1541 = vld [vmem:[#allocation24 + $0x34] sm:$0xf]
    %v1542 = vld [vmem:[#allocation24 + $0x38] sm:$0xf]
    %v1543 = vld [vmem:[#allocation24 + $0x3c] sm:$0xf]
    %v1544 = vld [vmem:[#allocation25] sm:$0x1]
    %v1546 = vlaneseq
    %v1547 = vshrl.u32 %v1546, 7
    %v1548 = vsub.s32 0, %v1547
    %v1549 = vrot.slane %v1544, %v1548
    %v1567 = vunpack.c.l.b16 %v1528
    %v1568 = vunpack.c.l.b16 %v1529
    %v1569 = vunpack.c.l.b16 %v1530
    %v1570 = vunpack.c.l.b16 %v1531
    %v1571 = vunpack.c.l.b16 %v1532
    %v1572 = vunpack.c.l.b16 %v1533
    %v1573 = vunpack.c.l.b16 %v1534
    %v1574 = vunpack.c.l.b16 %v1535
    %v1575 = vunpack.c.l.b16 %v1536
    %v1576 = vunpack.c.l.b16 %v1537
    %v1577 = vunpack.c.l.b16 %v1538
    %v1578 = vunpack.c.l.b16 %v1539
    %v1579 = vunpack.c.l.b16 %v1540
    %v1580 = vunpack.c.l.b16 %v1541
    %v1581 = vunpack.c.l.b16 %v1542
    %v1582 = vunpack.c.l.b16 %v1543
    %v1583 = vpack.c.b16 %v1568, %v1567
    %v1584 = vpack.c.b16 %v1570, %v1569
    %v1585 = vpack.c.b16 %v1572, %v1571
    %v1586 = vpack.c.b16 %v1574, %v1573
    %v1587 = vpack.c.b16 %v1576, %v1575
    %v1588 = vpack.c.b16 %v1578, %v1577
    %v1589 = vpack.c.b16 %v1580, %v1579
    %v1590 = vpack.c.b16 %v1582, %v1581
    %1599 = vmatprep.subr.bf16.mxu0 0
    %1600 = vmatpush1.bf16.msra.mxu0 %v1590
    %1601 = vmatprep.subr.bf16.mxu0 0
    %1602 = vmatpush1.bf16.msra.mxu0 %v1589
    %1603 = vmatprep.subr.bf16.mxu0 0
    %1604 = vmatpush1.bf16.msra.mxu0 %v1588
    %1605 = vmatprep.subr.bf16.mxu0 0
    %1606 = vmatpush1.bf16.msra.mxu0 %v1587
    %1607 = vmatprep.subr.bf16.mxu0 0
    %1608 = vmatpush1.bf16.msra.mxu0 %v1586
    %1609 = vmatprep.subr.bf16.mxu0 0
    %1610 = vmatpush1.bf16.msra.mxu0 %v1585
    %1611 = vmatprep.subr.bf16.mxu0 0
    %1612 = vmatpush1.bf16.msra.mxu0 %v1584
    %1613 = vmatprep.subr.bf16.mxu0 0
    %1614 = vmatpush1.bf16.msra.mxu0 %v1583
    %1615 = vmatprep.subr.bf16.mxu0 0
    %1616 = vmatpush2.bf16.msra.mxu0 0
    %1617 = vmatprep.subr.bf16.mxu0 0
    %1618 = vmatpush2.bf16.msra.mxu0 0
    %1619 = vmatprep.subr.bf16.mxu0 0
    %1620 = vmatpush2.bf16.msra.mxu0 0
    %1621 = vmatprep.subr.bf16.mxu0 0
    %1622 = vmatpush2.bf16.msra.mxu0 0
    %1623 = vmatprep.subr.bf16.mxu0 0
    %1624 = vmatpush2.bf16.msra.mxu0 0
    %1625 = vmatprep.subr.bf16.mxu0 0
    %1626 = vmatpush2.bf16.msra.mxu0 0
    %1627 = vmatprep.subr.bf16.mxu0 0
    %1628 = vmatpush2.bf16.msra.mxu0 0
    %1629 = vmatprep.subr.bf16.mxu0 0
    %1630 = vmatpush2.bf16.msra.mxu0 0
    %1631 = vmatprep.mubr.bf16.mxu0 0
    %1632 = vmatmul.mubr.bf16.gmra.mxu0 %v1527
    %v1633 = vpop.f32.mrf.mxu0
    %v1634 = vadd.f32 %v1549, %v1633
    %v1635 = vpop.f32.mrf.mxu0
    %v1636 = vpop.f32.mrf.mxu0
    %v1637 = vadd.f32 %v1549, %v1636
    %v1638 = vpop.f32.mrf.mxu0
    %1639 = vdwg.mxu0
    %v1640 = vtanh.pop %v1634
    %v1641 = vtanh.pop %v1637
    %v1642 = vpack.c.bf16 %v1641, %v1640
    %v1643 = vld [vmem:[#allocation27] sm:$0xff]
    %v1644 = vld [vmem:[#allocation27 + $0x8] sm:$0xff]
    %v1645 = vld [vmem:[#allocation27 + $0x10] sm:$0xff]
    %v1646 = vld [vmem:[#allocation27 + $0x18] sm:$0xff]
    %v1647 = vld [vmem:[#allocation27 + $0x20] sm:$0xff]
    %v1648 = vld [vmem:[#allocation27 + $0x28] sm:$0xff]
    %v1649 = vld [vmem:[#allocation27 + $0x30] sm:$0xff]
    %v1650 = vld [vmem:[#allocation27 + $0x38] sm:$0xff]
    %v1651 = vld [vmem:[#allocation27 + $0x40] sm:$0xff]
    %v1652 = vld [vmem:[#allocation27 + $0x48] sm:$0xff]
    %v1653 = vld [vmem:[#allocation27 + $0x50] sm:$0xff]
    %v1654 = vld [vmem:[#allocation27 + $0x58] sm:$0xff]
    %v1655 = vld [vmem:[#allocation27 + $0x60] sm:$0xff]
    %v1656 = vld [vmem:[#allocation27 + $0x68] sm:$0xff]
    %v1657 = vld [vmem:[#allocation27 + $0x70] sm:$0xff]
    %v1658 = vld [vmem:[#allocation27 + $0x78] sm:$0xff]
    %v1659 = vld [vmem:[#allocation28] sm:$0x3]
    %v1661 = vlaneseq
    %v1662 = vshrl.u32 %v1661, 7
    %v1663 = vsub.s32 0, %v1662
    %v1664 = vrot.slane %v1659, %v1663
    %v1665 = vlaneseq
    %v1666 = vshrl.u32 %v1665, 7
    %v1667 = vsub.s32 1, %v1666
    %v1668 = vrot.slane %v1659, %v1667
    %v1687 = vunpack.c.l.b16 %v1643
    %v1688 = vunpack.c.h.b16 %v1643
    %v1689 = vunpack.c.l.b16 %v1644
    %v1690 = vunpack.c.h.b16 %v1644
    %v1691 = vunpack.c.l.b16 %v1645
    %v1692 = vunpack.c.h.b16 %v1645
    %v1693 = vunpack.c.l.b16 %v1646
    %v1694 = vunpack.c.h.b16 %v1646
    %v1695 = vunpack.c.l.b16 %v1647
    %v1696 = vunpack.c.h.b16 %v1647
    %v1697 = vunpack.c.l.b16 %v1648
    %v1698 = vunpack.c.h.b16 %v1648
    %v1699 = vunpack.c.l.b16 %v1649
    %v1700 = vunpack.c.h.b16 %v1649
    %v1701 = vunpack.c.l.b16 %v1650
    %v1702 = vunpack.c.h.b16 %v1650
    %v1703 = vunpack.c.l.b16 %v1651
    %v1704 = vunpack.c.h.b16 %v1651
    %v1705 = vunpack.c.l.b16 %v1652
    %v1706 = vunpack.c.h.b16 %v1652
    %v1707 = vunpack.c.l.b16 %v1653
    %v1708 = vunpack.c.h.b16 %v1653
    %v1709 = vunpack.c.l.b16 %v1654
    %v1710 = vunpack.c.h.b16 %v1654
    %v1711 = vunpack.c.l.b16 %v1655
    %v1712 = vunpack.c.h.b16 %v1655
    %v1713 = vunpack.c.l.b16 %v1656
    %v1714 = vunpack.c.h.b16 %v1656
    %v1715 = vunpack.c.l.b16 %v1657
    %v1716 = vunpack.c.h.b16 %v1657
    %v1717 = vunpack.c.l.b16 %v1658
    %v1718 = vunpack.c.h.b16 %v1658
    %v1719 = vpack.c.b16 %v1689, %v1687
    %v1720 = vpack.c.b16 %v1690, %v1688
    %v1721 = vpack.c.b16 %v1693, %v1691
    %v1722 = vpack.c.b16 %v1694, %v1692
    %v1723 = vpack.c.b16 %v1697, %v1695
    %v1724 = vpack.c.b16 %v1698, %v1696
    %v1725 = vpack.c.b16 %v1701, %v1699
    %v1726 = vpack.c.b16 %v1702, %v1700
    %v1727 = vpack.c.b16 %v1705, %v1703
    %v1728 = vpack.c.b16 %v1706, %v1704
    %v1729 = vpack.c.b16 %v1709, %v1707
    %v1730 = vpack.c.b16 %v1710, %v1708
    %v1731 = vpack.c.b16 %v1713, %v1711
    %v1732 = vpack.c.b16 %v1714, %v1712
    %v1733 = vpack.c.b16 %v1717, %v1715
    %v1734 = vpack.c.b16 %v1718, %v1716
    %1751 = vmatprep.subr.bf16.mxu0 %v1734
    %1752 = vmatpush1.bf16.msra.mxu0 %v1733
    %1753 = vmatprep.subr.bf16.mxu0 %v1732
    %1754 = vmatpush1.bf16.msra.mxu0 %v1731
    %1755 = vmatprep.subr.bf16.mxu0 %v1730
    %1756 = vmatpush1.bf16.msra.mxu0 %v1729
    %1757 = vmatprep.subr.bf16.mxu0 %v1728
    %1758 = vmatpush1.bf16.msra.mxu0 %v1727
    %1759 = vmatprep.subr.bf16.mxu0 %v1726
    %1760 = vmatpush1.bf16.msra.mxu0 %v1725
    %1761 = vmatprep.subr.bf16.mxu0 %v1724
    %1762 = vmatpush1.bf16.msra.mxu0 %v1723
    %1763 = vmatprep.subr.bf16.mxu0 %v1722
    %1764 = vmatpush1.bf16.msra.mxu0 %v1721
    %1765 = vmatprep.subr.bf16.mxu0 %v1720
    %1766 = vmatpush1.bf16.msra.mxu0 %v1719
    %1767 = vmatprep.subr.bf16.mxu0 0
    %1768 = vmatpush2.bf16.msra.mxu0 0
    %1769 = vmatprep.subr.bf16.mxu0 0
    %1770 = vmatpush2.bf16.msra.mxu0 0
    %1771 = vmatprep.subr.bf16.mxu0 0
    %1772 = vmatpush2.bf16.msra.mxu0 0
    %1773 = vmatprep.subr.bf16.mxu0 0
    %1774 = vmatpush2.bf16.msra.mxu0 0
    %1775 = vmatprep.subr.bf16.mxu0 0
    %1776 = vmatpush2.bf16.msra.mxu0 0
    %1777 = vmatprep.subr.bf16.mxu0 0
    %1778 = vmatpush2.bf16.msra.mxu0 0
    %1779 = vmatprep.subr.bf16.mxu0 0
    %1780 = vmatpush2.bf16.msra.mxu0 0
    %1781 = vmatprep.subr.bf16.mxu0 0
    %1782 = vmatpush2.bf16.msra.mxu0 0
    %1783 = vmatprep.mubr.bf16.mxu0 0
    %1784 = vmatmul.mubr.bf16.gmra.mxu0 %v1642
    %v1785 = vpop.f32.mrf.mxu0
    %v1786 = vadd.f32 %v1664, %v1785
    %v1787 = vpop.f32.mrf.mxu0
    %v1788 = vadd.f32 %v1668, %v1787
    %v1789 = vpop.f32.mrf.mxu0
    %v1790 = vadd.f32 %v1664, %v1789
    %v1791 = vpop.f32.mrf.mxu0
    %v1792 = vadd.f32 %v1668, %v1791
    %1793 = vdwg.mxu0
    %v1798 = vcombine.low %v1786, %v1788
    %v1799 = vcombine.high %v1786, %v1788
    %v1800 = vcombine.low %v1790, %v1792
    %v1801 = vcombine.high %v1790, %v1792
    %v1807 = vunpack.c.l.s4 1935823168
    %v1808 = vunpack.c.0.s8 %v1807
    %v1809 = vlaneseq
    %v1810 = vshrl.u32 %v1809, 7
    %v1811 = vsub.s32 %v1808, %v1810
    %v1812 = vrot.slane %v1798, %v1811
    %v1814 = vunpack.c.l.s4 1935823168
    %v1815 = vunpack.c.0.s8 %v1814
    %v1816 = vlaneseq
    %v1817 = vshrl.u32 %v1816, 7
    %v1818 = vsub.s32 %v1815, %v1817
    %v1819 = vrot.slane %v1799, %v1818
    %v1821 = vunpack.c.l.s4 1935823168
    %v1822 = vunpack.c.0.s8 %v1821
    %v1823 = vlaneseq
    %v1824 = vshrl.u32 %v1823, 7
    %v1825 = vsub.s32 %v1822, %v1824
    %v1826 = vrot.slane %v1800, %v1825
    %v1828 = vunpack.c.l.s4 1935823168
    %v1829 = vunpack.c.0.s8 %v1828
    %v1830 = vlaneseq
    %v1831 = vshrl.u32 %v1830, 7
    %v1832 = vsub.s32 %v1829, %v1831
    %v1833 = vrot.slane %v1801, %v1832
    %v1834 = vunpack.c.l.bf16 %v594
    %v1835 = vunpack.c.h.bf16 %v594
    %v1836 = vunpack.c.l.bf16 %v595
    %v1837 = vunpack.c.h.bf16 %v595
    %v1838 = vadd.f32 %v1812, %v1834
    %v1839 = vadd.f32 %v1819, %v1835
    %v1840 = vadd.f32 %v1826, %v1836
    %v1841 = vadd.f32 %v1833, %v1837
    %v1842 = vpack.c.bf16 %v1839, %v1838
    %v1843 = vpack.c.bf16 %v1841, %v1840
    %v1844 = vld [vmem:[#allocation30] sm:$0xf]
    %v1845 = vld [vmem:[#allocation30 + $0x4] sm:$0xf]
    %v1846 = vld [vmem:[#allocation30 + $0x8] sm:$0xf]
    %v1847 = vld [vmem:[#allocation30 + $0xc] sm:$0xf]
    %v1848 = vld [vmem:[#allocation30 + $0x10] sm:$0xf]
    %v1849 = vld [vmem:[#allocation30 + $0x14] sm:$0xf]
    %v1850 = vld [vmem:[#allocation30 + $0x18] sm:$0xf]
    %v1851 = vld [vmem:[#allocation30 + $0x1c] sm:$0xf]
    %v1852 = vld [vmem:[#allocation30 + $0x20] sm:$0xf]
    %v1853 = vld [vmem:[#allocation30 + $0x24] sm:$0xf]
    %v1854 = vld [vmem:[#allocation30 + $0x28] sm:$0xf]
    %v1855 = vld [vmem:[#allocation30 + $0x2c] sm:$0xf]
    %v1856 = vld [vmem:[#allocation30 + $0x30] sm:$0xf]
    %v1857 = vld [vmem:[#allocation30 + $0x34] sm:$0xf]
    %v1858 = vld [vmem:[#allocation30 + $0x38] sm:$0xf]
    %v1859 = vld [vmem:[#allocation30 + $0x3c] sm:$0xf]
    %v1860 = vld [vmem:[#allocation31] sm:$0x1]
    %v1862 = vlaneseq
    %v1863 = vshrl.u32 %v1862, 7
    %v1864 = vsub.s32 0, %v1863
    %v1865 = vrot.slane %v1860, %v1864
    %v1883 = vunpack.c.l.b16 %v1844
    %v1884 = vunpack.c.l.b16 %v1845
    %v1885 = vunpack.c.l.b16 %v1846
    %v1886 = vunpack.c.l.b16 %v1847
    %v1887 = vunpack.c.l.b16 %v1848
    %v1888 = vunpack.c.l.b16 %v1849
    %v1889 = vunpack.c.l.b16 %v1850
    %v1890 = vunpack.c.l.b16 %v1851
    %v1891 = vunpack.c.l.b16 %v1852
    %v1892 = vunpack.c.l.b16 %v1853
    %v1893 = vunpack.c.l.b16 %v1854
    %v1894 = vunpack.c.l.b16 %v1855
    %v1895 = vunpack.c.l.b16 %v1856
    %v1896 = vunpack.c.l.b16 %v1857
    %v1897 = vunpack.c.l.b16 %v1858
    %v1898 = vunpack.c.l.b16 %v1859
    %v1899 = vpack.c.b16 %v1884, %v1883
    %v1900 = vpack.c.b16 %v1886, %v1885
    %v1901 = vpack.c.b16 %v1888, %v1887
    %v1902 = vpack.c.b16 %v1890, %v1889
    %v1903 = vpack.c.b16 %v1892, %v1891
    %v1904 = vpack.c.b16 %v1894, %v1893
    %v1905 = vpack.c.b16 %v1896, %v1895
    %v1906 = vpack.c.b16 %v1898, %v1897
    %1915 = vmatprep.subr.bf16.mxu0 0
    %1916 = vmatpush1.bf16.msra.mxu0 %v1906
    %1917 = vmatprep.subr.bf16.mxu0 0
    %1918 = vmatpush1.bf16.msra.mxu0 %v1905
    %1919 = vmatprep.subr.bf16.mxu0 0
    %1920 = vmatpush1.bf16.msra.mxu0 %v1904
    %1921 = vmatprep.subr.bf16.mxu0 0
    %1922 = vmatpush1.bf16.msra.mxu0 %v1903
    %1923 = vmatprep.subr.bf16.mxu0 0
    %1924 = vmatpush1.bf16.msra.mxu0 %v1902
    %1925 = vmatprep.subr.bf16.mxu0 0
    %1926 = vmatpush1.bf16.msra.mxu0 %v1901
    %1927 = vmatprep.subr.bf16.mxu0 0
    %1928 = vmatpush1.bf16.msra.mxu0 %v1900
    %1929 = vmatprep.subr.bf16.mxu0 0
    %1930 = vmatpush1.bf16.msra.mxu0 %v1899
    %1931 = vmatprep.subr.bf16.mxu0 0
    %1932 = vmatpush2.bf16.msra.mxu0 0
    %1933 = vmatprep.subr.bf16.mxu0 0
    %1934 = vmatpush2.bf16.msra.mxu0 0
    %1935 = vmatprep.subr.bf16.mxu0 0
    %1936 = vmatpush2.bf16.msra.mxu0 0
    %1937 = vmatprep.subr.bf16.mxu0 0
    %1938 = vmatpush2.bf16.msra.mxu0 0
    %1939 = vmatprep.subr.bf16.mxu0 0
    %1940 = vmatpush2.bf16.msra.mxu0 0
    %1941 = vmatprep.subr.bf16.mxu0 0
    %1942 = vmatpush2.bf16.msra.mxu0 0
    %1943 = vmatprep.subr.bf16.mxu0 0
    %1944 = vmatpush2.bf16.msra.mxu0 0
    %1945 = vmatprep.subr.bf16.mxu0 0
    %1946 = vmatpush2.bf16.msra.mxu0 0
    %1947 = vmatprep.mubr.bf16.mxu0 0
    %1948 = vmatmul.mubr.bf16.gmra.mxu0 %v1842
    %v1949 = vpop.f32.mrf.mxu0
    %v1950 = vadd.f32 %v1865, %v1949
    %v1951 = vpop.f32.mrf.mxu0
    %v1952 = vpop.f32.mrf.mxu0
    %v1953 = vadd.f32 %v1865, %v1952
    %v1954 = vpop.f32.mrf.mxu0
    %1955 = vmatprep.mubr.bf16.mxu0 0
    %1956 = vmatmul.mubr.bf16.gmra.mxu0 %v1843
    %v1957 = vpop.f32.mrf.mxu0
    %v1958 = vadd.f32 %v1865, %v1957
    %v1959 = vpop.f32.mrf.mxu0
    %v1960 = vpop.f32.mrf.mxu0
    %v1961 = vadd.f32 %v1865, %v1960
    %v1962 = vpop.f32.mrf.mxu0
    %1963 = vdwg.mxu0
    %v1964 = vtanh.pop %v1950
    %v1965 = vtanh.pop %v1953
    %v1966 = vtanh.pop %v1958
    %v1967 = vtanh.pop %v1961
    %v1968 = vpack.c.bf16 %v1965, %v1964
    %v1969 = vpack.c.bf16 %v1967, %v1966
    %v1970 = vld [vmem:[%s23] sm:$0xf]
    %v1971 = vld [vmem:[%s23 + $0x4] sm:$0xf]
    %v1972 = vld [vmem:[%s23 + $0x8] sm:$0xf]
    %v1973 = vld [vmem:[%s23 + $0xc] sm:$0xf]
    %v1974 = vld [vmem:[%s23 + $0x10] sm:$0xf]
    %v1975 = vld [vmem:[%s23 + $0x14] sm:$0xf]
    %v1976 = vld [vmem:[%s23 + $0x18] sm:$0xf]
    %v1977 = vld [vmem:[%s23 + $0x1c] sm:$0xf]
    %v1978 = vld [vmem:[%s23 + $0x20] sm:$0xf]
    %v1979 = vld [vmem:[%s23 + $0x24] sm:$0xf]
    %v1980 = vld [vmem:[%s23 + $0x28] sm:$0xf]
    %v1981 = vld [vmem:[%s23 + $0x2c] sm:$0xf]
    %v1982 = vld [vmem:[%s23 + $0x30] sm:$0xf]
    %v1983 = vld [vmem:[%s23 + $0x34] sm:$0xf]
    %v1984 = vld [vmem:[%s23 + $0x38] sm:$0xf]
    %v1985 = vld [vmem:[%s23 + $0x3c] sm:$0xf]
    %v1986 = vld [vmem:[%s24] sm:$0x1]
    %v1988 = vlaneseq
    %v1989 = vshrl.u32 %v1988, 7
    %v1990 = vsub.s32 0, %v1989
    %v1991 = vrot.slane %v1986, %v1990
    %v2009 = vunpack.c.l.b16 %v1970
    %v2010 = vunpack.c.l.b16 %v1971
    %v2011 = vunpack.c.l.b16 %v1972
    %v2012 = vunpack.c.l.b16 %v1973
    %v2013 = vunpack.c.l.b16 %v1974
    %v2014 = vunpack.c.l.b16 %v1975
    %v2015 = vunpack.c.l.b16 %v1976
    %v2016 = vunpack.c.l.b16 %v1977
    %v2017 = vunpack.c.l.b16 %v1978
    %v2018 = vunpack.c.l.b16 %v1979
    %v2019 = vunpack.c.l.b16 %v1980
    %v2020 = vunpack.c.l.b16 %v1981
    %v2021 = vunpack.c.l.b16 %v1982
    %v2022 = vunpack.c.l.b16 %v1983
    %v2023 = vunpack.c.l.b16 %v1984
    %v2024 = vunpack.c.l.b16 %v1985
    %v2025 = vpack.c.b16 %v2010, %v2009
    %v2026 = vpack.c.b16 %v2012, %v2011
    %v2027 = vpack.c.b16 %v2014, %v2013
    %v2028 = vpack.c.b16 %v2016, %v2015
    %v2029 = vpack.c.b16 %v2018, %v2017
    %v2030 = vpack.c.b16 %v2020, %v2019
    %v2031 = vpack.c.b16 %v2022, %v2021
    %v2032 = vpack.c.b16 %v2024, %v2023
    %2041 = vmatprep.subr.bf16.mxu0 0
    %2042 = vmatpush1.bf16.msra.mxu0 %v2032
    %2043 = vmatprep.subr.bf16.mxu0 0
    %2044 = vmatpush1.bf16.msra.mxu0 %v2031
    %2045 = vmatprep.subr.bf16.mxu0 0
    %2046 = vmatpush1.bf16.msra.mxu0 %v2030
    %2047 = vmatprep.subr.bf16.mxu0 0
    %2048 = vmatpush1.bf16.msra.mxu0 %v2029
    %2049 = vmatprep.subr.bf16.mxu0 0
    %2050 = vmatpush1.bf16.msra.mxu0 %v2028
    %2051 = vmatprep.subr.bf16.mxu0 0
    %2052 = vmatpush1.bf16.msra.mxu0 %v2027
    %2053 = vmatprep.subr.bf16.mxu0 0
    %2054 = vmatpush1.bf16.msra.mxu0 %v2026
    %2055 = vmatprep.subr.bf16.mxu0 0
    %2056 = vmatpush1.bf16.msra.mxu0 %v2025
    %2057 = vmatprep.subr.bf16.mxu0 0
    %2058 = vmatpush2.bf16.msra.mxu0 0
    %2059 = vmatprep.subr.bf16.mxu0 0
    %2060 = vmatpush2.bf16.msra.mxu0 0
    %2061 = vmatprep.subr.bf16.mxu0 0
    %2062 = vmatpush2.bf16.msra.mxu0 0
    %2063 = vmatprep.subr.bf16.mxu0 0
    %2064 = vmatpush2.bf16.msra.mxu0 0
    %2065 = vmatprep.subr.bf16.mxu0 0
    %2066 = vmatpush2.bf16.msra.mxu0 0
    %2067 = vmatprep.subr.bf16.mxu0 0
    %2068 = vmatpush2.bf16.msra.mxu0 0
    %2069 = vmatprep.subr.bf16.mxu0 0
    %2070 = vmatpush2.bf16.msra.mxu0 0
    %2071 = vmatprep.subr.bf16.mxu0 0
    %2072 = vmatpush2.bf16.msra.mxu0 0
    %2073 = vmatprep.mubr.bf16.mxu0 0
    %2074 = vmatmul.mubr.bf16.gmra.mxu0 %v1968
    %v2075 = vpop.f32.mrf.mxu0
    %v2076 = vadd.f32 %v1991, %v2075
    %v2077 = vpop.f32.mrf.mxu0
    %v2078 = vpop.f32.mrf.mxu0
    %v2079 = vadd.f32 %v1991, %v2078
    %v2080 = vpop.f32.mrf.mxu0
    %2081 = vmatprep.mubr.bf16.mxu0 0
    %2082 = vmatmul.mubr.bf16.gmra.mxu0 %v1969
    %v2083 = vpop.f32.mrf.mxu0
    %v2084 = vadd.f32 %v1991, %v2083
    %v2085 = vpop.f32.mrf.mxu0
    %v2086 = vpop.f32.mrf.mxu0
    %v2087 = vadd.f32 %v1991, %v2086
    %v2088 = vpop.f32.mrf.mxu0
    %2089 = vdwg.mxu0
    %2090 = vst [vmem:[%s25] sm:$0xff] %v2076
    %2091 = vst [vmem:[%s25 + $0x8] sm:$0xff] %v2079
    %2092 = vst [vmem:[%s25 + $0x10] sm:$0xff] %v2084
    %2093 = vst [vmem:[%s25 + $0x18] sm:$0xff] %v2087
    // Predicated region
    $region182: #{run.1} parent=1 // pred_check
      _
    $region183: #{run.1} parent=1 // pred_check_branch
      %2095 = sbr.rel (0) target = $region185
    $region184: #{run.1} parent=1 // pred_region
      _
    $region185: #{run.1} parent=1 // pred_fallthru
      _
    // Predicated region
    $region186: #{run.1} parent=1 // pred_check
      _
    $region187: #{run.1} parent=1 // pred_check_branch
      %2097 = sbr.rel (0) target = $region189
    $region188: #{run.1} parent=1 // pred_region
      _
    $region189: #{run.1} parent=1 // pred_fallthru
      _
    %2098 = vsyncpa [#allocation3], 1
    %2099 = vsyncpa [#allocation5], 1
    %2100 = vsyncpa [#allocation8], 1
    %2101 = vsyncpa [#allocation11], 1
    %2102 = vsyncpa [#allocation14], 1
    %2103 = vsyncpa [#allocation17], 1
    %2104 = vsyncpa [#allocation20], 1
    %2105 = vsyncpa [#allocation23], 1
    %2106 = vsyncpa [#allocation26], 1
    %2107 = vsyncpa [#allocation29], 1
    %2108 = vsyncpa [#allocation32], 1

// kernel: run.1
$region0: #{run.1}
  #allocation0 [shape = 'u32[]', space=smem, size = 0x4, offset = 0x4, fixed_abs, tag = 'smem constant byte address 0x4 - core index']
  #allocation1 [shape = 'u32[144,128]{1,0:T(1,128)}', space=vmem, size = 0x12000, scoped, tag = 'internal scratch']
  %s0 = inlined_call_operand.vmem [shape: bf16[32,128], index: 0, kind: input, shape index: {}]
  %s1 = inlined_call_operand.vmem [shape: bf16[128,128], index: 1, kind: input, shape index: {}]
  %s2 = inlined_call_operand.vmem [shape: f32[1,128], index: 2, kind: input, shape index: {}]
  %s3 = inlined_call_operand.hbm [shape: bf16[128,128], index: 3, kind: input, shape index: {}]
  %s4 = inlined_call_operand.hbm [shape: f32[1,128], index: 4, kind: input, shape index: {}]
  %s5 = inlined_call_operand.hbm [shape: bf16[256,128], index: 5, kind: input, shape index: {}]
  %s6 = inlined_call_operand.hbm [shape: f32[1,128], index: 6, kind: input, shape index: {}]
  %s7 = inlined_call_operand.hbm [shape: bf16[128,128], index: 7, kind: input, shape index: {}]
  %s8 = inlined_call_operand.hbm [shape: f32[1,128], index: 8, kind: input, shape index: {}]
  %s9 = inlined_call_operand.hbm [shape: bf16[256,128], index: 9, kind: input, shape index: {}]
  %s10 = inlined_call_operand.hbm [shape: f32[1,128], index: 10, kind: input, shape index: {}]
  %s11 = inlined_call_operand.hbm [shape: bf16[128,128], index: 11, kind: input, shape index: {}]
  %s12 = inlined_call_operand.hbm [shape: f32[1,128], index: 12, kind: input, shape index: {}]
  %s13 = inlined_call_operand.hbm [shape: bf16[128,128], index: 13, kind: input, shape index: {}]
  %s14 = inlined_call_operand.hbm [shape: f32[1,128], index: 14, kind: input, shape index: {}]
  %s15 = inlined_call_operand.hbm [shape: bf16[128,256], index: 15, kind: input, shape index: {}]
  %s16 = inlined_call_operand.hbm [shape: f32[1,256], index: 16, kind: input, shape index: {}]
  %s17 = inlined_call_operand.hbm [shape: bf16[128,128], index: 17, kind: input, shape index: {}]
  %s18 = inlined_call_operand.hbm [shape: f32[1,128], index: 18, kind: input, shape index: {}]
  %s19 = inlined_call_operand.hbm [shape: bf16[128,256], index: 19, kind: input, shape index: {}]
  %s20 = inlined_call_operand.hbm [shape: f32[1,256], index: 20, kind: input, shape index: {}]
  %s21 = inlined_call_operand.hbm [shape: bf16[128,128], index: 21, kind: input, shape index: {}]
  %s22 = inlined_call_operand.hbm [shape: f32[1,128], index: 22, kind: input, shape index: {}]
  %s23 = inlined_call_operand.vmem [shape: bf16[128,128], index: 23, kind: input, shape index: {}]
  %s24 = inlined_call_operand.vmem [shape: f32[1,128], index: 24, kind: input, shape index: {}]
  %s25 = inlined_call_operand.vmem [shape: f32[32,128], index: 25, kind: output, shape index: {}]
  %s26 = sld [smem:[#allocation0]]
  $region190: #{run.1} parent=0
    _
  %s28 = ssub.s32 1, %s26
  %s29 = scalar_select 0, %s28, %s26
  $region1: #{run.1} parent=0
    #allocation2 [shape = 'u8[32768]{0}', space=vmem, size = 0x8000, scoped, tag = 'input window, operand 3, single buffered']
    #allocation3 [shape = 's32[1]{0}', space=sflag, size = 0x4, scoped, tag = 'scoped memory for run.1']
    #allocation4 [shape = 'u8[512]{0}', space=vmem, size = 0x400, scoped, tag = 'input window, operand 4, single buffered']
    #allocation5 [shape = 's32[1]{0}', space=sflag, size = 0x4, scoped, tag = 'scoped memory for run.1']
    #allocation6 [shape = 'u8[65536]{0}', space=vmem, size = 0x10000, scoped, tag = 'input window, operand 5, single buffered']
    #allocation7 [shape = 'u8[512]{0}', space=vmem, size = 0x400, scoped, tag = 'input window, operand 6, single buffered']
    #allocation8 [shape = 's32[1]{0}', space=sflag, size = 0x4, scoped, tag = 'scoped memory for run.1']
    #allocation9 [shape = 'u8[32768]{0}', space=vmem, size = 0x8000, scoped, tag = 'input window, operand 7, single buffered']
    #allocation10 [shape = 'u8[512]{0}', space=vmem, size = 0x400, scoped, tag = 'input window, operand 8, single buffered']
    #allocation11 [shape = 's32[1]{0}', space=sflag, size = 0x4, scoped, tag = 'scoped memory for run.1']
    #allocation12 [shape = 'u8[65536]{0}', space=vmem, size = 0x10000, scoped, tag = 'input window, operand 9, single buffered']
    #allocation13 [shape = 'u8[512]{0}', space=vmem, size = 0x400, scoped, tag = 'input window, operand 10, single buffered']
    #allocation14 [shape = 's32[1]{0}', space=sflag, size = 0x4, scoped, tag = 'scoped memory for run.1']
    #allocation15 [shape = 'u8[32768]{0}', space=vmem, size = 0x8000, scoped, tag = 'input window, operand 11, single buffered']
    #allocation16 [shape = 'u8[512]{0}', space=vmem, size = 0x400, scoped, tag = 'input window, operand 12, single buffered']
    #allocation17 [shape = 's32[1]{0}', space=sflag, size = 0x4, scoped, tag = 'scoped memory for run.1']
    #allocation18 [shape = 'u8[32768]{0}', space=vmem, size = 0x8000, scoped, tag = 'input window, operand 13, single buffered']
    #allocation19 [shape = 'u8[512]{0}', space=vmem, size = 0x400, scoped, tag = 'input window, operand 14, single buffered']
    #allocation20 [shape = 's32[1]{0}', space=sflag, size = 0x4, scoped, tag = 'scoped memory for run.1']
    #allocation21 [shape = 'u8[65536]{0}', space=vmem, size = 0x10000, scoped, tag = 'input window, operand 15, single buffered']
    #allocation22 [shape = 'u8[1024]{0}', space=vmem, size = 0x400, scoped, tag = 'input window, operand 16, single buffered']
    #allocation23 [shape = 's32[1]{0}', space=sflag, size = 0x4, scoped, tag = 'scoped memory for run.1']
    #allocation24 [shape = 'u8[32768]{0}', space=vmem, size = 0x8000, scoped, tag = 'input window, operand 17, single buffered']
    #allocation25 [shape = 'u8[512]{0}', space=vmem, size = 0x400, scoped, tag = 'input window, operand 18, single buffered']
    #allocation26 [shape = 's32[1]{0}', space=sflag, size = 0x4, scoped, tag = 'scoped memory for run.1']
    #allocation27 [shape = 'u8[65536]{0}', space=vmem, size = 0x10000, scoped, tag = 'input window, operand 19, single buffered']
    #allocation28 [shape = 'u8[1024]{0}', space=vmem, size = 0x400, scoped, tag = 'input window, operand 20, single buffered']
    #allocation29 [shape = 's32[1]{0}', space=sflag, size = 0x4, scoped, tag = 'scoped memory for run.1']
    #allocation30 [shape = 'u8[32768]{0}', space=vmem, size = 0x8000, scoped, tag = 'input window, operand 21, single buffered']
    #allocation31 [shape = 'u8[512]{0}', space=vmem, size = 0x400, scoped, tag = 'input window, operand 22, single buffered']
    #allocation32 [shape = 's32[1]{0}', space=sflag, size = 0x4, scoped, tag = 'scoped memory for run.1']
    %30 = vsyncpa [#allocation3], 0
    %31 = vsyncpa [#allocation5], 0
    %32 = vsyncpa [#allocation8], 0
    %33 = vsyncpa [#allocation11], 0
    %34 = vsyncpa [#allocation14], 0
    %35 = vsyncpa [#allocation17], 0
    %36 = vsyncpa [#allocation20], 0
    %37 = vsyncpa [#allocation23], 0
    %38 = vsyncpa [#allocation26], 0
    %39 = vsyncpa [#allocation29], 0
    %40 = vsyncpa [#allocation32], 0
    // Predicated region
    $region2: #{run.1} parent=1 // pred_check
      _
    $region3: #{run.1} parent=1 // pred_check_branch
      %42 = sbr.rel (0) target = $region5
    $region4: #{run.1} parent=1 // pred_region
      _
    $region5: #{run.1} parent=1 // pred_fallthru
      _
    // Predicated region
    $region6: #{run.1} parent=1 // pred_check
      _
    $region7: #{run.1} parent=1 // pred_check_branch
      %44 = sbr.rel (0) target = $region9
    $region8: #{run.1} parent=1 // pred_region
      _
    $region9: #{run.1} parent=1 // pred_fallthru
      _
    // Predicated region
    $region10: #{run.1} parent=1 // pred_check
      _
    $region11: #{run.1} parent=1 // pred_check_branch
      %46 = sbr.rel (0) target = $region13
    $region12: #{run.1} parent=1 // pred_region
      _
    $region13: #{run.1} parent=1 // pred_fallthru
      _
    // Predicated region
    $region14: #{run.1} parent=1 // pred_check
      _
    $region15: #{run.1} parent=1 // pred_check_branch
      %48 = sbr.rel (0) target = $region17
    $region16: #{run.1} parent=1 // pred_region
      %s50 = ssub.s32 1024, 1024
      %51 = vsyncadd [#allocation3], %s50
      %s52 = sshll.u32 [#allocation2], 4
      %s53 = int_to_ptr.vmem [resolvable:$true] %s52
      %58 = dma.hbm_to_vmem [thread:$0]  %s3, 1024, %s53, [#allocation3], 64, 64, 4
    $region17: #{run.1} parent=1 // pred_fallthru
      _
    // Predicated region
    $region18: #{run.1} parent=1 // pred_check
      _
    $region19: #{run.1} parent=1 // pred_check_branch
      %60 = sbr.rel (0) target = $region21
    $region20: #{run.1} parent=1 // pred_region
      %s62 = ssub.s32 16, 16
      %63 = vsyncadd [#allocation5], %s62
      %s65 = sshll.u32 [#allocation4], 4
      %s66 = int_to_ptr.vmem [resolvable:$true] %s65
      %68 = dma.hbm_to_vmem [thread:$0]  %s4, 16, %s66, [#allocation5]
    $region21: #{run.1} parent=1 // pred_fallthru
      _
    // Predicated region
    $region22: #{run.1} parent=1 // pred_check
      _
    $region23: #{run.1} parent=1 // pred_check_branch
      %70 = sbr.rel (0) target = $region25
    $region24: #{run.1} parent=1 // pred_region
      %s72 = ssub.s32 2048, 2048
      %73 = vsyncadd [#allocation5], %s72
      %s74 = sshll.u32 [#allocation6], 4
      %s75 = int_to_ptr.vmem [resolvable:$true] %s74
      %80 = dma.hbm_to_vmem [thread:$0]  %s5, 2048, %s75, [#allocation5], 64, 64, 4
    $region25: #{run.1} parent=1 // pred_fallthru
      _
    // Predicated region
    $region26: #{run.1} parent=1 // pred_check
      _
    $region27: #{run.1} parent=1 // pred_check_branch
      %82 = sbr.rel (0) target = $region29
    $region28: #{run.1} parent=1 // pred_region
      %s84 = ssub.s32 16, 16
      %85 = vsyncadd [#allocation8], %s84
      %s87 = sshll.u32 [#allocation7], 4
      %s88 = int_to_ptr.vmem [resolvable:$true] %s87
      %90 = dma.hbm_to_vmem [thread:$0]  %s6, 16, %s88, [#allocation8]
    $region29: #{run.1} parent=1 // pred_fallthru
      _
    // Predicated region
    $region30: #{run.1} parent=1 // pred_check
      _
    $region31: #{run.1} parent=1 // pred_check_branch
      %92 = sbr.rel (0) target = $region33
    $region32: #{run.1} parent=1 // pred_region
      %s94 = ssub.s32 1024, 1024
      %95 = vsyncadd [#allocation8], %s94
      %s96 = sshll.u32 [#allocation9], 4
      %s97 = int_to_ptr.vmem [resolvable:$true] %s96
      %102 = dma.hbm_to_vmem [thread:$0]  %s7, 1024, %s97, [#allocation8], 64, 64, 4
    $region33: #{run.1} parent=1 // pred_fallthru
      _
    // Predicated region
    $region34: #{run.1} parent=1 // pred_check
      _
    $region35: #{run.1} parent=1 // pred_check_branch
      %104 = sbr.rel (0) target = $region37
    $region36: #{run.1} parent=1 // pred_region
      %s106 = ssub.s32 16, 16
      %107 = vsyncadd [#allocation11], %s106
      %s109 = sshll.u32 [#allocation10], 4
      %s110 = int_to_ptr.vmem [resolvable:$true] %s109
      %112 = dma.hbm_to_vmem [thread:$0]  %s8, 16, %s110, [#allocation11]
    $region37: #{run.1} parent=1 // pred_fallthru
      _
    // Predicated region
    $region38: #{run.1} parent=1 // pred_check
      _
    $region39: #{run.1} parent=1 // pred_check_branch
      %114 = sbr.rel (0) target = $region41
    $region40: #{run.1} parent=1 // pred_region
      %s116 = ssub.s32 2048, 2048
      %117 = vsyncadd [#allocation11], %s116
      %s118 = sshll.u32 [#allocation12], 4
      %s119 = int_to_ptr.vmem [resolvable:$true] %s118
      %124 = dma.hbm_to_vmem [thread:$0]  %s9, 2048, %s119, [#allocation11], 64, 64, 4
    $region41: #{run.1} parent=1 // pred_fallthru
      _
    // Predicated region
    $region42: #{run.1} parent=1 // pred_check
      _
    $region43: #{run.1} parent=1 // pred_check_branch
      %126 = sbr.rel (0) target = $region45
    $region44: #{run.1} parent=1 // pred_region
      %s128 = ssub.s32 16, 16
      %129 = vsyncadd [#allocation14], %s128
      %s131 = sshll.u32 [#allocation13], 4
      %s132 = int_to_ptr.vmem [resolvable:$true] %s131
      %134 = dma.hbm_to_vmem [thread:$0]  %s10, 16, %s132, [#allocation14]
    $region45: #{run.1} parent=1 // pred_fallthru
      _
    // Predicated region
    $region46: #{run.1} parent=1 // pred_check
      _
    $region47: #{run.1} parent=1 // pred_check_branch
      %136 = sbr.rel (0) target = $region49
    $region48: #{run.1} parent=1 // pred_region
      %s138 = ssub.s32 1024, 1024
      %139 = vsyncadd [#allocation14], %s138
      %s140 = sshll.u32 [#allocation15], 4
      %s141 = int_to_ptr.vmem [resolvable:$true] %s140
      %146 = dma.hbm_to_vmem [thread:$0]  %s11, 1024, %s141, [#allocation14], 64, 64, 4
    $region49: #{run.1} parent=1 // pred_fallthru
      _
    // Predicated region
    $region50: #{run.1} parent=1 // pred_check
      _
    $region51: #{run.1} parent=1 // pred_check_branch
      %148 = sbr.rel (0) target = $region53
    $region52: #{run.1} parent=1 // pred_region
      %s150 = ssub.s32 16, 16
      %151 = vsyncadd [#allocation17], %s150
      %s153 = sshll.u32 [#allocation16], 4
      %s154 = int_to_ptr.vmem [resolvable:$true] %s153
      %156 = dma.hbm_to_vmem [thread:$0]  %s12, 16, %s154, [#allocation17]
    $region53: #{run.1} parent=1 // pred_fallthru
      _
    // Predicated region
    $region54: #{run.1} parent=1 // pred_check
      _
    $region55: #{run.1} parent=1 // pred_check_branch
      %158 = sbr.rel (0) target = $region57
    $region56: #{run.1} parent=1 // pred_region
      %s160 = ssub.s32 1024, 1024
      %161 = vsyncadd [#allocation17], %s160
      %s162 = sshll.u32 [#allocation18], 4
      %s163 = int_to_ptr.vmem [resolvable:$true] %s162
      %168 = dma.hbm_to_vmem [thread:$0]  %s13, 1024, %s163, [#allocation17], 64, 64, 4
    $region57: #{run.1} parent=1 // pred_fallthru
      _
    // Predicated region
    $region58: #{run.1} parent=1 // pred_check
      _
    $region59: #{run.1} parent=1 // pred_check_branch
      %170 = sbr.rel (0) target = $region61
    $region60: #{run.1} parent=1 // pred_region
      %s172 = ssub.s32 16, 16
      %173 = vsyncadd [#allocation20], %s172
      %s175 = sshll.u32 [#allocation19], 4
      %s176 = int_to_ptr.vmem [resolvable:$true] %s175
      %178 = dma.hbm_to_vmem [thread:$0]  %s14, 16, %s176, [#allocation20]
    $region61: #{run.1} parent=1 // pred_fallthru
      _
    // Predicated region
    $region62: #{run.1} parent=1 // pred_check
      _
    $region63: #{run.1} parent=1 // pred_check_branch
      %180 = sbr.rel (0) target = $region65
    $region64: #{run.1} parent=1 // pred_region
      %s182 = ssub.s32 2048, 2048
      %183 = vsyncadd [#allocation20], %s182
      %s184 = sshll.u32 [#allocation21], 4
      %s185 = int_to_ptr.vmem [resolvable:$true] %s184
      %190 = dma.hbm_to_vmem [thread:$0]  %s15, 2048, %s185, [#allocation20], 128, 128, 8
    $region65: #{run.1} parent=1 // pred_fallthru
      _
    // Predicated region
    $region66: #{run.1} parent=1 // pred_check
      _
    $region67: #{run.1} parent=1 // pred_check_branch
      %192 = sbr.rel (0) target = $region69
    $region68: #{run.1} parent=1 // pred_region
      %s194 = ssub.s32 32, 32
      %195 = vsyncadd [#allocation23], %s194
      %s197 = sshll.u32 [#allocation22], 4
      %s198 = int_to_ptr.vmem [resolvable:$true] %s197
      %200 = dma.hbm_to_vmem [thread:$0]  %s16, 32, %s198, [#allocation23]
    $region69: #{run.1} parent=1 // pred_fallthru
      _
    // Predicated region
    $region70: #{run.1} parent=1 // pred_check
      _
    $region71: #{run.1} parent=1 // pred_check_branch
      %202 = sbr.rel (0) target = $region73
    $region72: #{run.1} parent=1 // pred_region
      %s204 = ssub.s32 1024, 1024
      %205 = vsyncadd [#allocation23], %s204
      %s206 = sshll.u32 [#allocation24], 4
      %s207 = int_to_ptr.vmem [resolvable:$true] %s206
      %212 = dma.hbm_to_vmem [thread:$0]  %s17, 1024, %s207, [#allocation23], 64, 64, 4
    $region73: #{run.1} parent=1 // pred_fallthru
      _
    // Predicated region
    $region74: #{run.1} parent=1 // pred_check
      _
    $region75: #{run.1} parent=1 // pred_check_branch
      %214 = sbr.rel (0) target = $region77
    $region76: #{run.1} parent=1 // pred_region
      %s216 = ssub.s32 16, 16
      %217 = vsyncadd [#allocation26], %s216
      %s219 = sshll.u32 [#allocation25], 4
      %s220 = int_to_ptr.vmem [resolvable:$true] %s219
      %222 = dma.hbm_to_vmem [thread:$0]  %s18, 16, %s220, [#allocation26]
    $region77: #{run.1} parent=1 // pred_fallthru
      _
    // Predicated region
    $region78: #{run.1} parent=1 // pred_check
      _
    $region79: #{run.1} parent=1 // pred_check_branch
      %224 = sbr.rel (0) target = $region81
    $region80: #{run.1} parent=1 // pred_region
      %s226 = ssub.s32 2048, 2048
      %227 = vsyncadd [#allocation26], %s226
      %s228 = sshll.u32 [#allocation27], 4
      %s229 = int_to_ptr.vmem [resolvable:$true] %s228
      %234 = dma.hbm_to_vmem [thread:$0]  %s19, 2048, %s229, [#allocation26], 128, 128, 8
    $region81: #{run.1} parent=1 // pred_fallthru
      _
    // Predicated region
    $region82: #{run.1} parent=1 // pred_check
      _
    $region83: #{run.1} parent=1 // pred_check_branch
      %236 = sbr.rel (0) target = $region85
    $region84: #{run.1} parent=1 // pred_region
      %s238 = ssub.s32 32, 32
      %239 = vsyncadd [#allocation29], %s238
      %s241 = sshll.u32 [#allocation28], 4
      %s242 = int_to_ptr.vmem [resolvable:$true] %s241
      %244 = dma.hbm_to_vmem [thread:$0]  %s20, 32, %s242, [#allocation29]
    $region85: #{run.1} parent=1 // pred_fallthru
      _
    // Predicated region
    $region86: #{run.1} parent=1 // pred_check
      _
    $region87: #{run.1} parent=1 // pred_check_branch
      %246 = sbr.rel (0) target = $region89
    $region88: #{run.1} parent=1 // pred_region
      %s248 = ssub.s32 1024, 1024
      %249 = vsyncadd [#allocation29], %s248
      %s250 = sshll.u32 [#allocation30], 4
      %s251 = int_to_ptr.vmem [resolvable:$true] %s250
      %256 = dma.hbm_to_vmem [thread:$0]  %s21, 1024, %s251, [#allocation29], 64, 64, 4
    $region89: #{run.1} parent=1 // pred_fallthru
      _
    // Predicated region
    $region90: #{run.1} parent=1 // pred_check
      _
    $region91: #{run.1} parent=1 // pred_check_branch
      %258 = sbr.rel (0) target = $region93
    $region92: #{run.1} parent=1 // pred_region
      %s260 = ssub.s32 16, 16
      %261 = vsyncadd [#allocation32], %s260
      %s263 = sshll.u32 [#allocation31], 4
      %s264 = int_to_ptr.vmem [resolvable:$true] %s263
      %266 = dma.hbm_to_vmem [thread:$0]  %s22, 16, %s264, [#allocation32]
    $region93: #{run.1} parent=1 // pred_fallthru
      _
    // Predicated region
    $region94: #{run.1} parent=1 // pred_check
      _
    $region95: #{run.1} parent=1 // pred_check_branch
      %268 = sbr.rel (0) target = $region97
    $region96: #{run.1} parent=1 // pred_region
      _
    $region97: #{run.1} parent=1 // pred_fallthru
      _
    // Predicated region
    $region98: #{run.1} parent=1 // pred_check
      _
    $region99: #{run.1} parent=1 // pred_check_branch
      %270 = sbr.rel (0) target = $region101
    $region100: #{run.1} parent=1 // pred_region
      _
    $region101: #{run.1} parent=1 // pred_fallthru
      _
    // Predicated region
    $region102: #{run.1} parent=1 // pred_check
      _
    $region103: #{run.1} parent=1 // pred_check_branch
      %272 = sbr.rel (0) target = $region105
    $region104: #{run.1} parent=1 // pred_region
      %273 = dma.done [#allocation3], 1024
    $region105: #{run.1} parent=1 // pred_fallthru
      _
    // Predicated region
    $region106: #{run.1} parent=1 // pred_check
      _
    $region107: #{run.1} parent=1 // pred_check_branch
      %275 = sbr.rel (0) target = $region109
    $region108: #{run.1} parent=1 // pred_region
      %276 = dma.done [#allocation5], 16
    $region109: #{run.1} parent=1 // pred_fallthru
      _
    // Predicated region
    $region110: #{run.1} parent=1 // pred_check
      _
    $region111: #{run.1} parent=1 // pred_check_branch
      %278 = sbr.rel (0) target = $region113
    $region112: #{run.1} parent=1 // pred_region
      %279 = dma.done [#allocation5], 2048
    $region113: #{run.1} parent=1 // pred_fallthru
      _
    // Predicated region
    $region114: #{run.1} parent=1 // pred_check
      _
    $region115: #{run.1} parent=1 // pred_check_branch
      %281 = sbr.rel (0) target = $region117
    $region116: #{run.1} parent=1 // pred_region
      %282 = dma.done [#allocation8], 16
    $region117: #{run.1} parent=1 // pred_fallthru
      _
    // Predicated region
    $region118: #{run.1} parent=1 // pred_check
      _
    $region119: #{run.1} parent=1 // pred_check_branch
      %284 = sbr.rel (0) target = $region121
    $region120: #{run.1} parent=1 // pred_region
      %285 = dma.done [#allocation8], 1024
    $region121: #{run.1} parent=1 // pred_fallthru
      _
    // Predicated region
    $region122: #{run.1} parent=1 // pred_check
      _
    $region123: #{run.1} parent=1 // pred_check_branch
      %287 = sbr.rel (0) target = $region125
    $region124: #{run.1} parent=1 // pred_region
      %288 = dma.done [#allocation11], 16
    $region125: #{run.1} parent=1 // pred_fallthru
      _
    // Predicated region
    $region126: #{run.1} parent=1 // pred_check
      _
    $region127: #{run.1} parent=1 // pred_check_branch
      %290 = sbr.rel (0) target = $region129
    $region128: #{run.1} parent=1 // pred_region
      %291 = dma.done [#allocation11], 2048
    $region129: #{run.1} parent=1 // pred_fallthru
      _
    // Predicated region
    $region130: #{run.1} parent=1 // pred_check
      _
    $region131: #{run.1} parent=1 // pred_check_branch
      %293 = sbr.rel (0) target = $region133
    $region132: #{run.1} parent=1 // pred_region
      %294 = dma.done [#allocation14], 16
    $region133: #{run.1} parent=1 // pred_fallthru
      _
    // Predicated region
    $region134: #{run.1} parent=1 // pred_check
      _
    $region135: #{run.1} parent=1 // pred_check_branch
      %296 = sbr.rel (0) target = $region137
    $region136: #{run.1} parent=1 // pred_region
      %297 = dma.done [#allocation14], 1024
    $region137: #{run.1} parent=1 // pred_fallthru
      _
    // Predicated region
    $region138: #{run.1} parent=1 // pred_check
      _
    $region139: #{run.1} parent=1 // pred_check_branch
      %299 = sbr.rel (0) target = $region141
    $region140: #{run.1} parent=1 // pred_region
      %300 = dma.done [#allocation17], 16
    $region141: #{run.1} parent=1 // pred_fallthru
      _
    // Predicated region
    $region142: #{run.1} parent=1 // pred_check
      _
    $region143: #{run.1} parent=1 // pred_check_branch
      %302 = sbr.rel (0) target = $region145
    $region144: #{run.1} parent=1 // pred_region
      %303 = dma.done [#allocation17], 1024
    $region145: #{run.1} parent=1 // pred_fallthru
      _
    // Predicated region
    $region146: #{run.1} parent=1 // pred_check
      _
    $region147: #{run.1} parent=1 // pred_check_branch
      %305 = sbr.rel (0) target = $region149
    $region148: #{run.1} parent=1 // pred_region
      %306 = dma.done [#allocation20], 16
    $region149: #{run.1} parent=1 // pred_fallthru
      _
    // Predicated region
    $region150: #{run.1} parent=1 // pred_check
      _
    $region151: #{run.1} parent=1 // pred_check_branch
      %308 = sbr.rel (0) target = $region153
    $region152: #{run.1} parent=1 // pred_region
      %309 = dma.done [#allocation20], 2048
    $region153: #{run.1} parent=1 // pred_fallthru
      _
    // Predicated region
    $region154: #{run.1} parent=1 // pred_check
      _
    $region155: #{run.1} parent=1 // pred_check_branch
      %311 = sbr.rel (0) target = $region157
    $region156: #{run.1} parent=1 // pred_region
      %312 = dma.done [#allocation23], 32
    $region157: #{run.1} parent=1 // pred_fallthru
      _
    // Predicated region
    $region158: #{run.1} parent=1 // pred_check
      _
    $region159: #{run.1} parent=1 // pred_check_branch
      %314 = sbr.rel (0) target = $region161
    $region160: #{run.1} parent=1 // pred_region
      %315 = dma.done [#allocation23], 1024
    $region161: #{run.1} parent=1 // pred_fallthru
      _
    // Predicated region
    $region162: #{run.1} parent=1 // pred_check
      _
    $region163: #{run.1} parent=1 // pred_check_branch
      %317 = sbr.rel (0) target = $region165
    $region164: #{run.1} parent=1 // pred_region
      %318 = dma.done [#allocation26], 16
    $region165: #{run.1} parent=1 // pred_fallthru
      _
    // Predicated region
    $region166: #{run.1} parent=1 // pred_check
      _
    $region167: #{run.1} parent=1 // pred_check_branch
      %320 = sbr.rel (0) target = $region169
    $region168: #{run.1} parent=1 // pred_region
      %321 = dma.done [#allocation26], 2048
    $region169: #{run.1} parent=1 // pred_fallthru
      _
    // Predicated region
    $region170: #{run.1} parent=1 // pred_check
      _
    $region171: #{run.1} parent=1 // pred_check_branch
      %323 = sbr.rel (0) target = $region173
    $region172: #{run.1} parent=1 // pred_region
      %324 = dma.done [#allocation29], 32
    $region173: #{run.1} parent=1 // pred_fallthru
      _
    // Predicated region
    $region174: #{run.1} parent=1 // pred_check
      _
    $region175: #{run.1} parent=1 // pred_check_branch
      %326 = sbr.rel (0) target = $region177
    $region176: #{run.1} parent=1 // pred_region
      %327 = dma.done [#allocation29], 1024
    $region177: #{run.1} parent=1 // pred_fallthru
      _
    // Predicated region
    $region178: #{run.1} parent=1 // pred_check
      _
    $region179: #{run.1} parent=1 // pred_check_branch
      %329 = sbr.rel (0) target = $region181
    $region180: #{run.1} parent=1 // pred_region
      %330 = dma.done [#allocation32], 16
    $region181: #{run.1} parent=1 // pred_fallthru
      _
    %v332 = vld [vmem:[%s0] sm:$0xf]
    %v333 = vld [vmem:[%s0 + $0x4] sm:$0xf]
    %v334 = vld [vmem:[%s0 + $0x8] sm:$0xf]
    %v335 = vld [vmem:[%s0 + $0xc] sm:$0xf]
    %v336 = vld [vmem:[%s1] sm:$0xf]
    %v337 = vld [vmem:[%s1 + $0x4] sm:$0xf]
    %v338 = vld [vmem:[%s1 + $0x8] sm:$0xf]
    %v339 = vld [vmem:[%s1 + $0xc] sm:$0xf]
    %v340 = vld [vmem:[%s1 + $0x10] sm:$0xf]
    %v341 = vld [vmem:[%s1 + $0x14] sm:$0xf]
    %v342 = vld [vmem:[%s1 + $0x18] sm:$0xf]
    %v343 = vld [vmem:[%s1 + $0x1c] sm:$0xf]
    %v344 = vld [vmem:[%s1 + $0x20] sm:$0xf]
    %v345 = vld [vmem:[%s1 + $0x24] sm:$0xf]
    %v346 = vld [vmem:[%s1 + $0x28] sm:$0xf]
    %v347 = vld [vmem:[%s1 + $0x2c] sm:$0xf]
    %v348 = vld [vmem:[%s1 + $0x30] sm:$0xf]
    %v349 = vld [vmem:[%s1 + $0x34] sm:$0xf]
    %v350 = vld [vmem:[%s1 + $0x38] sm:$0xf]
    %v351 = vld [vmem:[%s1 + $0x3c] sm:$0xf]
    %v352 = vld [vmem:[%s2] sm:$0x1]
    %v354 = vlaneseq
    %v355 = vshrl.u32 %v354, 7
    %v356 = vsub.s32 0, %v355
    %v357 = vrot.slane %v352, %v356
    %v363 = vunpack.c.l.b16 %v332
    %v364 = vunpack.c.l.b16 %v333
    %v365 = vunpack.c.l.b16 %v334
    %v366 = vunpack.c.l.b16 %v335
    %v367 = vpack.c.b16 %v364, %v363
    %v368 = vpack.c.b16 %v366, %v365
    %v387 = vunpack.c.l.b16 %v336
    %v388 = vunpack.c.l.b16 %v337
    %v389 = vunpack.c.l.b16 %v338
    %v390 = vunpack.c.l.b16 %v339
    %v391 = vunpack.c.l.b16 %v340
    %v392 = vunpack.c.l.b16 %v341
    %v393 = vunpack.c.l.b16 %v342
    %v394 = vunpack.c.l.b16 %v343
    %v395 = vunpack.c.l.b16 %v344
    %v396 = vunpack.c.l.b16 %v345
    %v397 = vunpack.c.l.b16 %v346
    %v398 = vunpack.c.l.b16 %v347
    %v399 = vunpack.c.l.b16 %v348
    %v400 = vunpack.c.l.b16 %v349
    %v401 = vunpack.c.l.b16 %v350
    %v402 = vunpack.c.l.b16 %v351
    %v403 = vpack.c.b16 %v388, %v387
    %v404 = vpack.c.b16 %v390, %v389
    %v405 = vpack.c.b16 %v392, %v391
    %v406 = vpack.c.b16 %v394, %v393
    %v407 = vpack.c.b16 %v396, %v395
    %v408 = vpack.c.b16 %v398, %v397
    %v409 = vpack.c.b16 %v400, %v399
    %v410 = vpack.c.b16 %v402, %v401
    %419 = vmatprep.subr.bf16.mxu0 0
    %420 = vmatpush1.bf16.msra.mxu0 %v410
    %421 = vmatprep.subr.bf16.mxu0 0
    %422 = vmatpush1.bf16.msra.mxu0 %v409
    %423 = vmatprep.subr.bf16.mxu0 0
    %424 = vmatpush1.bf16.msra.mxu0 %v408
    %425 = vmatprep.subr.bf16.mxu0 0
    %426 = vmatpush1.bf16.msra.mxu0 %v407
    %427 = vmatprep.subr.bf16.mxu0 0
    %428 = vmatpush1.bf16.msra.mxu0 %v406
    %429 = vmatprep.subr.bf16.mxu0 0
    %430 = vmatpush1.bf16.msra.mxu0 %v405
    %431 = vmatprep.subr.bf16.mxu0 0
    %432 = vmatpush1.bf16.msra.mxu0 %v404
    %433 = vmatprep.subr.bf16.mxu0 0
    %434 = vmatpush1.bf16.msra.mxu0 %v403
    %435 = vmatprep.subr.bf16.mxu0 0
    %436 = vmatpush2.bf16.msra.mxu0 0
    %437 = vmatprep.subr.bf16.mxu0 0
    %438 = vmatpush2.bf16.msra.mxu0 0
    %439 = vmatprep.subr.bf16.mxu0 0
    %440 = vmatpush2.bf16.msra.mxu0 0
    %441 = vmatprep.subr.bf16.mxu0 0
    %442 = vmatpush2.bf16.msra.mxu0 0
    %443 = vmatprep.subr.bf16.mxu0 0
    %444 = vmatpush2.bf16.msra.mxu0 0
    %445 = vmatprep.subr.bf16.mxu0 0
    %446 = vmatpush2.bf16.msra.mxu0 0
    %447 = vmatprep.subr.bf16.mxu0 0
    %448 = vmatpush2.bf16.msra.mxu0 0
    %449 = vmatprep.subr.bf16.mxu0 0
    %450 = vmatpush2.bf16.msra.mxu0 0
    %451 = vmatprep.mubr.bf16.mxu0 0
    %452 = vmatmul.mubr.bf16.gmra.mxu0 %v367
    %v453 = vpop.f32.mrf.mxu0
    %v454 = vadd.f32 %v357, %v453
    %v455 = vpop.f32.mrf.mxu0
    %v456 = vpop.f32.mrf.mxu0
    %v457 = vadd.f32 %v357, %v456
    %v458 = vpop.f32.mrf.mxu0
    %459 = vmatprep.mubr.bf16.mxu0 0
    %460 = vmatmul.mubr.bf16.gmra.mxu0 %v368
    %v461 = vpop.f32.mrf.mxu0
    %v462 = vadd.f32 %v357, %v461
    %v463 = vpop.f32.mrf.mxu0
    %v464 = vpop.f32.mrf.mxu0
    %v465 = vadd.f32 %v357, %v464
    %v466 = vpop.f32.mrf.mxu0
    %467 = vdwg.mxu0
    %v468 = vtanh.pop %v454
    %v469 = vtanh.pop %v457
    %v470 = vtanh.pop %v462
    %v471 = vtanh.pop %v465
    %v472 = vpack.c.bf16 %v469, %v468
    %v473 = vpack.c.bf16 %v471, %v470
    %v474 = vld [vmem:[#allocation2] sm:$0xf]
    %v475 = vld [vmem:[#allocation2 + $0x4] sm:$0xf]
    %v476 = vld [vmem:[#allocation2 + $0x8] sm:$0xf]
    %v477 = vld [vmem:[#allocation2 + $0xc] sm:$0xf]
    %v478 = vld [vmem:[#allocation2 + $0x10] sm:$0xf]
    %v479 = vld [vmem:[#allocation2 + $0x14] sm:$0xf]
    %v480 = vld [vmem:[#allocation2 + $0x18] sm:$0xf]
    %v481 = vld [vmem:[#allocation2 + $0x1c] sm:$0xf]
    %v482 = vld [vmem:[#allocation2 + $0x20] sm:$0xf]
    %v483 = vld [vmem:[#allocation2 + $0x24] sm:$0xf]
    %v484 = vld [vmem:[#allocation2 + $0x28] sm:$0xf]
    %v485 = vld [vmem:[#allocation2 + $0x2c] sm:$0xf]
    %v486 = vld [vmem:[#allocation2 + $0x30] sm:$0xf]
    %v487 = vld [vmem:[#allocation2 + $0x34] sm:$0xf]
    %v488 = vld [vmem:[#allocation2 + $0x38] sm:$0xf]
    %v489 = vld [vmem:[#allocation2 + $0x3c] sm:$0xf]
    %v490 = vld [vmem:[#allocation4] sm:$0x1]
    %v492 = vlaneseq
    %v493 = vshrl.u32 %v492, 7
    %v494 = vsub.s32 0, %v493
    %v495 = vrot.slane %v490, %v494
    %v513 = vunpack.c.l.b16 %v474
    %v514 = vunpack.c.l.b16 %v475
    %v515 = vunpack.c.l.b16 %v476
    %v516 = vunpack.c.l.b16 %v477
    %v517 = vunpack.c.l.b16 %v478
    %v518 = vunpack.c.l.b16 %v479
    %v519 = vunpack.c.l.b16 %v480
    %v520 = vunpack.c.l.b16 %v481
    %v521 = vunpack.c.l.b16 %v482
    %v522 = vunpack.c.l.b16 %v483
    %v523 = vunpack.c.l.b16 %v484
    %v524 = vunpack.c.l.b16 %v485
    %v525 = vunpack.c.l.b16 %v486
    %v526 = vunpack.c.l.b16 %v487
    %v527 = vunpack.c.l.b16 %v488
    %v528 = vunpack.c.l.b16 %v489
    %v529 = vpack.c.b16 %v514, %v513
    %v530 = vpack.c.b16 %v516, %v515
    %v531 = vpack.c.b16 %v518, %v517
    %v532 = vpack.c.b16 %v520, %v519
    %v533 = vpack.c.b16 %v522, %v521
    %v534 = vpack.c.b16 %v524, %v523
    %v535 = vpack.c.b16 %v526, %v525
    %v536 = vpack.c.b16 %v528, %v527
    %545 = vmatprep.subr.bf16.mxu0 0
    %546 = vmatpush1.bf16.msra.mxu0 %v536
    %547 = vmatprep.subr.bf16.mxu0 0
    %548 = vmatpush1.bf16.msra.mxu0 %v535
    %549 = vmatprep.subr.bf16.mxu0 0
    %550 = vmatpush1.bf16.msra.mxu0 %v534
    %551 = vmatprep.subr.bf16.mxu0 0
    %552 = vmatpush1.bf16.msra.mxu0 %v533
    %553 = vmatprep.subr.bf16.mxu0 0
    %554 = vmatpush1.bf16.msra.mxu0 %v532
    %555 = vmatprep.subr.bf16.mxu0 0
    %556 = vmatpush1.bf16.msra.mxu0 %v531
    %557 = vmatprep.subr.bf16.mxu0 0
    %558 = vmatpush1.bf16.msra.mxu0 %v530
    %559 = vmatprep.subr.bf16.mxu0 0
    %560 = vmatpush1.bf16.msra.mxu0 %v529
    %561 = vmatprep.subr.bf16.mxu0 0
    %562 = vmatpush2.bf16.msra.mxu0 0
    %563 = vmatprep.subr.bf16.mxu0 0
    %564 = vmatpush2.bf16.msra.mxu0 0
    %565 = vmatprep.subr.bf16.mxu0 0
    %566 = vmatpush2.bf16.msra.mxu0 0
    %567 = vmatprep.subr.bf16.mxu0 0
    %568 = vmatpush2.bf16.msra.mxu0 0
    %569 = vmatprep.subr.bf16.mxu0 0
    %570 = vmatpush2.bf16.msra.mxu0 0
    %571 = vmatprep.subr.bf16.mxu0 0
    %572 = vmatpush2.bf16.msra.mxu0 0
    %573 = vmatprep.subr.bf16.mxu0 0
    %574 = vmatpush2.bf16.msra.mxu0 0
    %575 = vmatprep.subr.bf16.mxu0 0
    %576 = vmatpush2.bf16.msra.mxu0 0
    %577 = vmatprep.mubr.bf16.mxu0 0
    %578 = vmatmul.mubr.bf16.gmra.mxu0 %v472
    %v579 = vpop.f32.mrf.mxu0
    %v580 = vadd.f32 %v495, %v579
    %v581 = vpop.f32.mrf.mxu0
    %v582 = vpop.f32.mrf.mxu0
    %v583 = vadd.f32 %v495, %v582
    %v584 = vpop.f32.mrf.mxu0
    %585 = vmatprep.mubr.bf16.mxu0 0
    %586 = vmatmul.mubr.bf16.gmra.mxu0 %v473
    %v587 = vpop.f32.mrf.mxu0
    %v588 = vadd.f32 %v495, %v587
    %v589 = vpop.f32.mrf.mxu0
    %v590 = vpop.f32.mrf.mxu0
    %v591 = vadd.f32 %v495, %v590
    %v592 = vpop.f32.mrf.mxu0
    %593 = vdwg.mxu0
    %v594 = vpack.c.bf16 %v583, %v580
    %v595 = vpack.c.bf16 %v591, %v588
    %v597 = vunpack.c.l.s4 1966171168
    %v598 = vunpack.c.0.s8 %v597
    %v599 = vlaneseq
    %v600 = vshrl.u32 %v599, 7
    %v601 = vsub.s32 %v598, %v600
    %v602 = vrot.slane %v580, %v601
    %v604 = vunpack.c.l.s4 1966171168
    %v605 = vunpack.c.0.s8 %v604
    %v606 = vlaneseq
    %v607 = vshrl.u32 %v606, 7
    %v608 = vsub.s32 %v605, %v607
    %v609 = vrot.slane %v583, %v608
    %v611 = vunpack.c.l.s4 1966171168
    %v612 = vunpack.c.0.s8 %v611
    %v613 = vlaneseq
    %v614 = vshrl.u32 %v613, 7
    %v615 = vsub.s32 %v612, %v614
    %v616 = vrot.slane %v588, %v615
    %v618 = vunpack.c.l.s4 1966171168
    %v619 = vunpack.c.0.s8 %v618
    %v620 = vlaneseq
    %v621 = vshrl.u32 %v620, 7
    %v622 = vsub.s32 %v619, %v621
    %v623 = vrot.slane %v591, %v622
    %v628 = vcombine.low %v602, %v609
    %v629 = vcombine.high %v602, %v609
    %v630 = vcombine.low %v616, %v623
    %v631 = vcombine.high %v616, %v623
    %v636 = vpack.c.bf16 %v630, %v628
    %v637 = vpack.c.bf16 %v631, %v629
    %v638 = vld [vmem:[#allocation6] sm:$0xf]
    %v639 = vld [vmem:[#allocation6 + $0x4] sm:$0xf]
    %v640 = vld [vmem:[#allocation6 + $0x8] sm:$0xf]
    %v641 = vld [vmem:[#allocation6 + $0xc] sm:$0xf]
    %v642 = vld [vmem:[#allocation6 + $0x10] sm:$0xf]
    %v643 = vld [vmem:[#allocation6 + $0x14] sm:$0xf]
    %v644 = vld [vmem:[#allocation6 + $0x18] sm:$0xf]
    %v645 = vld [vmem:[#allocation6 + $0x1c] sm:$0xf]
    %v646 = vld [vmem:[#allocation6 + $0x20] sm:$0xf]
    %v647 = vld [vmem:[#allocation6 + $0x24] sm:$0xf]
    %v648 = vld [vmem:[#allocation6 + $0x28] sm:$0xf]
    %v649 = vld [vmem:[#allocation6 + $0x2c] sm:$0xf]
    %v650 = vld [vmem:[#allocation6 + $0x30] sm:$0xf]
    %v651 = vld [vmem:[#allocation6 + $0x34] sm:$0xf]
    %v652 = vld [vmem:[#allocation6 + $0x38] sm:$0xf]
    %v653 = vld [vmem:[#allocation6 + $0x3c] sm:$0xf]
    %v654 = vld [vmem:[#allocation6 + $0x40] sm:$0xf]
    %v655 = vld [vmem:[#allocation6 + $0x44] sm:$0xf]
    %v656 = vld [vmem:[#allocation6 + $0x48] sm:$0xf]
    %v657 = vld [vmem:[#allocation6 + $0x4c] sm:$0xf]
    %v658 = vld [vmem:[#allocation6 + $0x50] sm:$0xf]
    %v659 = vld [vmem:[#allocation6 + $0x54] sm:$0xf]
    %v660 = vld [vmem:[#allocation6 + $0x58] sm:$0xf]
    %v661 = vld [vmem:[#allocation6 + $0x5c] sm:$0xf]
    %v662 = vld [vmem:[#allocation6 + $0x60] sm:$0xf]
    %v663 = vld [vmem:[#allocation6 + $0x64] sm:$0xf]
    %v664 = vld [vmem:[#allocation6 + $0x68] sm:$0xf]
    %v665 = vld [vmem:[#allocation6 + $0x6c] sm:$0xf]
    %v666 = vld [vmem:[#allocation6 + $0x70] sm:$0xf]
    %v667 = vld [vmem:[#allocation6 + $0x74] sm:$0xf]
    %v668 = vld [vmem:[#allocation6 + $0x78] sm:$0xf]
    %v669 = vld [vmem:[#allocation6 + $0x7c] sm:$0xf]
    %v670 = vld [vmem:[#allocation7] sm:$0x1]
    %v672 = vlaneseq
    %v673 = vshrl.u32 %v672, 7
    %v674 = vsub.s32 0, %v673
    %v675 = vrot.slane %v670, %v674
    %v709 = vunpack.c.l.b16 %v638
    %v710 = vunpack.c.l.b16 %v639
    %v711 = vunpack.c.l.b16 %v640
    %v712 = vunpack.c.l.b16 %v641
    %v713 = vunpack.c.l.b16 %v642
    %v714 = vunpack.c.l.b16 %v643
    %v715 = vunpack.c.l.b16 %v644
    %v716 = vunpack.c.l.b16 %v645
    %v717 = vunpack.c.l.b16 %v646
    %v718 = vunpack.c.l.b16 %v647
    %v719 = vunpack.c.l.b16 %v648
    %v720 = vunpack.c.l.b16 %v649
    %v721 = vunpack.c.l.b16 %v650
    %v722 = vunpack.c.l.b16 %v651
    %v723 = vunpack.c.l.b16 %v652
    %v724 = vunpack.c.l.b16 %v653
    %v725 = vunpack.c.l.b16 %v654
    %v726 = vunpack.c.l.b16 %v655
    %v727 = vunpack.c.l.b16 %v656
    %v728 = vunpack.c.l.b16 %v657
    %v729 = vunpack.c.l.b16 %v658
    %v730 = vunpack.c.l.b16 %v659
    %v731 = vunpack.c.l.b16 %v660
    %v732 = vunpack.c.l.b16 %v661
    %v733 = vunpack.c.l.b16 %v662
    %v734 = vunpack.c.l.b16 %v663
    %v735 = vunpack.c.l.b16 %v664
    %v736 = vunpack.c.l.b16 %v665
    %v737 = vunpack.c.l.b16 %v666
    %v738 = vunpack.c.l.b16 %v667
    %v739 = vunpack.c.l.b16 %v668
    %v740 = vunpack.c.l.b16 %v669
    %v741 = vpack.c.b16 %v710, %v709
    %v742 = vpack.c.b16 %v712, %v711
    %v743 = vpack.c.b16 %v714, %v713
    %v744 = vpack.c.b16 %v716, %v715
    %v745 = vpack.c.b16 %v718, %v717
    %v746 = vpack.c.b16 %v720, %v719
    %v747 = vpack.c.b16 %v722, %v721
    %v748 = vpack.c.b16 %v724, %v723
    %v749 = vpack.c.b16 %v726, %v725
    %v750 = vpack.c.b16 %v728, %v727
    %v751 = vpack.c.b16 %v730, %v729
    %v752 = vpack.c.b16 %v732, %v731
    %v753 = vpack.c.b16 %v734, %v733
    %v754 = vpack.c.b16 %v736, %v735
    %v755 = vpack.c.b16 %v738, %v737
    %v756 = vpack.c.b16 %v740, %v739
    %773 = vmatprep.subr.bf16.mxu0 0
    %774 = vmatpush1.bf16.msra.mxu0 %v748
    %775 = vmatprep.subr.bf16.mxu0 0
    %776 = vmatpush1.bf16.msra.mxu0 %v747
    %777 = vmatprep.subr.bf16.mxu0 0
    %778 = vmatpush1.bf16.msra.mxu0 %v746
    %779 = vmatprep.subr.bf16.mxu0 0
    %780 = vmatpush1.bf16.msra.mxu0 %v745
    %781 = vmatprep.subr.bf16.mxu0 0
    %782 = vmatpush1.bf16.msra.mxu0 %v744
    %783 = vmatprep.subr.bf16.mxu0 0
    %784 = vmatpush1.bf16.msra.mxu0 %v743
    %785 = vmatprep.subr.bf16.mxu0 0
    %786 = vmatpush1.bf16.msra.mxu0 %v742
    %787 = vmatprep.subr.bf16.mxu0 0
    %788 = vmatpush1.bf16.msra.mxu0 %v741
    %789 = vmatprep.subr.bf16.mxu0 0
    %790 = vmatpush2.bf16.msra.mxu0 %v756
    %791 = vmatprep.subr.bf16.mxu0 0
    %792 = vmatpush2.bf16.msra.mxu0 %v755
    %793 = vmatprep.subr.bf16.mxu0 0
    %794 = vmatpush2.bf16.msra.mxu0 %v754
    %795 = vmatprep.subr.bf16.mxu0 0
    %796 = vmatpush2.bf16.msra.mxu0 %v753
    %797 = vmatprep.subr.bf16.mxu0 0
    %798 = vmatpush2.bf16.msra.mxu0 %v752
    %799 = vmatprep.subr.bf16.mxu0 0
    %800 = vmatpush2.bf16.msra.mxu0 %v751
    %801 = vmatprep.subr.bf16.mxu0 0
    %802 = vmatpush2.bf16.msra.mxu0 %v750
    %803 = vmatprep.subr.bf16.mxu0 0
    %804 = vmatpush2.bf16.msra.mxu0 %v749
    %805 = vmatprep.mubr.bf16.mxu0 %v637
    %806 = vmatmul.mubr.bf16.gmra.mxu0 %v636
    %v807 = vpop.f32.mrf.mxu0
    %v808 = vadd.f32 %v675, %v807
    %v809 = vpop.f32.mrf.mxu0
    %v810 = vpop.f32.mrf.mxu0
    %v811 = vadd.f32 %v675, %v810
    %v812 = vpop.f32.mrf.mxu0
    %813 = vdwg.mxu0
    %v814 = vtanh.pop %v808
    %v815 = vtanh.pop %v811
    %v816 = vpack.c.bf16 %v815, %v814
    %v817 = vld [vmem:[#allocation9] sm:$0xf]
    %v818 = vld [vmem:[#allocation9 + $0x4] sm:$0xf]
    %v819 = vld [vmem:[#allocation9 + $0x8] sm:$0xf]
    %v820 = vld [vmem:[#allocation9 + $0xc] sm:$0xf]
    %v821 = vld [vmem:[#allocation9 + $0x10] sm:$0xf]
    %v822 = vld [vmem:[#allocation9 + $0x14] sm:$0xf]
    %v823 = vld [vmem:[#allocation9 + $0x18] sm:$0xf]
    %v824 = vld [vmem:[#allocation9 + $0x1c] sm:$0xf]
    %v825 = vld [vmem:[#allocation9 + $0x20] sm:$0xf]
    %v826 = vld [vmem:[#allocation9 + $0x24] sm:$0xf]
    %v827 = vld [vmem:[#allocation9 + $0x28] sm:$0xf]
    %v828 = vld [vmem:[#allocation9 + $0x2c] sm:$0xf]
    %v829 = vld [vmem:[#allocation9 + $0x30] sm:$0xf]
    %v830 = vld [vmem:[#allocation9 + $0x34] sm:$0xf]
    %v831 = vld [vmem:[#allocation9 + $0x38] sm:$0xf]
    %v832 = vld [vmem:[#allocation9 + $0x3c] sm:$0xf]
    %v833 = vld [vmem:[#allocation10] sm:$0x1]
    %v835 = vlaneseq
    %v836 = vshrl.u32 %v835, 7
    %v837 = vsub.s32 0, %v836
    %v838 = vrot.slane %v833, %v837
    %v856 = vunpack.c.l.b16 %v817
    %v857 = vunpack.c.l.b16 %v818
    %v858 = vunpack.c.l.b16 %v819
    %v859 = vunpack.c.l.b16 %v820
    %v860 = vunpack.c.l.b16 %v821
    %v861 = vunpack.c.l.b16 %v822
    %v862 = vunpack.c.l.b16 %v823
    %v863 = vunpack.c.l.b16 %v824
    %v864 = vunpack.c.l.b16 %v825
    %v865 = vunpack.c.l.b16 %v826
    %v866 = vunpack.c.l.b16 %v827
    %v867 = vunpack.c.l.b16 %v828
    %v868 = vunpack.c.l.b16 %v829
    %v869 = vunpack.c.l.b16 %v830
    %v870 = vunpack.c.l.b16 %v831
    %v871 = vunpack.c.l.b16 %v832
    %v872 = vpack.c.b16 %v857, %v856
    %v873 = vpack.c.b16 %v859, %v858
    %v874 = vpack.c.b16 %v861, %v860
    %v875 = vpack.c.b16 %v863, %v862
    %v876 = vpack.c.b16 %v865, %v864
    %v877 = vpack.c.b16 %v867, %v866
    %v878 = vpack.c.b16 %v869, %v868
    %v879 = vpack.c.b16 %v871, %v870
    %888 = vmatprep.subr.bf16.mxu0 0
    %889 = vmatpush1.bf16.msra.mxu0 %v879
    %890 = vmatprep.subr.bf16.mxu0 0
    %891 = vmatpush1.bf16.msra.mxu0 %v878
    %892 = vmatprep.subr.bf16.mxu0 0
    %893 = vmatpush1.bf16.msra.mxu0 %v877
    %894 = vmatprep.subr.bf16.mxu0 0
    %895 = vmatpush1.bf16.msra.mxu0 %v876
    %896 = vmatprep.subr.bf16.mxu0 0
    %897 = vmatpush1.bf16.msra.mxu0 %v875
    %898 = vmatprep.subr.bf16.mxu0 0
    %899 = vmatpush1.bf16.msra.mxu0 %v874
    %900 = vmatprep.subr.bf16.mxu0 0
    %901 = vmatpush1.bf16.msra.mxu0 %v873
    %902 = vmatprep.subr.bf16.mxu0 0
    %903 = vmatpush1.bf16.msra.mxu0 %v872
    %904 = vmatprep.subr.bf16.mxu0 0
    %905 = vmatpush2.bf16.msra.mxu0 0
    %906 = vmatprep.subr.bf16.mxu0 0
    %907 = vmatpush2.bf16.msra.mxu0 0
    %908 = vmatprep.subr.bf16.mxu0 0
    %909 = vmatpush2.bf16.msra.mxu0 0
    %910 = vmatprep.subr.bf16.mxu0 0
    %911 = vmatpush2.bf16.msra.mxu0 0
    %912 = vmatprep.subr.bf16.mxu0 0
    %913 = vmatpush2.bf16.msra.mxu0 0
    %914 = vmatprep.subr.bf16.mxu0 0
    %915 = vmatpush2.bf16.msra.mxu0 0
    %916 = vmatprep.subr.bf16.mxu0 0
    %917 = vmatpush2.bf16.msra.mxu0 0
    %918 = vmatprep.subr.bf16.mxu0 0
    %919 = vmatpush2.bf16.msra.mxu0 0
    %920 = vmatprep.mubr.bf16.mxu0 0
    %921 = vmatmul.mubr.bf16.gmra.mxu0 %v816
    %v922 = vpop.f32.mrf.mxu0
    %v923 = vadd.f32 %v838, %v922
    %v924 = vpop.f32.mrf.mxu0
    %v925 = vpop.f32.mrf.mxu0
    %v926 = vadd.f32 %v838, %v925
    %v927 = vpop.f32.mrf.mxu0
    %928 = vdwg.mxu0
    %v929 = vpack.c.bf16 %v926, %v923
    %v931 = vunpack.c.l.s4 1966171168
    %v932 = vunpack.c.0.s8 %v931
    %v933 = vlaneseq
    %v934 = vshrl.u32 %v933, 7
    %v935 = vsub.s32 %v932, %v934
    %v936 = vrot.slane %v923, %v935
    %v938 = vunpack.c.l.s4 1966171168
    %v939 = vunpack.c.0.s8 %v938
    %v940 = vlaneseq
    %v941 = vshrl.u32 %v940, 7
    %v942 = vsub.s32 %v939, %v941
    %v943 = vrot.slane %v926, %v942
    %v946 = vcombine.low %v936, %v943
    %v947 = vcombine.high %v936, %v943
    %v950 = vpack.c.bf16 %v946, %v946
    %v951 = vpack.c.bf16 %v947, %v947
    %v952 = vld [vmem:[#allocation12] sm:$0xf]
    %v953 = vld [vmem:[#allocation12 + $0x4] sm:$0xf]
    %v954 = vld [vmem:[#allocation12 + $0x8] sm:$0xf]
    %v955 = vld [vmem:[#allocation12 + $0xc] sm:$0xf]
    %v956 = vld [vmem:[#allocation12 + $0x10] sm:$0xf]
    %v957 = vld [vmem:[#allocation12 + $0x14] sm:$0xf]
    %v958 = vld [vmem:[#allocation12 + $0x18] sm:$0xf]
    %v959 = vld [vmem:[#allocation12 + $0x1c] sm:$0xf]
    %v960 = vld [vmem:[#allocation12 + $0x20] sm:$0xf]
    %v961 = vld [vmem:[#allocation12 + $0x24] sm:$0xf]
    %v962 = vld [vmem:[#allocation12 + $0x28] sm:$0xf]
    %v963 = vld [vmem:[#allocation12 + $0x2c] sm:$0xf]
    %v964 = vld [vmem:[#allocation12 + $0x30] sm:$0xf]
    %v965 = vld [vmem:[#allocation12 + $0x34] sm:$0xf]
    %v966 = vld [vmem:[#allocation12 + $0x38] sm:$0xf]
    %v967 = vld [vmem:[#allocation12 + $0x3c] sm:$0xf]
    %v968 = vld [vmem:[#allocation12 + $0x40] sm:$0xf]
    %v969 = vld [vmem:[#allocation12 + $0x44] sm:$0xf]
    %v970 = vld [vmem:[#allocation12 + $0x48] sm:$0xf]
    %v971 = vld [vmem:[#allocation12 + $0x4c] sm:$0xf]
    %v972 = vld [vmem:[#allocation12 + $0x50] sm:$0xf]
    %v973 = vld [vmem:[#allocation12 + $0x54] sm:$0xf]
    %v974 = vld [vmem:[#allocation12 + $0x58] sm:$0xf]
    %v975 = vld [vmem:[#allocation12 + $0x5c] sm:$0xf]
    %v976 = vld [vmem:[#allocation12 + $0x60] sm:$0xf]
    %v977 = vld [vmem:[#allocation12 + $0x64] sm:$0xf]
    %v978 = vld [vmem:[#allocation12 + $0x68] sm:$0xf]
    %v979 = vld [vmem:[#allocation12 + $0x6c] sm:$0xf]
    %v980 = vld [vmem:[#allocation12 + $0x70] sm:$0xf]
    %v981 = vld [vmem:[#allocation12 + $0x74] sm:$0xf]
    %v982 = vld [vmem:[#allocation12 + $0x78] sm:$0xf]
    %v983 = vld [vmem:[#allocation12 + $0x7c] sm:$0xf]
    %v984 = vld [vmem:[#allocation13] sm:$0x1]
    %v986 = vlaneseq
    %v987 = vshrl.u32 %v986, 7
    %v988 = vsub.s32 0, %v987
    %v989 = vrot.slane %v984, %v988
    %v1023 = vunpack.c.l.b16 %v952
    %v1024 = vunpack.c.l.b16 %v953
    %v1025 = vunpack.c.l.b16 %v954
    %v1026 = vunpack.c.l.b16 %v955
    %v1027 = vunpack.c.l.b16 %v956
    %v1028 = vunpack.c.l.b16 %v957
    %v1029 = vunpack.c.l.b16 %v958
    %v1030 = vunpack.c.l.b16 %v959
    %v1031 = vunpack.c.l.b16 %v960
    %v1032 = vunpack.c.l.b16 %v961
    %v1033 = vunpack.c.l.b16 %v962
    %v1034 = vunpack.c.l.b16 %v963
    %v1035 = vunpack.c.l.b16 %v964
    %v1036 = vunpack.c.l.b16 %v965
    %v1037 = vunpack.c.l.b16 %v966
    %v1038 = vunpack.c.l.b16 %v967
    %v1039 = vunpack.c.l.b16 %v968
    %v1040 = vunpack.c.l.b16 %v969
    %v1041 = vunpack.c.l.b16 %v970
    %v1042 = vunpack.c.l.b16 %v971
    %v1043 = vunpack.c.l.b16 %v972
    %v1044 = vunpack.c.l.b16 %v973
    %v1045 = vunpack.c.l.b16 %v974
    %v1046 = vunpack.c.l.b16 %v975
    %v1047 = vunpack.c.l.b16 %v976
    %v1048 = vunpack.c.l.b16 %v977
    %v1049 = vunpack.c.l.b16 %v978
    %v1050 = vunpack.c.l.b16 %v979
    %v1051 = vunpack.c.l.b16 %v980
    %v1052 = vunpack.c.l.b16 %v981
    %v1053 = vunpack.c.l.b16 %v982
    %v1054 = vunpack.c.l.b16 %v983
    %v1055 = vpack.c.b16 %v1024, %v1023
    %v1056 = vpack.c.b16 %v1026, %v1025
    %v1057 = vpack.c.b16 %v1028, %v1027
    %v1058 = vpack.c.b16 %v1030, %v1029
    %v1059 = vpack.c.b16 %v1032, %v1031
    %v1060 = vpack.c.b16 %v1034, %v1033
    %v1061 = vpack.c.b16 %v1036, %v1035
    %v1062 = vpack.c.b16 %v1038, %v1037
    %v1063 = vpack.c.b16 %v1040, %v1039
    %v1064 = vpack.c.b16 %v1042, %v1041
    %v1065 = vpack.c.b16 %v1044, %v1043
    %v1066 = vpack.c.b16 %v1046, %v1045
    %v1067 = vpack.c.b16 %v1048, %v1047
    %v1068 = vpack.c.b16 %v1050, %v1049
    %v1069 = vpack.c.b16 %v1052, %v1051
    %v1070 = vpack.c.b16 %v1054, %v1053
    %1087 = vmatprep.subr.bf16.mxu0 0
    %1088 = vmatpush1.bf16.msra.mxu0 %v1062
    %1089 = vmatprep.subr.bf16.mxu0 0
    %1090 = vmatpush1.bf16.msra.mxu0 %v1061
    %1091 = vmatprep.subr.bf16.mxu0 0
    %1092 = vmatpush1.bf16.msra.mxu0 %v1060
    %1093 = vmatprep.subr.bf16.mxu0 0
    %1094 = vmatpush1.bf16.msra.mxu0 %v1059
    %1095 = vmatprep.subr.bf16.mxu0 0
    %1096 = vmatpush1.bf16.msra.mxu0 %v1058
    %1097 = vmatprep.subr.bf16.mxu0 0
    %1098 = vmatpush1.bf16.msra.mxu0 %v1057
    %1099 = vmatprep.subr.bf16.mxu0 0
    %1100 = vmatpush1.bf16.msra.mxu0 %v1056
    %1101 = vmatprep.subr.bf16.mxu0 0
    %1102 = vmatpush1.bf16.msra.mxu0 %v1055
    %1103 = vmatprep.subr.bf16.mxu0 0
    %1104 = vmatpush2.bf16.msra.mxu0 %v1070
    %1105 = vmatprep.subr.bf16.mxu0 0
    %1106 = vmatpush2.bf16.msra.mxu0 %v1069
    %1107 = vmatprep.subr.bf16.mxu0 0
    %1108 = vmatpush2.bf16.msra.mxu0 %v1068
    %1109 = vmatprep.subr.bf16.mxu0 0
    %1110 = vmatpush2.bf16.msra.mxu0 %v1067
    %1111 = vmatprep.subr.bf16.mxu0 0
    %1112 = vmatpush2.bf16.msra.mxu0 %v1066
    %1113 = vmatprep.subr.bf16.mxu0 0
    %1114 = vmatpush2.bf16.msra.mxu0 %v1065
    %1115 = vmatprep.subr.bf16.mxu0 0
    %1116 = vmatpush2.bf16.msra.mxu0 %v1064
    %1117 = vmatprep.subr.bf16.mxu0 0
    %1118 = vmatpush2.bf16.msra.mxu0 %v1063
    %1119 = vmatprep.mubr.bf16.mxu0 %v951
    %1120 = vmatmul.mubr.bf16.gmra.mxu0 %v950
    %v1121 = vpop.f32.mrf.mxu0
    %v1122 = vadd.f32 %v989, %v1121
    %v1123 = vpop.f32.mrf.mxu0
    %v1124 = vpop.f32.mrf.mxu0
    %v1125 = vpop.f32.mrf.mxu0
    %1126 = vdwg.mxu0
    %v1127 = vtanh.pop %v1122
    %v1128 = vpack.c.bf16 %v1127, %v1127
    %v1129 = vld [vmem:[#allocation15] sm:$0xf]
    %v1130 = vld [vmem:[#allocation15 + $0x4] sm:$0xf]
    %v1131 = vld [vmem:[#allocation15 + $0x8] sm:$0xf]
    %v1132 = vld [vmem:[#allocation15 + $0xc] sm:$0xf]
    %v1133 = vld [vmem:[#allocation15 + $0x10] sm:$0xf]
    %v1134 = vld [vmem:[#allocation15 + $0x14] sm:$0xf]
    %v1135 = vld [vmem:[#allocation15 + $0x18] sm:$0xf]
    %v1136 = vld [vmem:[#allocation15 + $0x1c] sm:$0xf]
    %v1137 = vld [vmem:[#allocation15 + $0x20] sm:$0xf]
    %v1138 = vld [vmem:[#allocation15 + $0x24] sm:$0xf]
    %v1139 = vld [vmem:[#allocation15 + $0x28] sm:$0xf]
    %v1140 = vld [vmem:[#allocation15 + $0x2c] sm:$0xf]
    %v1141 = vld [vmem:[#allocation15 + $0x30] sm:$0xf]
    %v1142 = vld [vmem:[#allocation15 + $0x34] sm:$0xf]
    %v1143 = vld [vmem:[#allocation15 + $0x38] sm:$0xf]
    %v1144 = vld [vmem:[#allocation15 + $0x3c] sm:$0xf]
    %v1145 = vld [vmem:[#allocation16] sm:$0x1]
    %v1147 = vlaneseq
    %v1148 = vshrl.u32 %v1147, 7
    %v1149 = vsub.s32 0, %v1148
    %v1150 = vrot.slane %v1145, %v1149
    %v1168 = vunpack.c.l.b16 %v1129
    %v1169 = vunpack.c.l.b16 %v1130
    %v1170 = vunpack.c.l.b16 %v1131
    %v1171 = vunpack.c.l.b16 %v1132
    %v1172 = vunpack.c.l.b16 %v1133
    %v1173 = vunpack.c.l.b16 %v1134
    %v1174 = vunpack.c.l.b16 %v1135
    %v1175 = vunpack.c.l.b16 %v1136
    %v1176 = vunpack.c.l.b16 %v1137
    %v1177 = vunpack.c.l.b16 %v1138
    %v1178 = vunpack.c.l.b16 %v1139
    %v1179 = vunpack.c.l.b16 %v1140
    %v1180 = vunpack.c.l.b16 %v1141
    %v1181 = vunpack.c.l.b16 %v1142
    %v1182 = vunpack.c.l.b16 %v1143
    %v1183 = vunpack.c.l.b16 %v1144
    %v1184 = vpack.c.b16 %v1169, %v1168
    %v1185 = vpack.c.b16 %v1171, %v1170
    %v1186 = vpack.c.b16 %v1173, %v1172
    %v1187 = vpack.c.b16 %v1175, %v1174
    %v1188 = vpack.c.b16 %v1177, %v1176
    %v1189 = vpack.c.b16 %v1179, %v1178
    %v1190 = vpack.c.b16 %v1181, %v1180
    %v1191 = vpack.c.b16 %v1183, %v1182
    %1200 = vmatprep.subr.bf16.mxu0 0
    %1201 = vmatpush1.bf16.msra.mxu0 %v1191
    %1202 = vmatprep.subr.bf16.mxu0 0
    %1203 = vmatpush1.bf16.msra.mxu0 %v1190
    %1204 = vmatprep.subr.bf16.mxu0 0
    %1205 = vmatpush1.bf16.msra.mxu0 %v1189
    %1206 = vmatprep.subr.bf16.mxu0 0
    %1207 = vmatpush1.bf16.msra.mxu0 %v1188
    %1208 = vmatprep.subr.bf16.mxu0 0
    %1209 = vmatpush1.bf16.msra.mxu0 %v1187
    %1210 = vmatprep.subr.bf16.mxu0 0
    %1211 = vmatpush1.bf16.msra.mxu0 %v1186
    %1212 = vmatprep.subr.bf16.mxu0 0
    %1213 = vmatpush1.bf16.msra.mxu0 %v1185
    %1214 = vmatprep.subr.bf16.mxu0 0
    %1215 = vmatpush1.bf16.msra.mxu0 %v1184
    %1216 = vmatprep.subr.bf16.mxu0 0
    %1217 = vmatpush2.bf16.msra.mxu0 0
    %1218 = vmatprep.subr.bf16.mxu0 0
    %1219 = vmatpush2.bf16.msra.mxu0 0
    %1220 = vmatprep.subr.bf16.mxu0 0
    %1221 = vmatpush2.bf16.msra.mxu0 0
    %1222 = vmatprep.subr.bf16.mxu0 0
    %1223 = vmatpush2.bf16.msra.mxu0 0
    %1224 = vmatprep.subr.bf16.mxu0 0
    %1225 = vmatpush2.bf16.msra.mxu0 0
    %1226 = vmatprep.subr.bf16.mxu0 0
    %1227 = vmatpush2.bf16.msra.mxu0 0
    %1228 = vmatprep.subr.bf16.mxu0 0
    %1229 = vmatpush2.bf16.msra.mxu0 0
    %1230 = vmatprep.subr.bf16.mxu0 0
    %1231 = vmatpush2.bf16.msra.mxu0 0
    %1232 = vmatprep.mubr.bf16.mxu0 0
    %1233 = vmatmul.mubr.bf16.gmra.mxu0 %v1128
    %v1234 = vpop.f32.mrf.mxu0
    %v1235 = vadd.f32 %v1150, %v1234
    %v1236 = vpop.f32.mrf.mxu0
    %v1237 = vpop.f32.mrf.mxu0
    %v1238 = vpop.f32.mrf.mxu0
    %1239 = vdwg.mxu0
    %v1240 = vpack.c.bf16 %v1235, %v1235
    %v1241 = vld [vmem:[#allocation18] sm:$0xf]
    %v1242 = vld [vmem:[#allocation18 + $0x4] sm:$0xf]
    %v1243 = vld [vmem:[#allocation18 + $0x8] sm:$0xf]
    %v1244 = vld [vmem:[#allocation18 + $0xc] sm:$0xf]
    %v1245 = vld [vmem:[#allocation18 + $0x10] sm:$0xf]
    %v1246 = vld [vmem:[#allocation18 + $0x14] sm:$0xf]
    %v1247 = vld [vmem:[#allocation18 + $0x18] sm:$0xf]
    %v1248 = vld [vmem:[#allocation18 + $0x1c] sm:$0xf]
    %v1249 = vld [vmem:[#allocation18 + $0x20] sm:$0xf]
    %v1250 = vld [vmem:[#allocation18 + $0x24] sm:$0xf]
    %v1251 = vld [vmem:[#allocation18 + $0x28] sm:$0xf]
    %v1252 = vld [vmem:[#allocation18 + $0x2c] sm:$0xf]
    %v1253 = vld [vmem:[#allocation18 + $0x30] sm:$0xf]
    %v1254 = vld [vmem:[#allocation18 + $0x34] sm:$0xf]
    %v1255 = vld [vmem:[#allocation18 + $0x38] sm:$0xf]
    %v1256 = vld [vmem:[#allocation18 + $0x3c] sm:$0xf]
    %v1257 = vld [vmem:[#allocation19] sm:$0x1]
    %v1259 = vlaneseq
    %v1260 = vshrl.u32 %v1259, 7
    %v1261 = vsub.s32 0, %v1260
    %v1262 = vrot.slane %v1257, %v1261
    %v1280 = vunpack.c.l.b16 %v1241
    %v1281 = vunpack.c.l.b16 %v1242
    %v1282 = vunpack.c.l.b16 %v1243
    %v1283 = vunpack.c.l.b16 %v1244
    %v1284 = vunpack.c.l.b16 %v1245
    %v1285 = vunpack.c.l.b16 %v1246
    %v1286 = vunpack.c.l.b16 %v1247
    %v1287 = vunpack.c.l.b16 %v1248
    %v1288 = vunpack.c.l.b16 %v1249
    %v1289 = vunpack.c.l.b16 %v1250
    %v1290 = vunpack.c.l.b16 %v1251
    %v1291 = vunpack.c.l.b16 %v1252
    %v1292 = vunpack.c.l.b16 %v1253
    %v1293 = vunpack.c.l.b16 %v1254
    %v1294 = vunpack.c.l.b16 %v1255
    %v1295 = vunpack.c.l.b16 %v1256
    %v1296 = vpack.c.b16 %v1281, %v1280
    %v1297 = vpack.c.b16 %v1283, %v1282
    %v1298 = vpack.c.b16 %v1285, %v1284
    %v1299 = vpack.c.b16 %v1287, %v1286
    %v1300 = vpack.c.b16 %v1289, %v1288
    %v1301 = vpack.c.b16 %v1291, %v1290
    %v1302 = vpack.c.b16 %v1293, %v1292
    %v1303 = vpack.c.b16 %v1295, %v1294
    %1312 = vmatprep.subr.bf16.mxu0 0
    %1313 = vmatpush1.bf16.msra.mxu0 %v1303
    %1314 = vmatprep.subr.bf16.mxu0 0
    %1315 = vmatpush1.bf16.msra.mxu0 %v1302
    %1316 = vmatprep.subr.bf16.mxu0 0
    %1317 = vmatpush1.bf16.msra.mxu0 %v1301
    %1318 = vmatprep.subr.bf16.mxu0 0
    %1319 = vmatpush1.bf16.msra.mxu0 %v1300
    %1320 = vmatprep.subr.bf16.mxu0 0
    %1321 = vmatpush1.bf16.msra.mxu0 %v1299
    %1322 = vmatprep.subr.bf16.mxu0 0
    %1323 = vmatpush1.bf16.msra.mxu0 %v1298
    %1324 = vmatprep.subr.bf16.mxu0 0
    %1325 = vmatpush1.bf16.msra.mxu0 %v1297
    %1326 = vmatprep.subr.bf16.mxu0 0
    %1327 = vmatpush1.bf16.msra.mxu0 %v1296
    %1328 = vmatprep.subr.bf16.mxu0 0
    %1329 = vmatpush2.bf16.msra.mxu0 0
    %1330 = vmatprep.subr.bf16.mxu0 0
    %1331 = vmatpush2.bf16.msra.mxu0 0
    %1332 = vmatprep.subr.bf16.mxu0 0
    %1333 = vmatpush2.bf16.msra.mxu0 0
    %1334 = vmatprep.subr.bf16.mxu0 0
    %1335 = vmatpush2.bf16.msra.mxu0 0
    %1336 = vmatprep.subr.bf16.mxu0 0
    %1337 = vmatpush2.bf16.msra.mxu0 0
    %1338 = vmatprep.subr.bf16.mxu0 0
    %1339 = vmatpush2.bf16.msra.mxu0 0
    %1340 = vmatprep.subr.bf16.mxu0 0
    %1341 = vmatpush2.bf16.msra.mxu0 0
    %1342 = vmatprep.subr.bf16.mxu0 0
    %1343 = vmatpush2.bf16.msra.mxu0 0
    %1344 = vmatprep.mubr.bf16.mxu0 0
    %1345 = vmatmul.mubr.bf16.gmra.mxu0 %v1240
    %v1346 = vpop.f32.mrf.mxu0
    %v1347 = vadd.f32 %v1262, %v1346
    %v1348 = vpop.f32.mrf.mxu0
    %v1349 = vpop.f32.mrf.mxu0
    %v1350 = vpop.f32.mrf.mxu0
    %1351 = vdwg.mxu0
    %v1352 = vtanh.pop %v1347
    %v1353 = vpack.c.bf16 %v1352, %v1352
    %v1354 = vld [vmem:[#allocation21] sm:$0xff]
    %v1355 = vld [vmem:[#allocation21 + $0x8] sm:$0xff]
    %v1356 = vld [vmem:[#allocation21 + $0x10] sm:$0xff]
    %v1357 = vld [vmem:[#allocation21 + $0x18] sm:$0xff]
    %v1358 = vld [vmem:[#allocation21 + $0x20] sm:$0xff]
    %v1359 = vld [vmem:[#allocation21 + $0x28] sm:$0xff]
    %v1360 = vld [vmem:[#allocation21 + $0x30] sm:$0xff]
    %v1361 = vld [vmem:[#allocation21 + $0x38] sm:$0xff]
    %v1362 = vld [vmem:[#allocation21 + $0x40] sm:$0xff]
    %v1363 = vld [vmem:[#allocation21 + $0x48] sm:$0xff]
    %v1364 = vld [vmem:[#allocation21 + $0x50] sm:$0xff]
    %v1365 = vld [vmem:[#allocation21 + $0x58] sm:$0xff]
    %v1366 = vld [vmem:[#allocation21 + $0x60] sm:$0xff]
    %v1367 = vld [vmem:[#allocation21 + $0x68] sm:$0xff]
    %v1368 = vld [vmem:[#allocation21 + $0x70] sm:$0xff]
    %v1369 = vld [vmem:[#allocation21 + $0x78] sm:$0xff]
    %v1370 = vld [vmem:[#allocation22] sm:$0x3]
    %v1372 = vlaneseq
    %v1373 = vshrl.u32 %v1372, 7
    %v1374 = vsub.s32 0, %v1373
    %v1375 = vrot.slane %v1370, %v1374
    %v1376 = vlaneseq
    %v1377 = vshrl.u32 %v1376, 7
    %v1378 = vsub.s32 1, %v1377
    %v1379 = vrot.slane %v1370, %v1378
    %v1398 = vunpack.c.l.b16 %v1354
    %v1399 = vunpack.c.h.b16 %v1354
    %v1400 = vunpack.c.l.b16 %v1355
    %v1401 = vunpack.c.h.b16 %v1355
    %v1402 = vunpack.c.l.b16 %v1356
    %v1403 = vunpack.c.h.b16 %v1356
    %v1404 = vunpack.c.l.b16 %v1357
    %v1405 = vunpack.c.h.b16 %v1357
    %v1406 = vunpack.c.l.b16 %v1358
    %v1407 = vunpack.c.h.b16 %v1358
    %v1408 = vunpack.c.l.b16 %v1359
    %v1409 = vunpack.c.h.b16 %v1359
    %v1410 = vunpack.c.l.b16 %v1360
    %v1411 = vunpack.c.h.b16 %v1360
    %v1412 = vunpack.c.l.b16 %v1361
    %v1413 = vunpack.c.h.b16 %v1361
    %v1414 = vunpack.c.l.b16 %v1362
    %v1415 = vunpack.c.h.b16 %v1362
    %v1416 = vunpack.c.l.b16 %v1363
    %v1417 = vunpack.c.h.b16 %v1363
    %v1418 = vunpack.c.l.b16 %v1364
    %v1419 = vunpack.c.h.b16 %v1364
    %v1420 = vunpack.c.l.b16 %v1365
    %v1421 = vunpack.c.h.b16 %v1365
    %v1422 = vunpack.c.l.b16 %v1366
    %v1423 = vunpack.c.h.b16 %v1366
    %v1424 = vunpack.c.l.b16 %v1367
    %v1425 = vunpack.c.h.b16 %v1367
    %v1426 = vunpack.c.l.b16 %v1368
    %v1427 = vunpack.c.h.b16 %v1368
    %v1428 = vunpack.c.l.b16 %v1369
    %v1429 = vunpack.c.h.b16 %v1369
    %v1430 = vpack.c.b16 %v1400, %v1398
    %v1431 = vpack.c.b16 %v1401, %v1399
    %v1432 = vpack.c.b16 %v1404, %v1402
    %v1433 = vpack.c.b16 %v1405, %v1403
    %v1434 = vpack.c.b16 %v1408, %v1406
    %v1435 = vpack.c.b16 %v1409, %v1407
    %v1436 = vpack.c.b16 %v1412, %v1410
    %v1437 = vpack.c.b16 %v1413, %v1411
    %v1438 = vpack.c.b16 %v1416, %v1414
    %v1439 = vpack.c.b16 %v1417, %v1415
    %v1440 = vpack.c.b16 %v1420, %v1418
    %v1441 = vpack.c.b16 %v1421, %v1419
    %v1442 = vpack.c.b16 %v1424, %v1422
    %v1443 = vpack.c.b16 %v1425, %v1423
    %v1444 = vpack.c.b16 %v1428, %v1426
    %v1445 = vpack.c.b16 %v1429, %v1427
    %1462 = vmatprep.subr.bf16.mxu0 %v1445
    %1463 = vmatpush1.bf16.msra.mxu0 %v1444
    %1464 = vmatprep.subr.bf16.mxu0 %v1443
    %1465 = vmatpush1.bf16.msra.mxu0 %v1442
    %1466 = vmatprep.subr.bf16.mxu0 %v1441
    %1467 = vmatpush1.bf16.msra.mxu0 %v1440
    %1468 = vmatprep.subr.bf16.mxu0 %v1439
    %1469 = vmatpush1.bf16.msra.mxu0 %v1438
    %1470 = vmatprep.subr.bf16.mxu0 %v1437
    %1471 = vmatpush1.bf16.msra.mxu0 %v1436
    %1472 = vmatprep.subr.bf16.mxu0 %v1435
    %1473 = vmatpush1.bf16.msra.mxu0 %v1434
    %1474 = vmatprep.subr.bf16.mxu0 %v1433
    %1475 = vmatpush1.bf16.msra.mxu0 %v1432
    %1476 = vmatprep.subr.bf16.mxu0 %v1431
    %1477 = vmatpush1.bf16.msra.mxu0 %v1430
    %1478 = vmatprep.subr.bf16.mxu0 0
    %1479 = vmatpush2.bf16.msra.mxu0 0
    %1480 = vmatprep.subr.bf16.mxu0 0
    %1481 = vmatpush2.bf16.msra.mxu0 0
    %1482 = vmatprep.subr.bf16.mxu0 0
    %1483 = vmatpush2.bf16.msra.mxu0 0
    %1484 = vmatprep.subr.bf16.mxu0 0
    %1485 = vmatpush2.bf16.msra.mxu0 0
    %1486 = vmatprep.subr.bf16.mxu0 0
    %1487 = vmatpush2.bf16.msra.mxu0 0
    %1488 = vmatprep.subr.bf16.mxu0 0
    %1489 = vmatpush2.bf16.msra.mxu0 0
    %1490 = vmatprep.subr.bf16.mxu0 0
    %1491 = vmatpush2.bf16.msra.mxu0 0
    %1492 = vmatprep.subr.bf16.mxu0 0
    %1493 = vmatpush2.bf16.msra.mxu0 0
    %1494 = vmatprep.mubr.bf16.mxu0 0
    %1495 = vmatmul.mubr.bf16.gmra.mxu0 %v1353
    %v1496 = vpop.f32.mrf.mxu0
    %v1497 = vadd.f32 %v1375, %v1496
    %v1498 = vpop.f32.mrf.mxu0
    %v1499 = vadd.f32 %v1379, %v1498
    %v1500 = vpop.f32.mrf.mxu0
    %v1501 = vpop.f32.mrf.mxu0
    %1502 = vdwg.mxu0
    %v1505 = vcombine.low %v1497, %v1499
    %v1506 = vcombine.high %v1497, %v1499
    %v1510 = vunpack.c.l.s4 1935823168
    %v1511 = vunpack.c.0.s8 %v1510
    %v1512 = vlaneseq
    %v1513 = vshrl.u32 %v1512, 7
    %v1514 = vsub.s32 %v1511, %v1513
    %v1515 = vrot.slane %v1505, %v1514
    %v1517 = vunpack.c.l.s4 1935823168
    %v1518 = vunpack.c.0.s8 %v1517
    %v1519 = vlaneseq
    %v1520 = vshrl.u32 %v1519, 7
    %v1521 = vsub.s32 %v1518, %v1520
    %v1522 = vrot.slane %v1506, %v1521
    %v1523 = vunpack.c.l.bf16 %v929
    %v1524 = vunpack.c.h.bf16 %v929
    %v1525 = vadd.f32 %v1515, %v1523
    %v1526 = vadd.f32 %v1522, %v1524
    %v1527 = vpack.c.bf16 %v1526, %v1525
    %v1528 = vld [vmem:[#allocation24] sm:$0xf]
    %v1529 = vld [vmem:[#allocation24 + $0x4] sm:$0xf]
    %v1530 = vld [vmem:[#allocation24 + $0x8] sm:$0xf]
    %v1531 = vld [vmem:[#allocation24 + $0xc] sm:$0xf]
    %v1532 = vld [vmem:[#allocation24 + $0x10] sm:$0xf]
    %v1533 = vld [vmem:[#allocation24 + $0x14] sm:$0xf]
    %v1534 = vld [vmem:[#allocation24 + $0x18] sm:$0xf]
    %v1535 = vld [vmem:[#allocation24 + $0x1c] sm:$0xf]
    %v1536 = vld [vmem:[#allocation24 + $0x20] sm:$0xf]
    %v1537 = vld [vmem:[#allocation24 + $0x24] sm:$0xf]
    %v1538 = vld [vmem:[#allocation24 + $0x28] sm:$0xf]
    %v1539 = vld [vmem:[#allocation24 + $0x2c] sm:$0xf]
    %v1540 = vld [vmem:[#allocation24 + $0x30] sm:$0xf]
    %v1541 = vld [vmem:[#allocation24 + $0x34] sm:$0xf]
    %v1542 = vld [vmem:[#allocation24 + $0x38] sm:$0xf]
    %v1543 = vld [vmem:[#allocation24 + $0x3c] sm:$0xf]
    %v1544 = vld [vmem:[#allocation25] sm:$0x1]
    %v1546 = vlaneseq
    %v1547 = vshrl.u32 %v1546, 7
    %v1548 = vsub.s32 0, %v1547
    %v1549 = vrot.slane %v1544, %v1548
    %v1567 = vunpack.c.l.b16 %v1528
    %v1568 = vunpack.c.l.b16 %v1529
    %v1569 = vunpack.c.l.b16 %v1530
    %v1570 = vunpack.c.l.b16 %v1531
    %v1571 = vunpack.c.l.b16 %v1532
    %v1572 = vunpack.c.l.b16 %v1533
    %v1573 = vunpack.c.l.b16 %v1534
    %v1574 = vunpack.c.l.b16 %v1535
    %v1575 = vunpack.c.l.b16 %v1536
    %v1576 = vunpack.c.l.b16 %v1537
    %v1577 = vunpack.c.l.b16 %v1538
    %v1578 = vunpack.c.l.b16 %v1539
    %v1579 = vunpack.c.l.b16 %v1540
    %v1580 = vunpack.c.l.b16 %v1541
    %v1581 = vunpack.c.l.b16 %v1542
    %v1582 = vunpack.c.l.b16 %v1543
    %v1583 = vpack.c.b16 %v1568, %v1567
    %v1584 = vpack.c.b16 %v1570, %v1569
    %v1585 = vpack.c.b16 %v1572, %v1571
    %v1586 = vpack.c.b16 %v1574, %v1573
    %v1587 = vpack.c.b16 %v1576, %v1575
    %v1588 = vpack.c.b16 %v1578, %v1577
    %v1589 = vpack.c.b16 %v1580, %v1579
    %v1590 = vpack.c.b16 %v1582, %v1581
    %1599 = vmatprep.subr.bf16.mxu0 0
    %1600 = vmatpush1.bf16.msra.mxu0 %v1590
    %1601 = vmatprep.subr.bf16.mxu0 0
    %1602 = vmatpush1.bf16.msra.mxu0 %v1589
    %1603 = vmatprep.subr.bf16.mxu0 0
    %1604 = vmatpush1.bf16.msra.mxu0 %v1588
    %1605 = vmatprep.subr.bf16.mxu0 0
    %1606 = vmatpush1.bf16.msra.mxu0 %v1587
    %1607 = vmatprep.subr.bf16.mxu0 0
    %1608 = vmatpush1.bf16.msra.mxu0 %v1586
    %1609 = vmatprep.subr.bf16.mxu0 0
    %1610 = vmatpush1.bf16.msra.mxu0 %v1585
    %1611 = vmatprep.subr.bf16.mxu0 0
    %1612 = vmatpush1.bf16.msra.mxu0 %v1584
    %1613 = vmatprep.subr.bf16.mxu0 0
    %1614 = vmatpush1.bf16.msra.mxu0 %v1583
    %1615 = vmatprep.subr.bf16.mxu0 0
    %1616 = vmatpush2.bf16.msra.mxu0 0
    %1617 = vmatprep.subr.bf16.mxu0 0
    %1618 = vmatpush2.bf16.msra.mxu0 0
    %1619 = vmatprep.subr.bf16.mxu0 0
    %1620 = vmatpush2.bf16.msra.mxu0 0
    %1621 = vmatprep.subr.bf16.mxu0 0
    %1622 = vmatpush2.bf16.msra.mxu0 0
    %1623 = vmatprep.subr.bf16.mxu0 0
    %1624 = vmatpush2.bf16.msra.mxu0 0
    %1625 = vmatprep.subr.bf16.mxu0 0
    %1626 = vmatpush2.bf16.msra.mxu0 0
    %1627 = vmatprep.subr.bf16.mxu0 0
    %1628 = vmatpush2.bf16.msra.mxu0 0
    %1629 = vmatprep.subr.bf16.mxu0 0
    %1630 = vmatpush2.bf16.msra.mxu0 0
    %1631 = vmatprep.mubr.bf16.mxu0 0
    %1632 = vmatmul.mubr.bf16.gmra.mxu0 %v1527
    %v1633 = vpop.f32.mrf.mxu0
    %v1634 = vadd.f32 %v1549, %v1633
    %v1635 = vpop.f32.mrf.mxu0
    %v1636 = vpop.f32.mrf.mxu0
    %v1637 = vadd.f32 %v1549, %v1636
    %v1638 = vpop.f32.mrf.mxu0
    %1639 = vdwg.mxu0
    %v1640 = vtanh.pop %v1634
    %v1641 = vtanh.pop %v1637
    %v1642 = vpack.c.bf16 %v1641, %v1640
    %v1643 = vld [vmem:[#allocation27] sm:$0xff]
    %v1644 = vld [vmem:[#allocation27 + $0x8] sm:$0xff]
    %v1645 = vld [vmem:[#allocation27 + $0x10] sm:$0xff]
    %v1646 = vld [vmem:[#allocation27 + $0x18] sm:$0xff]
    %v1647 = vld [vmem:[#allocation27 + $0x20] sm:$0xff]
    %v1648 = vld [vmem:[#allocation27 + $0x28] sm:$0xff]
    %v1649 = vld [vmem:[#allocation27 + $0x30] sm:$0xff]
    %v1650 = vld [vmem:[#allocation27 + $0x38] sm:$0xff]
    %v1651 = vld [vmem:[#allocation27 + $0x40] sm:$0xff]
    %v1652 = vld [vmem:[#allocation27 + $0x48] sm:$0xff]
    %v1653 = vld [vmem:[#allocation27 + $0x50] sm:$0xff]
    %v1654 = vld [vmem:[#allocation27 + $0x58] sm:$0xff]
    %v1655 = vld [vmem:[#allocation27 + $0x60] sm:$0xff]
    %v1656 = vld [vmem:[#allocation27 + $0x68] sm:$0xff]
    %v1657 = vld [vmem:[#allocation27 + $0x70] sm:$0xff]
    %v1658 = vld [vmem:[#allocation27 + $0x78] sm:$0xff]
    %v1659 = vld [vmem:[#allocation28] sm:$0x3]
    %v1661 = vlaneseq
    %v1662 = vshrl.u32 %v1661, 7
    %v1663 = vsub.s32 0, %v1662
    %v1664 = vrot.slane %v1659, %v1663
    %v1665 = vlaneseq
    %v1666 = vshrl.u32 %v1665, 7
    %v1667 = vsub.s32 1, %v1666
    %v1668 = vrot.slane %v1659, %v1667
    %v1687 = vunpack.c.l.b16 %v1643
    %v1688 = vunpack.c.h.b16 %v1643
    %v1689 = vunpack.c.l.b16 %v1644
    %v1690 = vunpack.c.h.b16 %v1644
    %v1691 = vunpack.c.l.b16 %v1645
    %v1692 = vunpack.c.h.b16 %v1645
    %v1693 = vunpack.c.l.b16 %v1646
    %v1694 = vunpack.c.h.b16 %v1646
    %v1695 = vunpack.c.l.b16 %v1647
    %v1696 = vunpack.c.h.b16 %v1647
    %v1697 = vunpack.c.l.b16 %v1648
    %v1698 = vunpack.c.h.b16 %v1648
    %v1699 = vunpack.c.l.b16 %v1649
    %v1700 = vunpack.c.h.b16 %v1649
    %v1701 = vunpack.c.l.b16 %v1650
    %v1702 = vunpack.c.h.b16 %v1650
    %v1703 = vunpack.c.l.b16 %v1651
    %v1704 = vunpack.c.h.b16 %v1651
    %v1705 = vunpack.c.l.b16 %v1652
    %v1706 = vunpack.c.h.b16 %v1652
    %v1707 = vunpack.c.l.b16 %v1653
    %v1708 = vunpack.c.h.b16 %v1653
    %v1709 = vunpack.c.l.b16 %v1654
    %v1710 = vunpack.c.h.b16 %v1654
    %v1711 = vunpack.c.l.b16 %v1655
    %v1712 = vunpack.c.h.b16 %v1655
    %v1713 = vunpack.c.l.b16 %v1656
    %v1714 = vunpack.c.h.b16 %v1656
    %v1715 = vunpack.c.l.b16 %v1657
    %v1716 = vunpack.c.h.b16 %v1657
    %v1717 = vunpack.c.l.b16 %v1658
    %v1718 = vunpack.c.h.b16 %v1658
    %v1719 = vpack.c.b16 %v1689, %v1687
    %v1720 = vpack.c.b16 %v1690, %v1688
    %v1721 = vpack.c.b16 %v1693, %v1691
    %v1722 = vpack.c.b16 %v1694, %v1692
    %v1723 = vpack.c.b16 %v1697, %v1695
    %v1724 = vpack.c.b16 %v1698, %v1696
    %v1725 = vpack.c.b16 %v1701, %v1699
    %v1726 = vpack.c.b16 %v1702, %v1700
    %v1727 = vpack.c.b16 %v1705, %v1703
    %v1728 = vpack.c.b16 %v1706, %v1704
    %v1729 = vpack.c.b16 %v1709, %v1707
    %v1730 = vpack.c.b16 %v1710, %v1708
    %v1731 = vpack.c.b16 %v1713, %v1711
    %v1732 = vpack.c.b16 %v1714, %v1712
    %v1733 = vpack.c.b16 %v1717, %v1715
    %v1734 = vpack.c.b16 %v1718, %v1716
    %1751 = vmatprep.subr.bf16.mxu0 %v1734
    %1752 = vmatpush1.bf16.msra.mxu0 %v1733
    %1753 = vmatprep.subr.bf16.mxu0 %v1732
    %1754 = vmatpush1.bf16.msra.mxu0 %v1731
    %1755 = vmatprep.subr.bf16.mxu0 %v1730
    %1756 = vmatpush1.bf16.msra.mxu0 %v1729
    %1757 = vmatprep.subr.bf16.mxu0 %v1728
    %1758 = vmatpush1.bf16.msra.mxu0 %v1727
    %1759 = vmatprep.subr.bf16.mxu0 %v1726
    %1760 = vmatpush1.bf16.msra.mxu0 %v1725
    %1761 = vmatprep.subr.bf16.mxu0 %v1724
    %1762 = vmatpush1.bf16.msra.mxu0 %v1723
    %1763 = vmatprep.subr.bf16.mxu0 %v1722
    %1764 = vmatpush1.bf16.msra.mxu0 %v1721
    %1765 = vmatprep.subr.bf16.mxu0 %v1720
    %1766 = vmatpush1.bf16.msra.mxu0 %v1719
    %1767 = vmatprep.subr.bf16.mxu0 0
    %1768 = vmatpush2.bf16.msra.mxu0 0
    %1769 = vmatprep.subr.bf16.mxu0 0
    %1770 = vmatpush2.bf16.msra.mxu0 0
    %1771 = vmatprep.subr.bf16.mxu0 0
    %1772 = vmatpush2.bf16.msra.mxu0 0
    %1773 = vmatprep.subr.bf16.mxu0 0
    %1774 = vmatpush2.bf16.msra.mxu0 0
    %1775 = vmatprep.subr.bf16.mxu0 0
    %1776 = vmatpush2.bf16.msra.mxu0 0
    %1777 = vmatprep.subr.bf16.mxu0 0
    %1778 = vmatpush2.bf16.msra.mxu0 0
    %1779 = vmatprep.subr.bf16.mxu0 0
    %1780 = vmatpush2.bf16.msra.mxu0 0
    %1781 = vmatprep.subr.bf16.mxu0 0
    %1782 = vmatpush2.bf16.msra.mxu0 0
    %1783 = vmatprep.mubr.bf16.mxu0 0
    %1784 = vmatmul.mubr.bf16.gmra.mxu0 %v1642
    %v1785 = vpop.f32.mrf.mxu0
    %v1786 = vadd.f32 %v1664, %v1785
    %v1787 = vpop.f32.mrf.mxu0
    %v1788 = vadd.f32 %v1668, %v1787
    %v1789 = vpop.f32.mrf.mxu0
    %v1790 = vadd.f32 %v1664, %v1789
    %v1791 = vpop.f32.mrf.mxu0
    %v1792 = vadd.f32 %v1668, %v1791
    %1793 = vdwg.mxu0
    %v1798 = vcombine.low %v1786, %v1788
    %v1799 = vcombine.high %v1786, %v1788
    %v1800 = vcombine.low %v1790, %v1792
    %v1801 = vcombine.high %v1790, %v1792
    %v1807 = vunpack.c.l.s4 1935823168
    %v1808 = vunpack.c.0.s8 %v1807
    %v1809 = vlaneseq
    %v1810 = vshrl.u32 %v1809, 7
    %v1811 = vsub.s32 %v1808, %v1810
    %v1812 = vrot.slane %v1798, %v1811
    %v1814 = vunpack.c.l.s4 1935823168
    %v1815 = vunpack.c.0.s8 %v1814
    %v1816 = vlaneseq
    %v1817 = vshrl.u32 %v1816, 7
    %v1818 = vsub.s32 %v1815, %v1817
    %v1819 = vrot.slane %v1799, %v1818
    %v1821 = vunpack.c.l.s4 1935823168
    %v1822 = vunpack.c.0.s8 %v1821
    %v1823 = vlaneseq
    %v1824 = vshrl.u32 %v1823, 7
    %v1825 = vsub.s32 %v1822, %v1824
    %v1826 = vrot.slane %v1800, %v1825
    %v1828 = vunpack.c.l.s4 1935823168
    %v1829 = vunpack.c.0.s8 %v1828
    %v1830 = vlaneseq
    %v1831 = vshrl.u32 %v1830, 7
    %v1832 = vsub.s32 %v1829, %v1831
    %v1833 = vrot.slane %v1801, %v1832
    %v1834 = vunpack.c.l.bf16 %v594
    %v1835 = vunpack.c.h.bf16 %v594
    %v1836 = vunpack.c.l.bf16 %v595
    %v1837 = vunpack.c.h.bf16 %v595
    %v1838 = vadd.f32 %v1812, %v1834
    %v1839 = vadd.f32 %v1819, %v1835
    %v1840 = vadd.f32 %v1826, %v1836
    %v1841 = vadd.f32 %v1833, %v1837
    %v1842 = vpack.c.bf16 %v1839, %v1838
    %v1843 = vpack.c.bf16 %v1841, %v1840
    %v1844 = vld [vmem:[#allocation30] sm:$0xf]
    %v1845 = vld [vmem:[#allocation30 + $0x4] sm:$0xf]
    %v1846 = vld [vmem:[#allocation30 + $0x8] sm:$0xf]
    %v1847 = vld [vmem:[#allocation30 + $0xc] sm:$0xf]
    %v1848 = vld [vmem:[#allocation30 + $0x10] sm:$0xf]
    %v1849 = vld [vmem:[#allocation30 + $0x14] sm:$0xf]
    %v1850 = vld [vmem:[#allocation30 + $0x18] sm:$0xf]
    %v1851 = vld [vmem:[#allocation30 + $0x1c] sm:$0xf]
    %v1852 = vld [vmem:[#allocation30 + $0x20] sm:$0xf]
    %v1853 = vld [vmem:[#allocation30 + $0x24] sm:$0xf]
    %v1854 = vld [vmem:[#allocation30 + $0x28] sm:$0xf]
    %v1855 = vld [vmem:[#allocation30 + $0x2c] sm:$0xf]
    %v1856 = vld [vmem:[#allocation30 + $0x30] sm:$0xf]
    %v1857 = vld [vmem:[#allocation30 + $0x34] sm:$0xf]
    %v1858 = vld [vmem:[#allocation30 + $0x38] sm:$0xf]
    %v1859 = vld [vmem:[#allocation30 + $0x3c] sm:$0xf]
    %v1860 = vld [vmem:[#allocation31] sm:$0x1]
    %v1862 = vlaneseq
    %v1863 = vshrl.u32 %v1862, 7
    %v1864 = vsub.s32 0, %v1863
    %v1865 = vrot.slane %v1860, %v1864
    %v1883 = vunpack.c.l.b16 %v1844
    %v1884 = vunpack.c.l.b16 %v1845
    %v1885 = vunpack.c.l.b16 %v1846
    %v1886 = vunpack.c.l.b16 %v1847
    %v1887 = vunpack.c.l.b16 %v1848
    %v1888 = vunpack.c.l.b16 %v1849
    %v1889 = vunpack.c.l.b16 %v1850
    %v1890 = vunpack.c.l.b16 %v1851
    %v1891 = vunpack.c.l.b16 %v1852
    %v1892 = vunpack.c.l.b16 %v1853
    %v1893 = vunpack.c.l.b16 %v1854
    %v1894 = vunpack.c.l.b16 %v1855
    %v1895 = vunpack.c.l.b16 %v1856
    %v1896 = vunpack.c.l.b16 %v1857
    %v1897 = vunpack.c.l.b16 %v1858
    %v1898 = vunpack.c.l.b16 %v1859
    %v1899 = vpack.c.b16 %v1884, %v1883
    %v1900 = vpack.c.b16 %v1886, %v1885
    %v1901 = vpack.c.b16 %v1888, %v1887
    %v1902 = vpack.c.b16 %v1890, %v1889
    %v1903 = vpack.c.b16 %v1892, %v1891
    %v1904 = vpack.c.b16 %v1894, %v1893
    %v1905 = vpack.c.b16 %v1896, %v1895
    %v1906 = vpack.c.b16 %v1898, %v1897
    %1915 = vmatprep.subr.bf16.mxu0 0
    %1916 = vmatpush1.bf16.msra.mxu0 %v1906
    %1917 = vmatprep.subr.bf16.mxu0 0
    %1918 = vmatpush1.bf16.msra.mxu0 %v1905
    %1919 = vmatprep.subr.bf16.mxu0 0
    %1920 = vmatpush1.bf16.msra.mxu0 %v1904
    %1921 = vmatprep.subr.bf16.mxu0 0
    %1922 = vmatpush1.bf16.msra.mxu0 %v1903
    %1923 = vmatprep.subr.bf16.mxu0 0
    %1924 = vmatpush1.bf16.msra.mxu0 %v1902
    %1925 = vmatprep.subr.bf16.mxu0 0
    %1926 = vmatpush1.bf16.msra.mxu0 %v1901
    %1927 = vmatprep.subr.bf16.mxu0 0
    %1928 = vmatpush1.bf16.msra.mxu0 %v1900
    %1929 = vmatprep.subr.bf16.mxu0 0
    %1930 = vmatpush1.bf16.msra.mxu0 %v1899
    %1931 = vmatprep.subr.bf16.mxu0 0
    %1932 = vmatpush2.bf16.msra.mxu0 0
    %1933 = vmatprep.subr.bf16.mxu0 0
    %1934 = vmatpush2.bf16.msra.mxu0 0
    %1935 = vmatprep.subr.bf16.mxu0 0
    %1936 = vmatpush2.bf16.msra.mxu0 0
    %1937 = vmatprep.subr.bf16.mxu0 0
    %1938 = vmatpush2.bf16.msra.mxu0 0
    %1939 = vmatprep.subr.bf16.mxu0 0
    %1940 = vmatpush2.bf16.msra.mxu0 0
    %1941 = vmatprep.subr.bf16.mxu0 0
    %1942 = vmatpush2.bf16.msra.mxu0 0
    %1943 = vmatprep.subr.bf16.mxu0 0
    %1944 = vmatpush2.bf16.msra.mxu0 0
    %1945 = vmatprep.subr.bf16.mxu0 0
    %1946 = vmatpush2.bf16.msra.mxu0 0
    %1947 = vmatprep.mubr.bf16.mxu0 0
    %1948 = vmatmul.mubr.bf16.gmra.mxu0 %v1842
    %v1949 = vpop.f32.mrf.mxu0
    %v1950 = vadd.f32 %v1865, %v1949
    %v1951 = vpop.f32.mrf.mxu0
    %v1952 = vpop.f32.mrf.mxu0
    %v1953 = vadd.f32 %v1865, %v1952
    %v1954 = vpop.f32.mrf.mxu0
    %1955 = vmatprep.mubr.bf16.mxu0 0
    %1956 = vmatmul.mubr.bf16.gmra.mxu0 %v1843
    %v1957 = vpop.f32.mrf.mxu0
    %v1958 = vadd.f32 %v1865, %v1957
    %v1959 = vpop.f32.mrf.mxu0
    %v1960 = vpop.f32.mrf.mxu0
    %v1961 = vadd.f32 %v1865, %v1960
    %v1962 = vpop.f32.mrf.mxu0
    %1963 = vdwg.mxu0
    %v1964 = vtanh.pop %v1950
    %v1965 = vtanh.pop %v1953
    %v1966 = vtanh.pop %v1958
    %v1967 = vtanh.pop %v1961
    %v1968 = vpack.c.bf16 %v1965, %v1964
    %v1969 = vpack.c.bf16 %v1967, %v1966
    %v1970 = vld [vmem:[%s23] sm:$0xf]
    %v1971 = vld [vmem:[%s23 + $0x4] sm:$0xf]
    %v1972 = vld [vmem:[%s23 + $0x8] sm:$0xf]
    %v1973 = vld [vmem:[%s23 + $0xc] sm:$0xf]
    %v1974 = vld [vmem:[%s23 + $0x10] sm:$0xf]
    %v1975 = vld [vmem:[%s23 + $0x14] sm:$0xf]
    %v1976 = vld [vmem:[%s23 + $0x18] sm:$0xf]
    %v1977 = vld [vmem:[%s23 + $0x1c] sm:$0xf]
    %v1978 = vld [vmem:[%s23 + $0x20] sm:$0xf]
    %v1979 = vld [vmem:[%s23 + $0x24] sm:$0xf]
    %v1980 = vld [vmem:[%s23 + $0x28] sm:$0xf]
    %v1981 = vld [vmem:[%s23 + $0x2c] sm:$0xf]
    %v1982 = vld [vmem:[%s23 + $0x30] sm:$0xf]
    %v1983 = vld [vmem:[%s23 + $0x34] sm:$0xf]
    %v1984 = vld [vmem:[%s23 + $0x38] sm:$0xf]
    %v1985 = vld [vmem:[%s23 + $0x3c] sm:$0xf]
    %v1986 = vld [vmem:[%s24] sm:$0x1]
    %v1988 = vlaneseq
    %v1989 = vshrl.u32 %v1988, 7
    %v1990 = vsub.s32 0, %v1989
    %v1991 = vrot.slane %v1986, %v1990
    %v2009 = vunpack.c.l.b16 %v1970
    %v2010 = vunpack.c.l.b16 %v1971
    %v2011 = vunpack.c.l.b16 %v1972
    %v2012 = vunpack.c.l.b16 %v1973
    %v2013 = vunpack.c.l.b16 %v1974
    %v2014 = vunpack.c.l.b16 %v1975
    %v2015 = vunpack.c.l.b16 %v1976
    %v2016 = vunpack.c.l.b16 %v1977
    %v2017 = vunpack.c.l.b16 %v1978
    %v2018 = vunpack.c.l.b16 %v1979
    %v2019 = vunpack.c.l.b16 %v1980
    %v2020 = vunpack.c.l.b16 %v1981
    %v2021 = vunpack.c.l.b16 %v1982
    %v2022 = vunpack.c.l.b16 %v1983
    %v2023 = vunpack.c.l.b16 %v1984
    %v2024 = vunpack.c.l.b16 %v1985
    %v2025 = vpack.c.b16 %v2010, %v2009
    %v2026 = vpack.c.b16 %v2012, %v2011
    %v2027 = vpack.c.b16 %v2014, %v2013
    %v2028 = vpack.c.b16 %v2016, %v2015
    %v2029 = vpack.c.b16 %v2018, %v2017
    %v2030 = vpack.c.b16 %v2020, %v2019
    %v2031 = vpack.c.b16 %v2022, %v2021
    %v2032 = vpack.c.b16 %v2024, %v2023
    %2041 = vmatprep.subr.bf16.mxu0 0
    %2042 = vmatpush1.bf16.msra.mxu0 %v2032
    %2043 = vmatprep.subr.bf16.mxu0 0
    %2044 = vmatpush1.bf16.msra.mxu0 %v2031
    %2045 = vmatprep.subr.bf16.mxu0 0
    %2046 = vmatpush1.bf16.msra.mxu0 %v2030
    %2047 = vmatprep.subr.bf16.mxu0 0
    %2048 = vmatpush1.bf16.msra.mxu0 %v2029
    %2049 = vmatprep.subr.bf16.mxu0 0
    %2050 = vmatpush1.bf16.msra.mxu0 %v2028
    %2051 = vmatprep.subr.bf16.mxu0 0
    %2052 = vmatpush1.bf16.msra.mxu0 %v2027
    %2053 = vmatprep.subr.bf16.mxu0 0
    %2054 = vmatpush1.bf16.msra.mxu0 %v2026
    %2055 = vmatprep.subr.bf16.mxu0 0
    %2056 = vmatpush1.bf16.msra.mxu0 %v2025
    %2057 = vmatprep.subr.bf16.mxu0 0
    %2058 = vmatpush2.bf16.msra.mxu0 0
    %2059 = vmatprep.subr.bf16.mxu0 0
    %2060 = vmatpush2.bf16.msra.mxu0 0
    %2061 = vmatprep.subr.bf16.mxu0 0
    %2062 = vmatpush2.bf16.msra.mxu0 0
    %2063 = vmatprep.subr.bf16.mxu0 0
    %2064 = vmatpush2.bf16.msra.mxu0 0
    %2065 = vmatprep.subr.bf16.mxu0 0
    %2066 = vmatpush2.bf16.msra.mxu0 0
    %2067 = vmatprep.subr.bf16.mxu0 0
    %2068 = vmatpush2.bf16.msra.mxu0 0
    %2069 = vmatprep.subr.bf16.mxu0 0
    %2070 = vmatpush2.bf16.msra.mxu0 0
    %2071 = vmatprep.subr.bf16.mxu0 0
    %2072 = vmatpush2.bf16.msra.mxu0 0
    %2073 = vmatprep.mubr.bf16.mxu0 0
    %2074 = vmatmul.mubr.bf16.gmra.mxu0 %v1968
    %v2075 = vpop.f32.mrf.mxu0
    %v2076 = vadd.f32 %v1991, %v2075
    %v2077 = vpop.f32.mrf.mxu0
    %v2078 = vpop.f32.mrf.mxu0
    %v2079 = vadd.f32 %v1991, %v2078
    %v2080 = vpop.f32.mrf.mxu0
    %2081 = vmatprep.mubr.bf16.mxu0 0
    %2082 = vmatmul.mubr.bf16.gmra.mxu0 %v1969
    %v2083 = vpop.f32.mrf.mxu0
    %v2084 = vadd.f32 %v1991, %v2083
    %v2085 = vpop.f32.mrf.mxu0
    %v2086 = vpop.f32.mrf.mxu0
    %v2087 = vadd.f32 %v1991, %v2086
    %v2088 = vpop.f32.mrf.mxu0
    %2089 = vdwg.mxu0
    %2090 = vst [vmem:[%s25] sm:$0xff] %v2076
    %2091 = vst [vmem:[%s25 + $0x8] sm:$0xff] %v2079
    %2092 = vst [vmem:[%s25 + $0x10] sm:$0xff] %v2084
    %2093 = vst [vmem:[%s25 + $0x18] sm:$0xff] %v2087
    // Predicated region
    $region182: #{run.1} parent=1 // pred_check
      _
    $region183: #{run.1} parent=1 // pred_check_branch
      %2095 = sbr.rel (0) target = $region185
    $region184: #{run.1} parent=1 // pred_region
      _
    $region185: #{run.1} parent=1 // pred_fallthru
      _
    // Predicated region
    $region186: #{run.1} parent=1 // pred_check
      _
    $region187: #{run.1} parent=1 // pred_check_branch
      %2097 = sbr.rel (0) target = $region189
    $region188: #{run.1} parent=1 // pred_region
      _
    $region189: #{run.1} parent=1 // pred_fallthru
      _
    %2098 = vsyncpa [#allocation3], 1
    %2099 = vsyncpa [#allocation5], 1
    %2100 = vsyncpa [#allocation8], 1
    %2101 = vsyncpa [#allocation11], 1
    %2102 = vsyncpa [#allocation14], 1
    %2103 = vsyncpa [#allocation17], 1
    %2104 = vsyncpa [#allocation20], 1
    %2105 = vsyncpa [#allocation23], 1
    %2106 = vsyncpa [#allocation26], 1
    %2107 = vsyncpa [#allocation29], 1
    %2108 = vsyncpa [#allocation32], 1

</llo_original>
